<compile_context>
chip_gen: v5e
topology: v5e:2x2
jax: 0.10.0
libtpu: 0.0.40
codegen_flags: <defaults>
</compile_context>

<pallas_src>
import functools

import jax
import jax.numpy as jnp
from jax.experimental import pallas as pl
from jax.experimental.pallas import tpu as pltpu


# --------------------------------------------------------------------------
# Padded dimensions (lane-dense: multiples of 128)
# --------------------------------------------------------------------------
F_IN,  F_IN_PAD = 114, 128   # input node features
H1,    H1_PAD   = 198, 256   # GIN block 1 hidden/output
H2,    H2_PAD   = 64,  128   # GIN block 2 hidden/output
H3,    H3_PAD   = 32,  128   # GIN block 3 hidden/output
FC1,   FC1_PAD  = 16,  128   # head fc1
FC2,   FC2_PAD  = 8,   128   # head fc2
N_OUT, OUT_PAD  = 1,   128   # head output (sliced to 1 outside the kernel)


# --------------------------------------------------------------------------
# Fused Pallas kernel: 3x (GINConv -> MLP -> ReLU -> BN) -> pool -> MLP head
# Adjacency streamed from HBM in double-buffered row tiles per block.
# --------------------------------------------------------------------------
def ginconvnet_fused_kernel(
        adj_hbm, x_ref, pool_ref,
        g1w1, g1b1, g1w2, g1b2, bn1s, bn1h,
        g2w1, g2b1, g2w2, g2b2, bn2s, bn2h,
        g3w1, g3b1, g3w2, g3b2, bn3s, bn3h,
        fc1w, fc1b, fc2w, fc2b, outw, outb,
        o_ref,
        h1, h2, h3, adj_buf, sem,
        *, tile_rows, n_tiles):

    def stream_gin_block(src_ref, dst_ref, w1, b1, w2, b2, s, t):
        # Stream (tile_rows, n_pad) bf16 adjacency row slabs from HBM with a
        # 2-slot double buffer; compute on slot i&1 while prefetching i+1.
        def fetch(i, slot):
            pltpu.make_async_copy(
                adj_hbm.at[pl.ds(i * tile_rows, tile_rows), :],
                adj_buf.at[slot], sem.at[slot]).start()

        fetch(0, 0)

        @pl.loop(0, n_tiles)
        def _(i):
            slot = i & 1
            pltpu.make_async_copy(
                adj_hbm.at[pl.ds(0, tile_rows), :],
                adj_buf.at[slot], sem.at[slot]).wait()

            @pl.when(i + 1 < n_tiles)
            def _():
                fetch(i + 1, 1 - slot)

            # GINConv aggregation: (A + (1+eps) I) @ h  (bf16 MXU, f32 accumulate)
            agg = jnp.dot(adj_buf[slot], src_ref[...],
                          preferred_element_type=jnp.float32)
            # nn = Sequential(Linear, ReLU, Linear)
            z = jnp.dot(agg.astype(jnp.bfloat16), w1[...],
                        preferred_element_type=jnp.float32) + b1[...]
            z = jnp.maximum(z, 0.0)
            z = jnp.dot(z.astype(jnp.bfloat16), w2[...],
                        preferred_element_type=jnp.float32) + b2[...]
            # outer F.relu, then eval-mode BatchNorm folded to scale/shift
            z = jnp.maximum(z, 0.0)
            z = z * s[...] + t[...]
            # Inter-block activations carried in bf16 (only used as MXU operands).
            row0 = pl.multiple_of(i * tile_rows, tile_rows)
            dst_ref[pl.ds(row0, tile_rows), :] = z.astype(jnp.bfloat16)

    stream_gin_block(x_ref, h1, g1w1, g1b1, g1w2, g1b2, bn1s, bn1h)
    stream_gin_block(h1,    h2, g2w1, g2b1, g2w2, g2b2, bn2s, bn2h)
    stream_gin_block(h2,    h3, g3w1, g3b1, g3w2, g3b2, bn3s, bn3h)

    # global_add_pool as a pooling matmul, then fc1 -> ReLU -> fc2 -> ReLU -> out
    # (dropout = identity in eval mode)
    g = jnp.dot(pool_ref[...], h3[...], preferred_element_type=jnp.float32)
    g = jnp.maximum(
        jnp.dot(g.astype(jnp.bfloat16), fc1w[...],
                preferred_element_type=jnp.float32) + fc1b[...], 0.0)
    g = jnp.maximum(
        jnp.dot(g.astype(jnp.bfloat16), fc2w[...],
                preferred_element_type=jnp.float32) + fc2b[...], 0.0)
    o_ref[...] = jnp.dot(g.astype(jnp.bfloat16), outw[...],
                         preferred_element_type=jnp.float32) + outb[...]


def _vmem_spec():
    return pl.BlockSpec(memory_space=pltpu.MemorySpace.VMEM)


def ginconvnet_fused_call(adj, x_pad, pool, params, *, tile_rows):
    n_pad = x_pad.shape[0]
    g_pad = pool.shape[0]
    n_tiles = n_pad // tile_rows

    args = (adj, x_pad, pool,
            params["g1_w1"], params["g1_b1"], params["g1_w2"], params["g1_b2"],
            params["bn1_scale"], params["bn1_shift"],
            params["g2_w1"], params["g2_b1"], params["g2_w2"], params["g2_b2"],
            params["bn2_scale"], params["bn2_shift"],
            params["g3_w1"], params["g3_b1"], params["g3_w2"], params["g3_b2"],
            params["bn3_scale"], params["bn3_shift"],
            params["fc1_w"], params["fc1_b"], params["fc2_w"], params["fc2_b"],
            params["out_w"], params["out_b"])

    # Adjacency stays in HBM (streamed manually); everything else resident in VMEM.
    in_specs = ([pl.BlockSpec(memory_space=pl.ANY)]
                + [_vmem_spec() for _ in args[1:]])

    scratch_shapes = [
        pltpu.VMEM((n_pad, H1_PAD), jnp.bfloat16),      # h1
        pltpu.VMEM((n_pad, H2_PAD), jnp.bfloat16),      # h2
        pltpu.VMEM((n_pad, H3_PAD), jnp.bfloat16),      # h3
        pltpu.VMEM((2, tile_rows, n_pad), jnp.bfloat16),  # adjacency double buffer
        pltpu.SemaphoreType.DMA((2,)),
    ]

    # Size the scoped VMEM limit from the actual resident footprint (+ headroom),
    # capped below the smallest physical VMEM (v7x: 64 MiB).
    weight_bytes = sum(int(v.size) * v.dtype.itemsize for v in params.values())
    resident = (int(x_pad.size) * x_pad.dtype.itemsize
                + int(pool.size) * pool.dtype.itemsize
                + weight_bytes
                + g_pad * OUT_PAD * 4                      # output
                + n_pad * (H1_PAD + H2_PAD + H3_PAD) * 2   # h1/h2/h3 bf16
                + 2 * tile_rows * n_pad * 2)               # adj double buffer bf16
    vmem_limit = max(16 << 20, min(int(resident) + (8 << 20), 60 << 20))

    # Advisory cost estimate so XLA can overlap adjacency/pool construction.
    flops = (2 * n_pad * n_pad * (F_IN_PAD + H1_PAD + H2_PAD)             # 3 aggregations
             + 2 * n_pad * (F_IN_PAD * H1_PAD + H1_PAD * H1_PAD)          # block 1 MLP
             + 2 * n_pad * (H1_PAD * H2_PAD + H2_PAD * H2_PAD)            # block 2 MLP
             + 2 * n_pad * (H2_PAD * H3_PAD + H3_PAD * H3_PAD)            # block 3 MLP
             + 2 * g_pad * n_pad * H3_PAD                                 # pooling matmul
             + 2 * g_pad * (H3_PAD * FC1_PAD + FC1_PAD * FC2_PAD + FC2_PAD * OUT_PAD))
    bytes_accessed = (3 * int(adj.size) * adj.dtype.itemsize              # adj streamed per block
                      + sum(int(a.size) * a.dtype.itemsize for a in args[1:])
                      + g_pad * OUT_PAD * 4)

    kernel = functools.partial(ginconvnet_fused_kernel,
                               tile_rows=tile_rows, n_tiles=n_tiles)

    return pl.pallas_call(
        kernel,
        out_shape=jax.ShapeDtypeStruct((g_pad, OUT_PAD), jnp.float32),
        in_specs=in_specs,
        out_specs=_vmem_spec(),
        scratch_shapes=scratch_shapes,
        compiler_params=pltpu.CompilerParams(vmem_limit_bytes=vmem_limit),
        cost_estimate=pl.CostEstimate(flops=flops, transcendentals=0,
                                      bytes_accessed=int(bytes_accessed)),
    )(*args)


# --------------------------------------------------------------------------
# Parameter construction (deterministic, PyTorch-like uniform init, padded)
# --------------------------------------------------------------------------
def _pad2(a, rows, cols):
    return jnp.zeros((rows, cols), a.dtype).at[:a.shape[0], :a.shape[1]].set(a)


def _linear_params(key, fan_in, fan_out, in_pad, out_pad):
    kw, kb = jax.random.split(key)
    bound = 1.0 / (fan_in ** 0.5)
    # stored transposed [in, out] so kernels compute x @ W; zero-padded to
    # lane-dense shapes; weights cast to bf16 for full-rate MXU issue, biases
    # stay f32 (added after the f32 accumulation).
    w = jax.random.uniform(kw, (fan_in, fan_out), jnp.float32, -bound, bound)
    b = jax.random.uniform(kb, (1, fan_out), jnp.float32, -bound, bound)
    return _pad2(w, in_pad, out_pad).astype(jnp.bfloat16), _pad2(b, 1, out_pad)


def _bn_params(key, dim, dim_pad, eps=1e-5):
    kg, kb = jax.random.split(key)
    gamma = 1.0 + 0.1 * jax.random.normal(kg, (1, dim), jnp.float32)
    beta = 0.1 * jax.random.normal(kb, (1, dim), jnp.float32)
    # eval mode with running_mean=0, running_var=1 folded to scale/shift;
    # padded lanes are zero so padded features stay exactly zero.
    scale = _pad2(gamma / jnp.sqrt(1.0 + eps), 1, dim_pad)
    shift = _pad2(beta, 1, dim_pad)
    return scale, shift


def build_params(key):
    keys = jax.random.split(key, 12)
    p = {}
    p["g1_w1"], p["g1_b1"] = _linear_params(keys[0], F_IN, H1, F_IN_PAD, H1_PAD)
    p["g1_w2"], p["g1_b2"] = _linear_params(keys[1], H1, H1, H1_PAD, H1_PAD)
    p["bn1_scale"], p["bn1_shift"] = _bn_params(keys[2], H1, H1_PAD)
    p["g2_w1"], p["g2_b1"] = _linear_params(keys[3], H1, H2, H1_PAD, H2_PAD)
    p["g2_w2"], p["g2_b2"] = _linear_params(keys[4], H2, H2, H2_PAD, H2_PAD)
    p["bn2_scale"], p["bn2_shift"] = _bn_params(keys[5], H2, H2_PAD)
    p["g3_w1"], p["g3_b1"] = _linear_params(keys[6], H2, H3, H2_PAD, H3_PAD)
    p["g3_w2"], p["g3_b2"] = _linear_params(keys[7], H3, H3, H3_PAD, H3_PAD)
    p["bn3_scale"], p["bn3_shift"] = _bn_params(keys[8], H3, H3_PAD)
    p["fc1_w"], p["fc1_b"] = _linear_params(keys[9], H3, FC1, H3_PAD, FC1_PAD)
    p["fc2_w"], p["fc2_b"] = _linear_params(keys[10], FC1, FC2, FC1_PAD, FC2_PAD)
    p["out_w"], p["out_b"] = _linear_params(keys[11], FC2, N_OUT, FC2_PAD, OUT_PAD)
    return p


# --------------------------------------------------------------------------
# Full forward pass
# --------------------------------------------------------------------------
def _round_up(v, m):
    return ((v + m - 1) // m) * m


def _pick_tile_rows(n_pad):
    # Biggest adjacency row-slab (multiple of 128) that divides n_pad.
    for t in (512, 256, 128):
        if n_pad % t == 0:
            return t
    return 128


@functools.partial(jax.jit, static_argnames=("num_graphs",))
def ginconvnet_forward(params, x, edge_index, batch, num_graphs):
    n, f = x.shape
    n_pad = max(128, _round_up(n, 128))
    g_pad = max(8, _round_up(num_graphs, 8))
    tile_rows = _pick_tile_rows(n_pad)

    # Dense adjacency built directly in bf16 with a single scatter-add:
    # A[dst, src] += 1 (PyG source_to_target flow) with the GIN self term
    # (1 + eps) * I (eps = 0) folded into the same scatter. bf16 is exact for
    # small integer edge counts (<= 256).
    src, dst = edge_index[0], edge_index[1]
    diag = jnp.arange(n_pad, dtype=edge_index.dtype)
    rows = jnp.concatenate([dst, diag])
    cols = jnp.concatenate([src, diag])
    adj = jnp.zeros((n_pad, n_pad), jnp.bfloat16).at[rows, cols].add(
        jnp.ones((), jnp.bfloat16))
    # TODO(synk): on v7x, fp8 adjacency (exact counts <= 16) and a 'parallel'
    #             grid axis over graph batches (second TensorCore) are further
    #             wins not applied here.

    # global_add_pool as a 0/1 (num_graphs, N) matrix; padded node columns stay
    # zero so padded nodes (which pick up biases in the MLPs) never pollute sums.
    pool = jnp.zeros((g_pad, n_pad), jnp.bfloat16).at[:, :n].set(
        (batch[None, :] == jnp.arange(g_pad)[:, None]).astype(jnp.bfloat16))

    # Pad node features into a lane-dense (n_pad, 128) bf16 slab (only ever used
    # as the bf16 LHS of the first aggregation).
    x_pad = jnp.zeros((n_pad, F_IN_PAD), jnp.bfloat16).at[:n, :f].set(
        x.astype(jnp.bfloat16))

    out_pad = ginconvnet_fused_call(adj, x_pad, pool, params, tile_rows=tile_rows)
    return out_pad[:num_graphs, :N_OUT]


if __name__ == "__main__":
    key = jax.random.PRNGKey(0)
    k_param, k_x, k_edge = jax.random.split(key, 3)

    num_features = F_IN   # 114
    n_nodes = 20
    n_edges = 40
    num_graphs = 2

    params = build_params(k_param)

    # node features
    x = jax.random.normal(k_x, (n_nodes, num_features), jnp.float32)
    # random edges (src, dst)
    edge_index = jax.random.randint(k_edge, (2, n_edges), 0, n_nodes, jnp.int32)
    # first half of nodes -> graph 0, second half -> graph 1
    batch = jnp.concatenate([jnp.zeros(n_nodes // 2, jnp.int32),
                             jnp.ones(n_nodes - n_nodes // 2, jnp.int32)])

    out = ginconvnet_forward(params, x, edge_index, batch, num_graphs)
    out = jax.block_until_ready(out)
    assert out.shape == (num_graphs, N_OUT), out.shape
    assert bool(jnp.all(jnp.isfinite(out)))
    print("KERNEL_OK")
</pallas_src>

<mosaic_0001>
module attributes {stable_mosaic.version = 11 : i64} {
  func.func @ginconvnet_fused_kernel(%arg0: memref<128x128xbf16, #tpu.memory_space<any>>, %arg1: memref<128x128xbf16, #tpu.memory_space<vmem>>, %arg2: memref<8x128xbf16, #tpu.memory_space<vmem>>, %arg3: memref<128x256xbf16, #tpu.memory_space<vmem>>, %arg4: memref<1x256xf32, #tpu.memory_space<vmem>>, %arg5: memref<256x256xbf16, #tpu.memory_space<vmem>>, %arg6: memref<1x256xf32, #tpu.memory_space<vmem>>, %arg7: memref<1x256xf32, #tpu.memory_space<vmem>>, %arg8: memref<1x256xf32, #tpu.memory_space<vmem>>, %arg9: memref<256x128xbf16, #tpu.memory_space<vmem>>, %arg10: memref<1x128xf32, #tpu.memory_space<vmem>>, %arg11: memref<128x128xbf16, #tpu.memory_space<vmem>>, %arg12: memref<1x128xf32, #tpu.memory_space<vmem>>, %arg13: memref<1x128xf32, #tpu.memory_space<vmem>>, %arg14: memref<1x128xf32, #tpu.memory_space<vmem>>, %arg15: memref<128x128xbf16, #tpu.memory_space<vmem>>, %arg16: memref<1x128xf32, #tpu.memory_space<vmem>>, %arg17: memref<128x128xbf16, #tpu.memory_space<vmem>>, %arg18: memref<1x128xf32, #tpu.memory_space<vmem>>, %arg19: memref<1x128xf32, #tpu.memory_space<vmem>>, %arg20: memref<1x128xf32, #tpu.memory_space<vmem>>, %arg21: memref<128x128xbf16, #tpu.memory_space<vmem>>, %arg22: memref<1x128xf32, #tpu.memory_space<vmem>>, %arg23: memref<128x128xbf16, #tpu.memory_space<vmem>>, %arg24: memref<1x128xf32, #tpu.memory_space<vmem>>, %arg25: memref<128x128xbf16, #tpu.memory_space<vmem>>, %arg26: memref<1x128xf32, #tpu.memory_space<vmem>>, %arg27: memref<8x128xf32, #tpu.memory_space<vmem>>, %arg28: memref<128x256xbf16, #tpu.memory_space<vmem>>, %arg29: memref<128x128xbf16, #tpu.memory_space<vmem>>, %arg30: memref<128x128xbf16, #tpu.memory_space<vmem>>, %arg31: memref<2x128x128xbf16, #tpu.memory_space<vmem>>, %arg32: memref<2x!tpu.dma_semaphore, #tpu.memory_space<semaphore_mem>>) attributes {dimension_semantics = [], scalar_prefetch = 0 : i64, scratch_operands = 5 : i64, tpu.core_type = #tpu.core_type<tc>} {
    %c0_i32 = arith.constant 0 : i32
    %c0_i32_0 = arith.constant 0 : i32
    %c0_i32_1 = arith.constant 0 : i32
    %c0_i32_2 = arith.constant 0 : i32
    %0 = tpu.memref_slice %arg0[%c0_i32_1, %c0_i32_2] : memref<128x128xbf16, #tpu.memory_space<any>> -> memref<128x128xbf16, #tpu.memory_space<any>>
    %c0_i32_3 = arith.constant 0 : i32
    %c0_i32_4 = arith.constant 0 : i32
    %1 = tpu.memref_slice %arg31[%c0_i32, %c0_i32_3, %c0_i32_4] : memref<2x128x128xbf16, #tpu.memory_space<vmem>> -> memref<1x128x128xbf16, #tpu.memory_space<vmem>>
    %2 = tpu.memref_squeeze %1 : memref<1x128x128xbf16, #tpu.memory_space<vmem>> -> memref<128x128xbf16, #tpu.memory_space<vmem>>
    %3 = tpu.memref_slice %arg32[%c0_i32_0] : memref<2x!tpu.dma_semaphore, #tpu.memory_space<semaphore_mem>> -> memref<1x!tpu.dma_semaphore, #tpu.memory_space<semaphore_mem>>
    %4 = tpu.memref_squeeze %3 : memref<1x!tpu.dma_semaphore, #tpu.memory_space<semaphore_mem>> -> memref<!tpu.dma_semaphore, #tpu.memory_space<semaphore_mem>>
    tpu.enqueue_dma source(%0 : memref<128x128xbf16, #tpu.memory_space<any>>) target(%2 : memref<128x128xbf16, #tpu.memory_space<vmem>>) target_semaphore(%4 : memref<!tpu.dma_semaphore, #tpu.memory_space<semaphore_mem>>)
    %c0_i32_5 = arith.constant 0 : i32
    %c1_i32 = arith.constant 1 : i32
    %5 = arith.muli %c0_i32_5, %c1_i32 : i32
    %c0_i32_6 = arith.constant 0 : i32
    %6 = arith.addi %c0_i32_6, %5 : i32
    %c1_i32_7 = arith.constant 1 : i32
    %7 = arith.andi %6, %c1_i32_7 : i32
    %c0_i32_8 = arith.constant 0 : i32
    %c0_i32_9 = arith.constant 0 : i32
    %8 = tpu.memref_slice %arg0[%c0_i32_8, %c0_i32_9] : memref<128x128xbf16, #tpu.memory_space<any>> -> memref<128x128xbf16, #tpu.memory_space<any>>
    %c0_i32_10 = arith.constant 0 : i32
    %c0_i32_11 = arith.constant 0 : i32
    %9 = tpu.memref_slice %arg31[%7, %c0_i32_10, %c0_i32_11] : memref<2x128x128xbf16, #tpu.memory_space<vmem>> -> memref<1x128x128xbf16, #tpu.memory_space<vmem>>
    %10 = tpu.memref_squeeze %9 : memref<1x128x128xbf16, #tpu.memory_space<vmem>> -> memref<128x128xbf16, #tpu.memory_space<vmem>>
    %11 = tpu.memref_slice %arg32[%7] : memref<2x!tpu.dma_semaphore, #tpu.memory_space<semaphore_mem>> -> memref<1x!tpu.dma_semaphore, #tpu.memory_space<semaphore_mem>>
    %12 = tpu.memref_squeeze %11 : memref<1x!tpu.dma_semaphore, #tpu.memory_space<semaphore_mem>> -> memref<!tpu.dma_semaphore, #tpu.memory_space<semaphore_mem>>
    tpu.wait_dma2 semaphore(%12 : memref<!tpu.dma_semaphore, #tpu.memory_space<semaphore_mem>>) src(%8 : memref<128x128xbf16, #tpu.memory_space<any>>) dst(%10 : memref<128x128xbf16, #tpu.memory_space<vmem>>)
    %c1_i32_12 = arith.constant 1 : i32
    %13 = arith.addi %6, %c1_i32_12 : i32
    %c1_i32_13 = arith.constant 1 : i32
    %14 = arith.cmpi slt, %13, %c1_i32_13 : i32
    %15 = arith.extui %14 : i1 to i32
    %c0_i32_14 = arith.constant 0 : i32
    %16 = arith.cmpi ne, %15, %c0_i32_14 : i32
    scf.if %16 {
      %c1_i32_142 = arith.constant 1 : i32
      %173 = arith.addi %6, %c1_i32_142 : i32
      %c1_i32_143 = arith.constant 1 : i32
      %174 = arith.subi %c1_i32_143, %7 : i32
      %c128_i32_144 = arith.constant 128 : i32
      %175 = arith.muli %173, %c128_i32_144 : i32
      %c0_i32_145 = arith.constant 0 : i32
      %176 = tpu.memref_slice %arg0[%175, %c0_i32_145] : memref<128x128xbf16, #tpu.memory_space<any>> -> memref<128x128xbf16, #tpu.memory_space<any>>
      %c0_i32_146 = arith.constant 0 : i32
      %c0_i32_147 = arith.constant 0 : i32
      %177 = tpu.memref_slice %arg31[%174, %c0_i32_146, %c0_i32_147] : memref<2x128x128xbf16, #tpu.memory_space<vmem>> -> memref<1x128x128xbf16, #tpu.memory_space<vmem>>
      %178 = tpu.memref_squeeze %177 : memref<1x128x128xbf16, #tpu.memory_space<vmem>> -> memref<128x128xbf16, #tpu.memory_space<vmem>>
      %179 = tpu.memref_slice %arg32[%174] : memref<2x!tpu.dma_semaphore, #tpu.memory_space<semaphore_mem>> -> memref<1x!tpu.dma_semaphore, #tpu.memory_space<semaphore_mem>>
      %180 = tpu.memref_squeeze %179 : memref<1x!tpu.dma_semaphore, #tpu.memory_space<semaphore_mem>> -> memref<!tpu.dma_semaphore, #tpu.memory_space<semaphore_mem>>
      tpu.enqueue_dma source(%176 : memref<128x128xbf16, #tpu.memory_space<any>>) target(%178 : memref<128x128xbf16, #tpu.memory_space<vmem>>) target_semaphore(%180 : memref<!tpu.dma_semaphore, #tpu.memory_space<semaphore_mem>>)
    } else {
    }
    %17 = arith.index_cast %7 : i32 to index
    %c0 = arith.constant 0 : index
    %c0_15 = arith.constant 0 : index
    %18 = vector.load %arg31[%17, %c0, %c0_15] : memref<2x128x128xbf16, #tpu.memory_space<vmem>>, vector<1x128x128xbf16>
    %19 = vector.shape_cast %18 : vector<1x128x128xbf16> to vector<128x128xbf16>
    %c0_16 = arith.constant 0 : index
    %c0_17 = arith.constant 0 : index
    %20 = vector.load %arg1[%c0_16, %c0_17] : memref<128x128xbf16, #tpu.memory_space<vmem>>, vector<128x128xbf16>
    %cst = arith.constant dense<0.000000e+00> : vector<128x128xf32>
    %21 = tpu.matmul %19, %20, %cst {dimension_numbers = #tpu.dot_dimension_numbers<[1], [0], [0], [1], [0, 0, 1, 1], [], []>} : vector<128x128xbf16>, vector<128x128xbf16>, vector<128x128xf32> -> vector<128x128xf32>
    %22 = arith.truncf %21 : vector<128x128xf32> to vector<128x128xbf16>
    %c0_18 = arith.constant 0 : index
    %c0_19 = arith.constant 0 : index
    %23 = vector.load %arg3[%c0_18, %c0_19] : memref<128x256xbf16, #tpu.memory_space<vmem>>, vector<128x256xbf16>
    %cst_20 = arith.constant dense<0.000000e+00> : vector<128x256xf32>
    %24 = tpu.matmul %22, %23, %cst_20 {dimension_numbers = #tpu.dot_dimension_numbers<[1], [0], [0], [1], [0, 0, 1, 1], [], []>} : vector<128x128xbf16>, vector<128x256xbf16>, vector<128x256xf32> -> vector<128x256xf32>
    %c0_21 = arith.constant 0 : index
    %c0_22 = arith.constant 0 : index
    %25 = vector.load %arg4[%c0_21, %c0_22] : memref<1x256xf32, #tpu.memory_space<vmem>>, vector<1x256xf32>
    %26 = vector.broadcast %25 : vector<1x256xf32> to vector<128x256xf32>
    %27 = arith.addf %24, %26 : vector<128x256xf32>
    %cst_23 = arith.constant 0.000000e+00 : f32
    %28 = vector.broadcast %cst_23 : f32 to vector<128x256xf32>
    %29 = arith.maximumf %27, %28 : vector<128x256xf32>
    %30 = arith.truncf %29 : vector<128x256xf32> to vector<128x256xbf16>
    %c0_24 = arith.constant 0 : index
    %c0_25 = arith.constant 0 : index
    %31 = vector.load %arg5[%c0_24, %c0_25] : memref<256x256xbf16, #tpu.memory_space<vmem>>, vector<256x256xbf16>
    %cst_26 = arith.constant dense<0.000000e+00> : vector<128x256xf32>
    %32 = tpu.matmul %30, %31, %cst_26 {dimension_numbers = #tpu.dot_dimension_numbers<[1], [0], [0], [1], [0, 0, 1, 1], [], []>} : vector<128x256xbf16>, vector<256x256xbf16>, vector<128x256xf32> -> vector<128x256xf32>
    %c0_27 = arith.constant 0 : index
    %c0_28 = arith.constant 0 : index
    %33 = vector.load %arg6[%c0_27, %c0_28] : memref<1x256xf32, #tpu.memory_space<vmem>>, vector<1x256xf32>
    %34 = vector.broadcast %33 : vector<1x256xf32> to vector<128x256xf32>
    %35 = arith.addf %32, %34 : vector<128x256xf32>
    %cst_29 = arith.constant 0.000000e+00 : f32
    %36 = vector.broadcast %cst_29 : f32 to vector<128x256xf32>
    %37 = arith.maximumf %35, %36 : vector<128x256xf32>
    %c0_30 = arith.constant 0 : index
    %c0_31 = arith.constant 0 : index
    %38 = vector.load %arg7[%c0_30, %c0_31] : memref<1x256xf32, #tpu.memory_space<vmem>>, vector<1x256xf32>
    %39 = vector.broadcast %38 : vector<1x256xf32> to vector<128x256xf32>
    %40 = arith.mulf %37, %39 : vector<128x256xf32>
    %c0_32 = arith.constant 0 : index
    %c0_33 = arith.constant 0 : index
    %41 = vector.load %arg8[%c0_32, %c0_33] : memref<1x256xf32, #tpu.memory_space<vmem>>, vector<1x256xf32>
    %42 = vector.broadcast %41 : vector<1x256xf32> to vector<128x256xf32>
    %43 = arith.addf %40, %42 : vector<128x256xf32>
    %c128_i32 = arith.constant 128 : i32
    %44 = arith.muli %6, %c128_i32 : i32
    %45 = tpu.assume_multiple %44, 128 : i32
    %46 = arith.truncf %43 : vector<128x256xf32> to vector<128x256xbf16>
    %47 = arith.index_cast %45 : i32 to index
    %c0_34 = arith.constant 0 : index
    %48 = vector.load %arg28[%47, %c0_34] : memref<128x256xbf16, #tpu.memory_space<vmem>>, vector<128x256xbf16>
    tpu.vector_store %arg28[%47, %c0_34], %46 {strides = array<i32>} : memref<128x256xbf16, #tpu.memory_space<vmem>>, vector<128x256xbf16>,
    %c1_i32_35 = arith.constant 1 : i32
    %c0_i32_36 = arith.constant 0 : i32
    %c0_i32_37 = arith.constant 0 : i32
    %c0_i32_38 = arith.constant 0 : i32
    %c0_i32_39 = arith.constant 0 : i32
    %49 = tpu.memref_slice %arg0[%c0_i32_38, %c0_i32_39] : memref<128x128xbf16, #tpu.memory_space<any>> -> memref<128x128xbf16, #tpu.memory_space<any>>
    %c0_i32_40 = arith.constant 0 : i32
    %c0_i32_41 = arith.constant 0 : i32
    %50 = tpu.memref_slice %arg31[%c0_i32_36, %c0_i32_40, %c0_i32_41] : memref<2x128x128xbf16, #tpu.memory_space<vmem>> -> memref<1x128x128xbf16, #tpu.memory_space<vmem>>
    %51 = tpu.memref_squeeze %50 : memref<1x128x128xbf16, #tpu.memory_space<vmem>> -> memref<128x128xbf16, #tpu.memory_space<vmem>>
    %52 = tpu.memref_slice %arg32[%c0_i32_37] : memref<2x!tpu.dma_semaphore, #tpu.memory_space<semaphore_mem>> -> memref<1x!tpu.dma_semaphore, #tpu.memory_space<semaphore_mem>>
    %53 = tpu.memref_squeeze %52 : memref<1x!tpu.dma_semaphore, #tpu.memory_space<semaphore_mem>> -> memref<!tpu.dma_semaphore, #tpu.memory_space<semaphore_mem>>
    tpu.enqueue_dma source(%49 : memref<128x128xbf16, #tpu.memory_space<any>>) target(%51 : memref<128x128xbf16, #tpu.memory_space<vmem>>) target_semaphore(%53 : memref<!tpu.dma_semaphore, #tpu.memory_space<semaphore_mem>>)
    %c0_i32_42 = arith.constant 0 : i32
    %c1_i32_43 = arith.constant 1 : i32
    %54 = arith.muli %c0_i32_42, %c1_i32_43 : i32
    %c0_i32_44 = arith.constant 0 : i32
    %55 = arith.addi %c0_i32_44, %54 : i32
    %c1_i32_45 = arith.constant 1 : i32
    %56 = arith.andi %55, %c1_i32_45 : i32
    %c0_i32_46 = arith.constant 0 : i32
    %c0_i32_47 = arith.constant 0 : i32
    %57 = tpu.memref_slice %arg0[%c0_i32_46, %c0_i32_47] : memref<128x128xbf16, #tpu.memory_space<any>> -> memref<128x128xbf16, #tpu.memory_space<any>>
    %c0_i32_48 = arith.constant 0 : i32
    %c0_i32_49 = arith.constant 0 : i32
    %58 = tpu.memref_slice %arg31[%56, %c0_i32_48, %c0_i32_49] : memref<2x128x128xbf16, #tpu.memory_space<vmem>> -> memref<1x128x128xbf16, #tpu.memory_space<vmem>>
    %59 = tpu.memref_squeeze %58 : memref<1x128x128xbf16, #tpu.memory_space<vmem>> -> memref<128x128xbf16, #tpu.memory_space<vmem>>
    %60 = tpu.memref_slice %arg32[%56] : memref<2x!tpu.dma_semaphore, #tpu.memory_space<semaphore_mem>> -> memref<1x!tpu.dma_semaphore, #tpu.memory_space<semaphore_mem>>
    %61 = tpu.memref_squeeze %60 : memref<1x!tpu.dma_semaphore, #tpu.memory_space<semaphore_mem>> -> memref<!tpu.dma_semaphore, #tpu.memory_space<semaphore_mem>>
    tpu.wait_dma2 semaphore(%61 : memref<!tpu.dma_semaphore, #tpu.memory_space<semaphore_mem>>) src(%57 : memref<128x128xbf16, #tpu.memory_space<any>>) dst(%59 : memref<128x128xbf16, #tpu.memory_space<vmem>>)
    %c1_i32_50 = arith.constant 1 : i32
    %62 = arith.addi %55, %c1_i32_50 : i32
    %c1_i32_51 = arith.constant 1 : i32
    %63 = arith.cmpi slt, %62, %c1_i32_51 : i32
    %64 = arith.extui %63 : i1 to i32
    %c0_i32_52 = arith.constant 0 : i32
    %65 = arith.cmpi ne, %64, %c0_i32_52 : i32
    scf.if %65 {
      %c1_i32_142 = arith.constant 1 : i32
      %173 = arith.addi %55, %c1_i32_142 : i32
      %c1_i32_143 = arith.constant 1 : i32
      %174 = arith.subi %c1_i32_143, %56 : i32
      %c128_i32_144 = arith.constant 128 : i32
      %175 = arith.muli %173, %c128_i32_144 : i32
      %c0_i32_145 = arith.constant 0 : i32
      %176 = tpu.memref_slice %arg0[%175, %c0_i32_145] : memref<128x128xbf16, #tpu.memory_space<any>> -> memref<128x128xbf16, #tpu.memory_space<any>>
      %c0_i32_146 = arith.constant 0 : i32
      %c0_i32_147 = arith.constant 0 : i32
      %177 = tpu.memref_slice %arg31[%174, %c0_i32_146, %c0_i32_147] : memref<2x128x128xbf16, #tpu.memory_space<vmem>> -> memref<1x128x128xbf16, #tpu.memory_space<vmem>>
      %178 = tpu.memref_squeeze %177 : memref<1x128x128xbf16, #tpu.memory_space<vmem>> -> memref<128x128xbf16, #tpu.memory_space<vmem>>
      %179 = tpu.memref_slice %arg32[%174] : memref<2x!tpu.dma_semaphore, #tpu.memory_space<semaphore_mem>> -> memref<1x!tpu.dma_semaphore, #tpu.memory_space<semaphore_mem>>
      %180 = tpu.memref_squeeze %179 : memref<1x!tpu.dma_semaphore, #tpu.memory_space<semaphore_mem>> -> memref<!tpu.dma_semaphore, #tpu.memory_space<semaphore_mem>>
      tpu.enqueue_dma source(%176 : memref<128x128xbf16, #tpu.memory_space<any>>) target(%178 : memref<128x128xbf16, #tpu.memory_space<vmem>>) target_semaphore(%180 : memref<!tpu.dma_semaphore, #tpu.memory_space<semaphore_mem>>)
    } else {
    }
    %66 = arith.index_cast %56 : i32 to index
    %c0_53 = arith.constant 0 : index
    %c0_54 = arith.constant 0 : index
    %67 = vector.load %arg31[%66, %c0_53, %c0_54] : memref<2x128x128xbf16, #tpu.memory_space<vmem>>, vector<1x128x128xbf16>
    %68 = vector.shape_cast %67 : vector<1x128x128xbf16> to vector<128x128xbf16>
    %c0_55 = arith.constant 0 : index
    %c0_56 = arith.constant 0 : index
    %69 = vector.load %arg28[%c0_55, %c0_56] : memref<128x256xbf16, #tpu.memory_space<vmem>>, vector<128x256xbf16>
    %cst_57 = arith.constant dense<0.000000e+00> : vector<128x256xf32>
    %70 = tpu.matmul %68, %69, %cst_57 {dimension_numbers = #tpu.dot_dimension_numbers<[1], [0], [0], [1], [0, 0, 1, 1], [], []>} : vector<128x128xbf16>, vector<128x256xbf16>, vector<128x256xf32> -> vector<128x256xf32>
    %71 = arith.truncf %70 : vector<128x256xf32> to vector<128x256xbf16>
    %c0_58 = arith.constant 0 : index
    %c0_59 = arith.constant 0 : index
    %72 = vector.load %arg9[%c0_58, %c0_59] : memref<256x128xbf16, #tpu.memory_space<vmem>>, vector<256x128xbf16>
    %cst_60 = arith.constant dense<0.000000e+00> : vector<128x128xf32>
    %73 = tpu.matmul %71, %72, %cst_60 {dimension_numbers = #tpu.dot_dimension_numbers<[1], [0], [0], [1], [0, 0, 1, 1], [], []>} : vector<128x256xbf16>, vector<256x128xbf16>, vector<128x128xf32> -> vector<128x128xf32>
    %c0_61 = arith.constant 0 : index
    %c0_62 = arith.constant 0 : index
    %74 = vector.load %arg10[%c0_61, %c0_62] : memref<1x128xf32, #tpu.memory_space<vmem>>, vector<1x128xf32>
    %75 = vector.broadcast %74 : vector<1x128xf32> to vector<128x128xf32>
    %76 = arith.addf %73, %75 : vector<128x128xf32>
    %cst_63 = arith.constant 0.000000e+00 : f32
    %77 = vector.broadcast %cst_63 : f32 to vector<128x128xf32>
    %78 = arith.maximumf %76, %77 : vector<128x128xf32>
    %79 = arith.truncf %78 : vector<128x128xf32> to vector<128x128xbf16>
    %c0_64 = arith.constant 0 : index
    %c0_65 = arith.constant 0 : index
    %80 = vector.load %arg11[%c0_64, %c0_65] : memref<128x128xbf16, #tpu.memory_space<vmem>>, vector<128x128xbf16>
    %cst_66 = arith.constant dense<0.000000e+00> : vector<128x128xf32>
    %81 = tpu.matmul %79, %80, %cst_66 {dimension_numbers = #tpu.dot_dimension_numbers<[1], [0], [0], [1], [0, 0, 1, 1], [], []>} : vector<128x128xbf16>, vector<128x128xbf16>, vector<128x128xf32> -> vector<128x128xf32>
    %c0_67 = arith.constant 0 : index
    %c0_68 = arith.constant 0 : index
    %82 = vector.load %arg12[%c0_67, %c0_68] : memref<1x128xf32, #tpu.memory_space<vmem>>, vector<1x128xf32>
    %83 = vector.broadcast %82 : vector<1x128xf32> to vector<128x128xf32>
    %84 = arith.addf %81, %83 : vector<128x128xf32>
    %cst_69 = arith.constant 0.000000e+00 : f32
    %85 = vector.broadcast %cst_69 : f32 to vector<128x128xf32>
    %86 = arith.maximumf %84, %85 : vector<128x128xf32>
    %c0_70 = arith.constant 0 : index
    %c0_71 = arith.constant 0 : index
    %87 = vector.load %arg13[%c0_70, %c0_71] : memref<1x128xf32, #tpu.memory_space<vmem>>, vector<1x128xf32>
    %88 = vector.broadcast %87 : vector<1x128xf32> to vector<128x128xf32>
    %89 = arith.mulf %86, %88 : vector<128x128xf32>
    %c0_72 = arith.constant 0 : index
    %c0_73 = arith.constant 0 : index
    %90 = vector.load %arg14[%c0_72, %c0_73] : memref<1x128xf32, #tpu.memory_space<vmem>>, vector<1x128xf32>
    %91 = vector.broadcast %90 : vector<1x128xf32> to vector<128x128xf32>
    %92 = arith.addf %89, %91 : vector<128x128xf32>
    %c128_i32_74 = arith.constant 128 : i32
    %93 = arith.muli %55, %c128_i32_74 : i32
    %94 = tpu.assume_multiple %93, 128 : i32
    %95 = arith.truncf %92 : vector<128x128xf32> to vector<128x128xbf16>
    %96 = arith.index_cast %94 : i32 to index
    %c0_75 = arith.constant 0 : index
    %97 = vector.load %arg29[%96, %c0_75] : memref<128x128xbf16, #tpu.memory_space<vmem>>, vector<128x128xbf16>
    tpu.vector_store %arg29[%96, %c0_75], %95 {strides = array<i32>} : memref<128x128xbf16, #tpu.memory_space<vmem>>, vector<128x128xbf16>,
    %c1_i32_76 = arith.constant 1 : i32
    %c0_i32_77 = arith.constant 0 : i32
    %c0_i32_78 = arith.constant 0 : i32
    %c0_i32_79 = arith.constant 0 : i32
    %c0_i32_80 = arith.constant 0 : i32
    %98 = tpu.memref_slice %arg0[%c0_i32_79, %c0_i32_80] : memref<128x128xbf16, #tpu.memory_space<any>> -> memref<128x128xbf16, #tpu.memory_space<any>>
    %c0_i32_81 = arith.constant 0 : i32
    %c0_i32_82 = arith.constant 0 : i32
    %99 = tpu.memref_slice %arg31[%c0_i32_77, %c0_i32_81, %c0_i32_82] : memref<2x128x128xbf16, #tpu.memory_space<vmem>> -> memref<1x128x128xbf16, #tpu.memory_space<vmem>>
    %100 = tpu.memref_squeeze %99 : memref<1x128x128xbf16, #tpu.memory_space<vmem>> -> memref<128x128xbf16, #tpu.memory_space<vmem>>
    %101 = tpu.memref_slice %arg32[%c0_i32_78] : memref<2x!tpu.dma_semaphore, #tpu.memory_space<semaphore_mem>> -> memref<1x!tpu.dma_semaphore, #tpu.memory_space<semaphore_mem>>
    %102 = tpu.memref_squeeze %101 : memref<1x!tpu.dma_semaphore, #tpu.memory_space<semaphore_mem>> -> memref<!tpu.dma_semaphore, #tpu.memory_space<semaphore_mem>>
    tpu.enqueue_dma source(%98 : memref<128x128xbf16, #tpu.memory_space<any>>) target(%100 : memref<128x128xbf16, #tpu.memory_space<vmem>>) target_semaphore(%102 : memref<!tpu.dma_semaphore, #tpu.memory_space<semaphore_mem>>)
    %c0_i32_83 = arith.constant 0 : i32
    %c1_i32_84 = arith.constant 1 : i32
    %103 = arith.muli %c0_i32_83, %c1_i32_84 : i32
    %c0_i32_85 = arith.constant 0 : i32
    %104 = arith.addi %c0_i32_85, %103 : i32
    %c1_i32_86 = arith.constant 1 : i32
    %105 = arith.andi %104, %c1_i32_86 : i32
    %c0_i32_87 = arith.constant 0 : i32
    %c0_i32_88 = arith.constant 0 : i32
    %106 = tpu.memref_slice %arg0[%c0_i32_87, %c0_i32_88] : memref<128x128xbf16, #tpu.memory_space<any>> -> memref<128x128xbf16, #tpu.memory_space<any>>
    %c0_i32_89 = arith.constant 0 : i32
    %c0_i32_90 = arith.constant 0 : i32
    %107 = tpu.memref_slice %arg31[%105, %c0_i32_89, %c0_i32_90] : memref<2x128x128xbf16, #tpu.memory_space<vmem>> -> memref<1x128x128xbf16, #tpu.memory_space<vmem>>
    %108 = tpu.memref_squeeze %107 : memref<1x128x128xbf16, #tpu.memory_space<vmem>> -> memref<128x128xbf16, #tpu.memory_space<vmem>>
    %109 = tpu.memref_slice %arg32[%105] : memref<2x!tpu.dma_semaphore, #tpu.memory_space<semaphore_mem>> -> memref<1x!tpu.dma_semaphore, #tpu.memory_space<semaphore_mem>>
    %110 = tpu.memref_squeeze %109 : memref<1x!tpu.dma_semaphore, #tpu.memory_space<semaphore_mem>> -> memref<!tpu.dma_semaphore, #tpu.memory_space<semaphore_mem>>
    tpu.wait_dma2 semaphore(%110 : memref<!tpu.dma_semaphore, #tpu.memory_space<semaphore_mem>>) src(%106 : memref<128x128xbf16, #tpu.memory_space<any>>) dst(%108 : memref<128x128xbf16, #tpu.memory_space<vmem>>)
    %c1_i32_91 = arith.constant 1 : i32
    %111 = arith.addi %104, %c1_i32_91 : i32
    %c1_i32_92 = arith.constant 1 : i32
    %112 = arith.cmpi slt, %111, %c1_i32_92 : i32
    %113 = arith.extui %112 : i1 to i32
    %c0_i32_93 = arith.constant 0 : i32
    %114 = arith.cmpi ne, %113, %c0_i32_93 : i32
    scf.if %114 {
      %c1_i32_142 = arith.constant 1 : i32
      %173 = arith.addi %104, %c1_i32_142 : i32
      %c1_i32_143 = arith.constant 1 : i32
      %174 = arith.subi %c1_i32_143, %105 : i32
      %c128_i32_144 = arith.constant 128 : i32
      %175 = arith.muli %173, %c128_i32_144 : i32
      %c0_i32_145 = arith.constant 0 : i32
      %176 = tpu.memref_slice %arg0[%175, %c0_i32_145] : memref<128x128xbf16, #tpu.memory_space<any>> -> memref<128x128xbf16, #tpu.memory_space<any>>
      %c0_i32_146 = arith.constant 0 : i32
      %c0_i32_147 = arith.constant 0 : i32
      %177 = tpu.memref_slice %arg31[%174, %c0_i32_146, %c0_i32_147] : memref<2x128x128xbf16, #tpu.memory_space<vmem>> -> memref<1x128x128xbf16, #tpu.memory_space<vmem>>
      %178 = tpu.memref_squeeze %177 : memref<1x128x128xbf16, #tpu.memory_space<vmem>> -> memref<128x128xbf16, #tpu.memory_space<vmem>>
      %179 = tpu.memref_slice %arg32[%174] : memref<2x!tpu.dma_semaphore, #tpu.memory_space<semaphore_mem>> -> memref<1x!tpu.dma_semaphore, #tpu.memory_space<semaphore_mem>>
      %180 = tpu.memref_squeeze %179 : memref<1x!tpu.dma_semaphore, #tpu.memory_space<semaphore_mem>> -> memref<!tpu.dma_semaphore, #tpu.memory_space<semaphore_mem>>
      tpu.enqueue_dma source(%176 : memref<128x128xbf16, #tpu.memory_space<any>>) target(%178 : memref<128x128xbf16, #tpu.memory_space<vmem>>) target_semaphore(%180 : memref<!tpu.dma_semaphore, #tpu.memory_space<semaphore_mem>>)
    } else {
    }
    %115 = arith.index_cast %105 : i32 to index
    %c0_94 = arith.constant 0 : index
    %c0_95 = arith.constant 0 : index
    %116 = vector.load %arg31[%115, %c0_94, %c0_95] : memref<2x128x128xbf16, #tpu.memory_space<vmem>>, vector<1x128x128xbf16>
    %117 = vector.shape_cast %116 : vector<1x128x128xbf16> to vector<128x128xbf16>
    %c0_96 = arith.constant 0 : index
    %c0_97 = arith.constant 0 : index
    %118 = vector.load %arg29[%c0_96, %c0_97] : memref<128x128xbf16, #tpu.memory_space<vmem>>, vector<128x128xbf16>
    %cst_98 = arith.constant dense<0.000000e+00> : vector<128x128xf32>
    %119 = tpu.matmul %117, %118, %cst_98 {dimension_numbers = #tpu.dot_dimension_numbers<[1], [0], [0], [1], [0, 0, 1, 1], [], []>} : vector<128x128xbf16>, vector<128x128xbf16>, vector<128x128xf32> -> vector<128x128xf32>
    %120 = arith.truncf %119 : vector<128x128xf32> to vector<128x128xbf16>
    %c0_99 = arith.constant 0 : index
    %c0_100 = arith.constant 0 : index
    %121 = vector.load %arg15[%c0_99, %c0_100] : memref<128x128xbf16, #tpu.memory_space<vmem>>, vector<128x128xbf16>
    %cst_101 = arith.constant dense<0.000000e+00> : vector<128x128xf32>
    %122 = tpu.matmul %120, %121, %cst_101 {dimension_numbers = #tpu.dot_dimension_numbers<[1], [0], [0], [1], [0, 0, 1, 1], [], []>} : vector<128x128xbf16>, vector<128x128xbf16>, vector<128x128xf32> -> vector<128x128xf32>
    %c0_102 = arith.constant 0 : index
    %c0_103 = arith.constant 0 : index
    %123 = vector.load %arg16[%c0_102, %c0_103] : memref<1x128xf32, #tpu.memory_space<vmem>>, vector<1x128xf32>
    %124 = vector.broadcast %123 : vector<1x128xf32> to vector<128x128xf32>
    %125 = arith.addf %122, %124 : vector<128x128xf32>
    %cst_104 = arith.constant 0.000000e+00 : f32
    %126 = vector.broadcast %cst_104 : f32 to vector<128x128xf32>
    %127 = arith.maximumf %125, %126 : vector<128x128xf32>
    %128 = arith.truncf %127 : vector<128x128xf32> to vector<128x128xbf16>
    %c0_105 = arith.constant 0 : index
    %c0_106 = arith.constant 0 : index
    %129 = vector.load %arg17[%c0_105, %c0_106] : memref<128x128xbf16, #tpu.memory_space<vmem>>, vector<128x128xbf16>
    %cst_107 = arith.constant dense<0.000000e+00> : vector<128x128xf32>
    %130 = tpu.matmul %128, %129, %cst_107 {dimension_numbers = #tpu.dot_dimension_numbers<[1], [0], [0], [1], [0, 0, 1, 1], [], []>} : vector<128x128xbf16>, vector<128x128xbf16>, vector<128x128xf32> -> vector<128x128xf32>
    %c0_108 = arith.constant 0 : index
    %c0_109 = arith.constant 0 : index
    %131 = vector.load %arg18[%c0_108, %c0_109] : memref<1x128xf32, #tpu.memory_space<vmem>>, vector<1x128xf32>
    %132 = vector.broadcast %131 : vector<1x128xf32> to vector<128x128xf32>
    %133 = arith.addf %130, %132 : vector<128x128xf32>
    %cst_110 = arith.constant 0.000000e+00 : f32
    %134 = vector.broadcast %cst_110 : f32 to vector<128x128xf32>
    %135 = arith.maximumf %133, %134 : vector<128x128xf32>
    %c0_111 = arith.constant 0 : index
    %c0_112 = arith.constant 0 : index
    %136 = vector.load %arg19[%c0_111, %c0_112] : memref<1x128xf32, #tpu.memory_space<vmem>>, vector<1x128xf32>
    %137 = vector.broadcast %136 : vector<1x128xf32> to vector<128x128xf32>
    %138 = arith.mulf %135, %137 : vector<128x128xf32>
    %c0_113 = arith.constant 0 : index
    %c0_114 = arith.constant 0 : index
    %139 = vector.load %arg20[%c0_113, %c0_114] : memref<1x128xf32, #tpu.memory_space<vmem>>, vector<1x128xf32>
    %140 = vector.broadcast %139 : vector<1x128xf32> to vector<128x128xf32>
    %141 = arith.addf %138, %140 : vector<128x128xf32>
    %c128_i32_115 = arith.constant 128 : i32
    %142 = arith.muli %104, %c128_i32_115 : i32
    %143 = tpu.assume_multiple %142, 128 : i32
    %144 = arith.truncf %141 : vector<128x128xf32> to vector<128x128xbf16>
    %145 = arith.index_cast %143 : i32 to index
    %c0_116 = arith.constant 0 : index
    %146 = vector.load %arg30[%145, %c0_116] : memref<128x128xbf16, #tpu.memory_space<vmem>>, vector<128x128xbf16>
    tpu.vector_store %arg30[%145, %c0_116], %144 {strides = array<i32>} : memref<128x128xbf16, #tpu.memory_space<vmem>>, vector<128x128xbf16>,
    %c1_i32_117 = arith.constant 1 : i32
    %c0_118 = arith.constant 0 : index
    %c0_119 = arith.constant 0 : index
    %147 = vector.load %arg2[%c0_118, %c0_119] : memref<8x128xbf16, #tpu.memory_space<vmem>>, vector<8x128xbf16>
    %c0_120 = arith.constant 0 : index
    %c0_121 = arith.constant 0 : index
    %148 = vector.load %arg30[%c0_120, %c0_121] : memref<128x128xbf16, #tpu.memory_space<vmem>>, vector<128x128xbf16>
    %cst_122 = arith.constant dense<0.000000e+00> : vector<8x128xf32>
    %149 = tpu.matmul %147, %148, %cst_122 {dimension_numbers = #tpu.dot_dimension_numbers<[1], [0], [0], [1], [0, 0, 1, 1], [], []>} : vector<8x128xbf16>, vector<128x128xbf16>, vector<8x128xf32> -> vector<8x128xf32>
    %150 = arith.truncf %149 : vector<8x128xf32> to vector<8x128xbf16>
    %c0_123 = arith.constant 0 : index
    %c0_124 = arith.constant 0 : index
    %151 = vector.load %arg21[%c0_123, %c0_124] : memref<128x128xbf16, #tpu.memory_space<vmem>>, vector<128x128xbf16>
    %cst_125 = arith.constant dense<0.000000e+00> : vector<8x128xf32>
    %152 = tpu.matmul %150, %151, %cst_125 {dimension_numbers = #tpu.dot_dimension_numbers<[1], [0], [0], [1], [0, 0, 1, 1], [], []>} : vector<8x128xbf16>, vector<128x128xbf16>, vector<8x128xf32> -> vector<8x128xf32>
    %c0_126 = arith.constant 0 : index
    %c0_127 = arith.constant 0 : index
    %153 = vector.load %arg22[%c0_126, %c0_127] : memref<1x128xf32, #tpu.memory_space<vmem>>, vector<1x128xf32>
    %154 = vector.broadcast %153 : vector<1x128xf32> to vector<8x128xf32>
    %155 = arith.addf %152, %154 : vector<8x128xf32>
    %cst_128 = arith.constant 0.000000e+00 : f32
    %156 = vector.broadcast %cst_128 : f32 to vector<8x128xf32>
    %157 = arith.maximumf %155, %156 : vector<8x128xf32>
    %158 = arith.truncf %157 : vector<8x128xf32> to vector<8x128xbf16>
    %c0_129 = arith.constant 0 : index
    %c0_130 = arith.constant 0 : index
    %159 = vector.load %arg23[%c0_129, %c0_130] : memref<128x128xbf16, #tpu.memory_space<vmem>>, vector<128x128xbf16>
    %cst_131 = arith.constant dense<0.000000e+00> : vector<8x128xf32>
    %160 = tpu.matmul %158, %159, %cst_131 {dimension_numbers = #tpu.dot_dimension_numbers<[1], [0], [0], [1], [0, 0, 1, 1], [], []>} : vector<8x128xbf16>, vector<128x128xbf16>, vector<8x128xf32> -> vector<8x128xf32>
    %c0_132 = arith.constant 0 : index
    %c0_133 = arith.constant 0 : index
    %161 = vector.load %arg24[%c0_132, %c0_133] : memref<1x128xf32, #tpu.memory_space<vmem>>, vector<1x128xf32>
    %162 = vector.broadcast %161 : vector<1x128xf32> to vector<8x128xf32>
    %163 = arith.addf %160, %162 : vector<8x128xf32>
    %cst_134 = arith.constant 0.000000e+00 : f32
    %164 = vector.broadcast %cst_134 : f32 to vector<8x128xf32>
    %165 = arith.maximumf %163, %164 : vector<8x128xf32>
    %166 = arith.truncf %165 : vector<8x128xf32> to vector<8x128xbf16>
    %c0_135 = arith.constant 0 : index
    %c0_136 = arith.constant 0 : index
    %167 = vector.load %arg25[%c0_135, %c0_136] : memref<128x128xbf16, #tpu.memory_space<vmem>>, vector<128x128xbf16>
    %cst_137 = arith.constant dense<0.000000e+00> : vector<8x128xf32>
    %168 = tpu.matmul %166, %167, %cst_137 {dimension_numbers = #tpu.dot_dimension_numbers<[1], [0], [0], [1], [0, 0, 1, 1], [], []>} : vector<8x128xbf16>, vector<128x128xbf16>, vector<8x128xf32> -> vector<8x128xf32>
    %c0_138 = arith.constant 0 : index
    %c0_139 = arith.constant 0 : index
    %169 = vector.load %arg26[%c0_138, %c0_139] : memref<1x128xf32, #tpu.memory_space<vmem>>, vector<1x128xf32>
    %170 = vector.broadcast %169 : vector<1x128xf32> to vector<8x128xf32>
    %171 = arith.addf %168, %170 : vector<8x128xf32>
    %c0_140 = arith.constant 0 : index
    %c0_141 = arith.constant 0 : index
    %172 = vector.load %arg27[%c0_140, %c0_141] : memref<8x128xf32, #tpu.memory_space<vmem>>, vector<8x128xf32>
    tpu.vector_store %arg27[%c0_140, %c0_141], %171 {strides = array<i32>} : memref<8x128xf32, #tpu.memory_space<vmem>>, vector<8x128xf32>,
    return
  }
}

</mosaic_0001>

<llo_original>
// kernel: ginconvnet_forward.1
$region0: #{ginconvnet_forward.1}
  #allocation0 [shape = 'u32[]', space=smem, size = 0x4, offset = 0x4, fixed_abs, tag = 'smem constant byte address 0x4 - core index']
  #allocation1 [shape = 'u32[72,128]{1,0:T(1,128)}', space=vmem, size = 0x9000, scoped, tag = 'internal scratch']
  #allocation2 [shape = 'bf16[128,256]{1,0:T(8,128)(2,1)}', space=vmem, size = 0x10000, scoped, tag = 'scratch operand']
  #allocation3 [shape = 'bf16[128,128]{1,0:T(8,128)(2,1)}', space=vmem, size = 0x8000, scoped, tag = 'scratch operand']
  #allocation4 [shape = 'bf16[128,128]{1,0:T(8,128)(2,1)}', space=vmem, size = 0x8000, scoped, tag = 'scratch operand']
  #allocation5 [shape = 'bf16[2,128,128]{2,1,0:T(8,128)(2,1)}', space=vmem, size = 0x10000, scoped, tag = 'scratch operand']
  #allocation6 [shape = 's32[2]{0}', space=sflag, size = 0x8, scoped, tag = 'scratch operand']
  #allocation7 [shape = 's32[]', space=sflag, size = 0x4, offset = 0, fixed_abs, tag = 'sflag constant byte address 0x0 - dummy sync flag']
  #allocation8 [shape = 's32[]', space=sflag, size = 0x4, offset = 0, fixed_abs, tag = 'sflag constant byte address 0x0 - dummy sync flag']
  #allocation9 [shape = 's32[]', space=sflag, size = 0x4, offset = 0, fixed_abs, tag = 'sflag constant byte address 0x0 - dummy sync flag']
  %s0 = inlined_call_operand.vmem [shape: bf16[128,128], index: 0, kind: input, shape index: {}]
  %s1 = inlined_call_operand.vmem [shape: bf16[128,128], index: 1, kind: input, shape index: {}]
  %s2 = inlined_call_operand.vmem [shape: bf16[8,128], index: 2, kind: input, shape index: {}]
  %s3 = inlined_call_operand.vmem [shape: bf16[128,256], index: 3, kind: input, shape index: {}]
  %s4 = inlined_call_operand.vmem [shape: f32[1,256], index: 4, kind: input, shape index: {}]
  %s5 = inlined_call_operand.vmem [shape: bf16[256,256], index: 5, kind: input, shape index: {}]
  %s6 = inlined_call_operand.vmem [shape: f32[1,256], index: 6, kind: input, shape index: {}]
  %s7 = inlined_call_operand.vmem [shape: f32[1,256], index: 7, kind: input, shape index: {}]
  %s8 = inlined_call_operand.vmem [shape: f32[1,256], index: 8, kind: input, shape index: {}]
  %s9 = inlined_call_operand.vmem [shape: bf16[256,128], index: 9, kind: input, shape index: {}]
  %s10 = inlined_call_operand.vmem [shape: f32[1,128], index: 10, kind: input, shape index: {}]
  %s11 = inlined_call_operand.vmem [shape: bf16[128,128], index: 11, kind: input, shape index: {}]
  %s12 = inlined_call_operand.vmem [shape: f32[1,128], index: 12, kind: input, shape index: {}]
  %s13 = inlined_call_operand.vmem [shape: f32[1,128], index: 13, kind: input, shape index: {}]
  %s14 = inlined_call_operand.vmem [shape: f32[1,128], index: 14, kind: input, shape index: {}]
  %s15 = inlined_call_operand.vmem [shape: bf16[128,128], index: 15, kind: input, shape index: {}]
  %s16 = inlined_call_operand.vmem [shape: f32[1,128], index: 16, kind: input, shape index: {}]
  %s17 = inlined_call_operand.vmem [shape: bf16[128,128], index: 17, kind: input, shape index: {}]
  %s18 = inlined_call_operand.vmem [shape: f32[1,128], index: 18, kind: input, shape index: {}]
  %s19 = inlined_call_operand.vmem [shape: f32[1,128], index: 19, kind: input, shape index: {}]
  %s20 = inlined_call_operand.vmem [shape: f32[1,128], index: 20, kind: input, shape index: {}]
  %s21 = inlined_call_operand.vmem [shape: bf16[128,128], index: 21, kind: input, shape index: {}]
  %s22 = inlined_call_operand.vmem [shape: f32[1,128], index: 22, kind: input, shape index: {}]
  %s23 = inlined_call_operand.vmem [shape: bf16[128,128], index: 23, kind: input, shape index: {}]
  %s24 = inlined_call_operand.vmem [shape: f32[1,128], index: 24, kind: input, shape index: {}]
  %s25 = inlined_call_operand.vmem [shape: bf16[128,128], index: 25, kind: input, shape index: {}]
  %s26 = inlined_call_operand.vmem [shape: f32[1,128], index: 26, kind: input, shape index: {}]
  %s27 = inlined_call_operand.vmem [shape: f32[8,128], index: 27, kind: output, shape index: {}]
  %s28 = sld [smem:[#allocation0]]
  $region171: #{ginconvnet_forward.1} parent=0
    _
  %s30 = ssub.s32 1, %s28
  %s31 = scalar_select 0, %s30, %s28
  // Predicated region
  $region2: #{ginconvnet_forward.1} parent=0 // pred_check
    _
  $region3: #{ginconvnet_forward.1} parent=0 // pred_check_branch
    %33 = sbr.rel (0) target = $region5
  $region4: #{ginconvnet_forward.1} parent=0 // pred_region
    _
  $region5: #{ginconvnet_forward.1} parent=0 // pred_fallthru
    _
  // Predicated region
  $region6: #{ginconvnet_forward.1} parent=0 // pred_check
    _
  $region7: #{ginconvnet_forward.1} parent=0 // pred_check_branch
    %35 = sbr.rel (0) target = $region9
  $region8: #{ginconvnet_forward.1} parent=0 // pred_region
    _
  $region9: #{ginconvnet_forward.1} parent=0 // pred_fallthru
    _
  // Predicated region
  $region10: #{ginconvnet_forward.1} parent=0 // pred_check
    _
  $region11: #{ginconvnet_forward.1} parent=0 // pred_check_branch
    %37 = sbr.rel (0) target = $region13
  $region12: #{ginconvnet_forward.1} parent=0 // pred_region
    _
  $region13: #{ginconvnet_forward.1} parent=0 // pred_fallthru
    _
  // Predicated region
  $region14: #{ginconvnet_forward.1} parent=0 // pred_check
    _
  $region15: #{ginconvnet_forward.1} parent=0 // pred_check_branch
    %39 = sbr.rel (0) target = $region17
  $region16: #{ginconvnet_forward.1} parent=0 // pred_region
    _
  $region17: #{ginconvnet_forward.1} parent=0 // pred_fallthru
    _
  // Predicated region
  $region18: #{ginconvnet_forward.1} parent=0 // pred_check
    _
  $region19: #{ginconvnet_forward.1} parent=0 // pred_check_branch
    %41 = sbr.rel (0) target = $region21
  $region20: #{ginconvnet_forward.1} parent=0 // pred_region
    _
  $region21: #{ginconvnet_forward.1} parent=0 // pred_fallthru
    _
  // Predicated region
  $region22: #{ginconvnet_forward.1} parent=0 // pred_check
    _
  $region23: #{ginconvnet_forward.1} parent=0 // pred_check_branch
    %43 = sbr.rel (0) target = $region25
  $region24: #{ginconvnet_forward.1} parent=0 // pred_region
    _
  $region25: #{ginconvnet_forward.1} parent=0 // pred_fallthru
    _
  // Predicated region
  $region26: #{ginconvnet_forward.1} parent=0 // pred_check
    _
  $region27: #{ginconvnet_forward.1} parent=0 // pred_check_branch
    %45 = sbr.rel (0) target = $region29
  $region28: #{ginconvnet_forward.1} parent=0 // pred_region
    _
  $region29: #{ginconvnet_forward.1} parent=0 // pred_fallthru
    _
  // Predicated region
  $region30: #{ginconvnet_forward.1} parent=0 // pred_check
    _
  $region31: #{ginconvnet_forward.1} parent=0 // pred_check_branch
    %47 = sbr.rel (0) target = $region33
  $region32: #{ginconvnet_forward.1} parent=0 // pred_region
    _
  $region33: #{ginconvnet_forward.1} parent=0 // pred_fallthru
    _
  // Predicated region
  $region34: #{ginconvnet_forward.1} parent=0 // pred_check
    _
  $region35: #{ginconvnet_forward.1} parent=0 // pred_check_branch
    %49 = sbr.rel (0) target = $region37
  $region36: #{ginconvnet_forward.1} parent=0 // pred_region
    _
  $region37: #{ginconvnet_forward.1} parent=0 // pred_fallthru
    _
  // Predicated region
  $region38: #{ginconvnet_forward.1} parent=0 // pred_check
    _
  $region39: #{ginconvnet_forward.1} parent=0 // pred_check_branch
    %51 = sbr.rel (0) target = $region41
  $region40: #{ginconvnet_forward.1} parent=0 // pred_region
    _
  $region41: #{ginconvnet_forward.1} parent=0 // pred_fallthru
    _
  // Predicated region
  $region42: #{ginconvnet_forward.1} parent=0 // pred_check
    _
  $region43: #{ginconvnet_forward.1} parent=0 // pred_check_branch
    %53 = sbr.rel (0) target = $region45
  $region44: #{ginconvnet_forward.1} parent=0 // pred_region
    _
  $region45: #{ginconvnet_forward.1} parent=0 // pred_fallthru
    _
  // Predicated region
  $region46: #{ginconvnet_forward.1} parent=0 // pred_check
    _
  $region47: #{ginconvnet_forward.1} parent=0 // pred_check_branch
    %55 = sbr.rel (0) target = $region49
  $region48: #{ginconvnet_forward.1} parent=0 // pred_region
    _
  $region49: #{ginconvnet_forward.1} parent=0 // pred_fallthru
    _
  // Predicated region
  $region50: #{ginconvnet_forward.1} parent=0 // pred_check
    _
  $region51: #{ginconvnet_forward.1} parent=0 // pred_check_branch
    %57 = sbr.rel (0) target = $region53
  $region52: #{ginconvnet_forward.1} parent=0 // pred_region
    _
  $region53: #{ginconvnet_forward.1} parent=0 // pred_fallthru
    _
  // Predicated region
  $region54: #{ginconvnet_forward.1} parent=0 // pred_check
    _
  $region55: #{ginconvnet_forward.1} parent=0 // pred_check_branch
    %59 = sbr.rel (0) target = $region57
  $region56: #{ginconvnet_forward.1} parent=0 // pred_region
    _
  $region57: #{ginconvnet_forward.1} parent=0 // pred_fallthru
    _
  // Predicated region
  $region58: #{ginconvnet_forward.1} parent=0 // pred_check
    _
  $region59: #{ginconvnet_forward.1} parent=0 // pred_check_branch
    %61 = sbr.rel (0) target = $region61
  $region60: #{ginconvnet_forward.1} parent=0 // pred_region
    _
  $region61: #{ginconvnet_forward.1} parent=0 // pred_fallthru
    _
  // Predicated region
  $region62: #{ginconvnet_forward.1} parent=0 // pred_check
    _
  $region63: #{ginconvnet_forward.1} parent=0 // pred_check_branch
    %63 = sbr.rel (0) target = $region65
  $region64: #{ginconvnet_forward.1} parent=0 // pred_region
    _
  $region65: #{ginconvnet_forward.1} parent=0 // pred_fallthru
    _
  // Predicated region
  $region66: #{ginconvnet_forward.1} parent=0 // pred_check
    _
  $region67: #{ginconvnet_forward.1} parent=0 // pred_check_branch
    %65 = sbr.rel (0) target = $region69
  $region68: #{ginconvnet_forward.1} parent=0 // pred_region
    _
  $region69: #{ginconvnet_forward.1} parent=0 // pred_fallthru
    _
  // Predicated region
  $region70: #{ginconvnet_forward.1} parent=0 // pred_check
    _
  $region71: #{ginconvnet_forward.1} parent=0 // pred_check_branch
    %67 = sbr.rel (0) target = $region73
  $region72: #{ginconvnet_forward.1} parent=0 // pred_region
    _
  $region73: #{ginconvnet_forward.1} parent=0 // pred_fallthru
    _
  // Predicated region
  $region74: #{ginconvnet_forward.1} parent=0 // pred_check
    _
  $region75: #{ginconvnet_forward.1} parent=0 // pred_check_branch
    %69 = sbr.rel (0) target = $region77
  $region76: #{ginconvnet_forward.1} parent=0 // pred_region
    _
  $region77: #{ginconvnet_forward.1} parent=0 // pred_fallthru
    _
  // Predicated region
  $region78: #{ginconvnet_forward.1} parent=0 // pred_check
    _
  $region79: #{ginconvnet_forward.1} parent=0 // pred_check_branch
    %71 = sbr.rel (0) target = $region81
  $region80: #{ginconvnet_forward.1} parent=0 // pred_region
    _
  $region81: #{ginconvnet_forward.1} parent=0 // pred_fallthru
    _
  // Predicated region
  $region82: #{ginconvnet_forward.1} parent=0 // pred_check
    _
  $region83: #{ginconvnet_forward.1} parent=0 // pred_check_branch
    %73 = sbr.rel (0) target = $region85
  $region84: #{ginconvnet_forward.1} parent=0 // pred_region
    _
  $region85: #{ginconvnet_forward.1} parent=0 // pred_fallthru
    _
  // Predicated region
  $region86: #{ginconvnet_forward.1} parent=0 // pred_check
    _
  $region87: #{ginconvnet_forward.1} parent=0 // pred_check_branch
    %75 = sbr.rel (0) target = $region89
  $region88: #{ginconvnet_forward.1} parent=0 // pred_region
    _
  $region89: #{ginconvnet_forward.1} parent=0 // pred_fallthru
    _
  // Predicated region
  $region90: #{ginconvnet_forward.1} parent=0 // pred_check
    _
  $region91: #{ginconvnet_forward.1} parent=0 // pred_check_branch
    %77 = sbr.rel (0) target = $region93
  $region92: #{ginconvnet_forward.1} parent=0 // pred_region
    _
  $region93: #{ginconvnet_forward.1} parent=0 // pred_fallthru
    _
  // Predicated region
  $region94: #{ginconvnet_forward.1} parent=0 // pred_check
    _
  $region95: #{ginconvnet_forward.1} parent=0 // pred_check_branch
    %79 = sbr.rel (0) target = $region97
  $region96: #{ginconvnet_forward.1} parent=0 // pred_region
    _
  $region97: #{ginconvnet_forward.1} parent=0 // pred_fallthru
    _
  // Predicated region
  $region98: #{ginconvnet_forward.1} parent=0 // pred_check
    _
  $region99: #{ginconvnet_forward.1} parent=0 // pred_check_branch
    %81 = sbr.rel (0) target = $region101
  $region100: #{ginconvnet_forward.1} parent=0 // pred_region
    _
  $region101: #{ginconvnet_forward.1} parent=0 // pred_fallthru
    _
  // Predicated region
  $region102: #{ginconvnet_forward.1} parent=0 // pred_check
    _
  $region103: #{ginconvnet_forward.1} parent=0 // pred_check_branch
    %83 = sbr.rel (0) target = $region105
  $region104: #{ginconvnet_forward.1} parent=0 // pred_region
    _
  $region105: #{ginconvnet_forward.1} parent=0 // pred_fallthru
    _
  // Predicated region
  $region106: #{ginconvnet_forward.1} parent=0 // pred_check
    _
  $region107: #{ginconvnet_forward.1} parent=0 // pred_check_branch
    %85 = sbr.rel (0) target = $region109
  $region108: #{ginconvnet_forward.1} parent=0 // pred_region
    loop: start=0, step=1, limit=1
    $region110: #{ginconvnet_forward.1} parent=108 // loop_pre_header
      _
    $region111: #{ginconvnet_forward.1} parent=108 // loop_header
      %s87 = sphi 0, %s91
      %p88 = scmp.ge.s32.totalorder %s87, 1
      %s92 = sphi %s0, %s0
      %s93 = sphi [#allocation5], [#allocation5]
    $region112: #{ginconvnet_forward.1} parent=108 // loop_header_branch
      %90 = sbr.rel (%p88) target = $region116
    $region113: #{ginconvnet_forward.1} parent=108 // loop_body
      %v94 = vld [vmem:[%s92] sm:$0xff]
      %95 = vst [vmem:[%s93] sm:$0xff] %v94
      %v96 = vld [vmem:[%s92 + $0x8] sm:$0xff]
      %97 = vst [vmem:[%s93 + $0x8] sm:$0xff] %v96
      %v98 = vld [vmem:[%s92 + $0x10] sm:$0xff]
      %99 = vst [vmem:[%s93 + $0x10] sm:$0xff] %v98
      %v100 = vld [vmem:[%s92 + $0x18] sm:$0xff]
      %101 = vst [vmem:[%s93 + $0x18] sm:$0xff] %v100
      %v102 = vld [vmem:[%s92 + $0x20] sm:$0xff]
      %103 = vst [vmem:[%s93 + $0x20] sm:$0xff] %v102
      %v104 = vld [vmem:[%s92 + $0x28] sm:$0xff]
      %105 = vst [vmem:[%s93 + $0x28] sm:$0xff] %v104
      %v106 = vld [vmem:[%s92 + $0x30] sm:$0xff]
      %107 = vst [vmem:[%s93 + $0x30] sm:$0xff] %v106
      %v108 = vld [vmem:[%s92 + $0x38] sm:$0xff]
      %109 = vst [vmem:[%s93 + $0x38] sm:$0xff] %v108
    $region114: #{ginconvnet_forward.1} parent=108 // loop_footer
      %s91 = sadd.s32 1, %s87
    $region115: #{ginconvnet_forward.1} parent=108 // loop_footer_branch
      %86 = sbr.rel target = $region111
    $region116: #{ginconvnet_forward.1} parent=108 // loop_exit
      _
  $region109: #{ginconvnet_forward.1} parent=0 // pred_fallthru
    _
  // Predicated region
  $region117: #{ginconvnet_forward.1} parent=0 // pred_check
    _
  $region118: #{ginconvnet_forward.1} parent=0 // pred_check_branch
    %111 = sbr.rel target = $region120
  $region119: #{ginconvnet_forward.1} parent=0 // pred_region
    _
  $region120: #{ginconvnet_forward.1} parent=0 // pred_fallthru
    _
  // Predicated region
  $region121: #{ginconvnet_forward.1} parent=0 // pred_check
    _
  $region122: #{ginconvnet_forward.1} parent=0 // pred_check_branch
    %114 = sbr.rel (0) target = $region124
  $region123: #{ginconvnet_forward.1} parent=0 // pred_region
    %115 = vsyncadd [#allocation6], 1024
  $region124: #{ginconvnet_forward.1} parent=0 // pred_fallthru
    _
  %s116 = smul.u32 4, 16
  %s117 = smul.u32 %s116, 1
  %s118 = sshll.u32 %s117, 4
  %119 = dma.done [#allocation6], %s118
  %v120 = vld [vmem:[#allocation5] sm:$0xf]
  %v121 = vld [vmem:[#allocation5 + $0x4] sm:$0xf]
  %v122 = vld [vmem:[#allocation5 + $0x8] sm:$0xf]
  %v123 = vld [vmem:[#allocation5 + $0xc] sm:$0xf]
  %v124 = vld [vmem:[#allocation5 + $0x10] sm:$0xf]
  %v125 = vld [vmem:[#allocation5 + $0x14] sm:$0xf]
  %v126 = vld [vmem:[#allocation5 + $0x18] sm:$0xf]
  %v127 = vld [vmem:[#allocation5 + $0x1c] sm:$0xf]
  %v128 = vld [vmem:[#allocation5 + $0x20] sm:$0xf]
  %v129 = vld [vmem:[#allocation5 + $0x24] sm:$0xf]
  %v130 = vld [vmem:[#allocation5 + $0x28] sm:$0xf]
  %v131 = vld [vmem:[#allocation5 + $0x2c] sm:$0xf]
  %v132 = vld [vmem:[#allocation5 + $0x30] sm:$0xf]
  %v133 = vld [vmem:[#allocation5 + $0x34] sm:$0xf]
  %v134 = vld [vmem:[#allocation5 + $0x38] sm:$0xf]
  %v135 = vld [vmem:[#allocation5 + $0x3c] sm:$0xf]
  %v136 = vld [vmem:[%s1] sm:$0xf]
  %v137 = vld [vmem:[%s1 + $0x4] sm:$0xf]
  %v138 = vld [vmem:[%s1 + $0x8] sm:$0xf]
  %v139 = vld [vmem:[%s1 + $0xc] sm:$0xf]
  %v140 = vld [vmem:[%s1 + $0x10] sm:$0xf]
  %v141 = vld [vmem:[%s1 + $0x14] sm:$0xf]
  %v142 = vld [vmem:[%s1 + $0x18] sm:$0xf]
  %v143 = vld [vmem:[%s1 + $0x1c] sm:$0xf]
  %v144 = vld [vmem:[%s1 + $0x20] sm:$0xf]
  %v145 = vld [vmem:[%s1 + $0x24] sm:$0xf]
  %v146 = vld [vmem:[%s1 + $0x28] sm:$0xf]
  %v147 = vld [vmem:[%s1 + $0x2c] sm:$0xf]
  %v148 = vld [vmem:[%s1 + $0x30] sm:$0xf]
  %v149 = vld [vmem:[%s1 + $0x34] sm:$0xf]
  %v150 = vld [vmem:[%s1 + $0x38] sm:$0xf]
  %v151 = vld [vmem:[%s1 + $0x3c] sm:$0xf]
  %v168 = vunpack.c.l.b16 %v120
  %v169 = vunpack.c.l.b16 %v121
  %v170 = vunpack.c.l.b16 %v122
  %v171 = vunpack.c.l.b16 %v123
  %v172 = vunpack.c.l.b16 %v124
  %v173 = vunpack.c.l.b16 %v125
  %v174 = vunpack.c.l.b16 %v126
  %v175 = vunpack.c.l.b16 %v127
  %v176 = vunpack.c.l.b16 %v128
  %v177 = vunpack.c.l.b16 %v129
  %v178 = vunpack.c.l.b16 %v130
  %v179 = vunpack.c.l.b16 %v131
  %v180 = vunpack.c.l.b16 %v132
  %v181 = vunpack.c.l.b16 %v133
  %v182 = vunpack.c.l.b16 %v134
  %v183 = vunpack.c.l.b16 %v135
  %v184 = vpack.c.b16 %v169, %v168
  %v185 = vpack.c.b16 %v171, %v170
  %v186 = vpack.c.b16 %v173, %v172
  %v187 = vpack.c.b16 %v175, %v174
  %v188 = vpack.c.b16 %v177, %v176
  %v189 = vpack.c.b16 %v179, %v178
  %v190 = vpack.c.b16 %v181, %v180
  %v191 = vpack.c.b16 %v183, %v182
  %v216 = vunpack.c.l.b16 %v136
  %v217 = vunpack.c.l.b16 %v137
  %v218 = vunpack.c.l.b16 %v138
  %v219 = vunpack.c.l.b16 %v139
  %v220 = vunpack.c.l.b16 %v140
  %v221 = vunpack.c.l.b16 %v141
  %v222 = vunpack.c.l.b16 %v142
  %v223 = vunpack.c.l.b16 %v143
  %v224 = vunpack.c.l.b16 %v144
  %v225 = vunpack.c.l.b16 %v145
  %v226 = vunpack.c.l.b16 %v146
  %v227 = vunpack.c.l.b16 %v147
  %v228 = vunpack.c.l.b16 %v148
  %v229 = vunpack.c.l.b16 %v149
  %v230 = vunpack.c.l.b16 %v150
  %v231 = vunpack.c.l.b16 %v151
  %v232 = vpack.c.b16 %v217, %v216
  %v233 = vpack.c.b16 %v219, %v218
  %v234 = vpack.c.b16 %v221, %v220
  %v235 = vpack.c.b16 %v223, %v222
  %v236 = vpack.c.b16 %v225, %v224
  %v237 = vpack.c.b16 %v227, %v226
  %v238 = vpack.c.b16 %v229, %v228
  %v239 = vpack.c.b16 %v231, %v230
  %248 = vmatpush.bf16.msra.mxu0 %v239
  %249 = vmatpush.bf16.msra.mxu0 %v238
  %250 = vmatpush.bf16.msra.mxu0 %v237
  %251 = vmatpush.bf16.msra.mxu0 %v236
  %252 = vmatpush.bf16.msra.mxu0 %v235
  %253 = vmatpush.bf16.msra.mxu0 %v234
  %254 = vmatpush.bf16.msra.mxu0 %v233
  %255 = vmatpush.bf16.msra.mxu0 %v232
  %256 = vmatmul.bf16.gmra.mxu0 %v184
  %v257 = vpop.f32.mrf.mxu0
  %v258 = vadd.f32 0.0, %v257
  %v259 = vpop.f32.mrf.mxu0
  %v260 = vadd.f32 0.0, %v259
  %261 = vmatmul.bf16.gmra.mxu0 %v185
  %v262 = vpop.f32.mrf.mxu0
  %v263 = vadd.f32 0.0, %v262
  %v264 = vpop.f32.mrf.mxu0
  %v265 = vadd.f32 0.0, %v264
  %266 = vmatmul.bf16.gmra.mxu0 %v186
  %v267 = vpop.f32.mrf.mxu0
  %v268 = vadd.f32 0.0, %v267
  %v269 = vpop.f32.mrf.mxu0
  %v270 = vadd.f32 0.0, %v269
  %271 = vmatmul.bf16.gmra.mxu0 %v187
  %v272 = vpop.f32.mrf.mxu0
  %v273 = vadd.f32 0.0, %v272
  %v274 = vpop.f32.mrf.mxu0
  %v275 = vadd.f32 0.0, %v274
  %276 = vmatmul.bf16.gmra.mxu0 %v188
  %v277 = vpop.f32.mrf.mxu0
  %v278 = vadd.f32 0.0, %v277
  %v279 = vpop.f32.mrf.mxu0
  %v280 = vadd.f32 0.0, %v279
  %281 = vmatmul.bf16.gmra.mxu0 %v189
  %v282 = vpop.f32.mrf.mxu0
  %v283 = vadd.f32 0.0, %v282
  %v284 = vpop.f32.mrf.mxu0
  %v285 = vadd.f32 0.0, %v284
  %286 = vmatmul.bf16.gmra.mxu0 %v190
  %v287 = vpop.f32.mrf.mxu0
  %v288 = vadd.f32 0.0, %v287
  %v289 = vpop.f32.mrf.mxu0
  %v290 = vadd.f32 0.0, %v289
  %291 = vmatmul.bf16.gmra.mxu0 %v191
  %v292 = vpop.f32.mrf.mxu0
  %v293 = vadd.f32 0.0, %v292
  %v294 = vpop.f32.mrf.mxu0
  %v295 = vadd.f32 0.0, %v294
  %296 = vdwg.mxu0
  %v297 = vpack.c.bf16 %v260, %v258
  %v298 = vpack.c.bf16 %v265, %v263
  %v299 = vpack.c.bf16 %v270, %v268
  %v300 = vpack.c.bf16 %v275, %v273
  %v301 = vpack.c.bf16 %v280, %v278
  %v302 = vpack.c.bf16 %v285, %v283
  %v303 = vpack.c.bf16 %v290, %v288
  %v304 = vpack.c.bf16 %v295, %v293
  %v305 = vld [vmem:[%s3] sm:$0xff]
  %v306 = vld [vmem:[%s3 + $0x8] sm:$0xff]
  %v307 = vld [vmem:[%s3 + $0x10] sm:$0xff]
  %v308 = vld [vmem:[%s3 + $0x18] sm:$0xff]
  %v309 = vld [vmem:[%s3 + $0x20] sm:$0xff]
  %v310 = vld [vmem:[%s3 + $0x28] sm:$0xff]
  %v311 = vld [vmem:[%s3 + $0x30] sm:$0xff]
  %v312 = vld [vmem:[%s3 + $0x38] sm:$0xff]
  %v313 = vld [vmem:[%s3 + $0x40] sm:$0xff]
  %v314 = vld [vmem:[%s3 + $0x48] sm:$0xff]
  %v315 = vld [vmem:[%s3 + $0x50] sm:$0xff]
  %v316 = vld [vmem:[%s3 + $0x58] sm:$0xff]
  %v317 = vld [vmem:[%s3 + $0x60] sm:$0xff]
  %v318 = vld [vmem:[%s3 + $0x68] sm:$0xff]
  %v319 = vld [vmem:[%s3 + $0x70] sm:$0xff]
  %v320 = vld [vmem:[%s3 + $0x78] sm:$0xff]
  %v321 = vld [vmem:[%s4] sm:$0x3]
  %v323 = vperm.slane %v321, 0
  %v324 = vperm.slane %v321, 1
  %v343 = vunpack.c.l.b16 %v305
  %v344 = vunpack.c.h.b16 %v305
  %v345 = vunpack.c.l.b16 %v306
  %v346 = vunpack.c.h.b16 %v306
  %v347 = vunpack.c.l.b16 %v307
  %v348 = vunpack.c.h.b16 %v307
  %v349 = vunpack.c.l.b16 %v308
  %v350 = vunpack.c.h.b16 %v308
  %v351 = vunpack.c.l.b16 %v309
  %v352 = vunpack.c.h.b16 %v309
  %v353 = vunpack.c.l.b16 %v310
  %v354 = vunpack.c.h.b16 %v310
  %v355 = vunpack.c.l.b16 %v311
  %v356 = vunpack.c.h.b16 %v311
  %v357 = vunpack.c.l.b16 %v312
  %v358 = vunpack.c.h.b16 %v312
  %v359 = vunpack.c.l.b16 %v313
  %v360 = vunpack.c.h.b16 %v313
  %v361 = vunpack.c.l.b16 %v314
  %v362 = vunpack.c.h.b16 %v314
  %v363 = vunpack.c.l.b16 %v315
  %v364 = vunpack.c.h.b16 %v315
  %v365 = vunpack.c.l.b16 %v316
  %v366 = vunpack.c.h.b16 %v316
  %v367 = vunpack.c.l.b16 %v317
  %v368 = vunpack.c.h.b16 %v317
  %v369 = vunpack.c.l.b16 %v318
  %v370 = vunpack.c.h.b16 %v318
  %v371 = vunpack.c.l.b16 %v319
  %v372 = vunpack.c.h.b16 %v319
  %v373 = vunpack.c.l.b16 %v320
  %v374 = vunpack.c.h.b16 %v320
  %v375 = vpack.c.b16 %v345, %v343
  %v376 = vpack.c.b16 %v346, %v344
  %v377 = vpack.c.b16 %v349, %v347
  %v378 = vpack.c.b16 %v350, %v348
  %v379 = vpack.c.b16 %v353, %v351
  %v380 = vpack.c.b16 %v354, %v352
  %v381 = vpack.c.b16 %v357, %v355
  %v382 = vpack.c.b16 %v358, %v356
  %v383 = vpack.c.b16 %v361, %v359
  %v384 = vpack.c.b16 %v362, %v360
  %v385 = vpack.c.b16 %v365, %v363
  %v386 = vpack.c.b16 %v366, %v364
  %v387 = vpack.c.b16 %v369, %v367
  %v388 = vpack.c.b16 %v370, %v368
  %v389 = vpack.c.b16 %v373, %v371
  %v390 = vpack.c.b16 %v374, %v372
  %407 = vmatpush.bf16.msra.mxu0 %v389
  %408 = vmatpush.bf16.msra.mxu0 %v387
  %409 = vmatpush.bf16.msra.mxu0 %v385
  %410 = vmatpush.bf16.msra.mxu0 %v383
  %411 = vmatpush.bf16.msra.mxu0 %v381
  %412 = vmatpush.bf16.msra.mxu0 %v379
  %413 = vmatpush.bf16.msra.mxu0 %v377
  %414 = vmatpush.bf16.msra.mxu0 %v375
  %415 = vmatmul.bf16.gmra.mxu0 %v297
  %v416 = vpop.f32.mrf.mxu0
  %v417 = vadd.f32 %v323, %v416
  %v418 = vpop.f32.mrf.mxu0
  %v419 = vadd.f32 %v323, %v418
  %420 = vmatmul.bf16.gmra.mxu0 %v298
  %v421 = vpop.f32.mrf.mxu0
  %v422 = vadd.f32 %v323, %v421
  %v423 = vpop.f32.mrf.mxu0
  %v424 = vadd.f32 %v323, %v423
  %425 = vmatmul.bf16.gmra.mxu0 %v299
  %v426 = vpop.f32.mrf.mxu0
  %v427 = vadd.f32 %v323, %v426
  %v428 = vpop.f32.mrf.mxu0
  %v429 = vadd.f32 %v323, %v428
  %430 = vmatmul.bf16.gmra.mxu0 %v300
  %v431 = vpop.f32.mrf.mxu0
  %v432 = vadd.f32 %v323, %v431
  %v433 = vpop.f32.mrf.mxu0
  %v434 = vadd.f32 %v323, %v433
  %435 = vmatmul.bf16.gmra.mxu0 %v301
  %v436 = vpop.f32.mrf.mxu0
  %v437 = vadd.f32 %v323, %v436
  %v438 = vpop.f32.mrf.mxu0
  %v439 = vadd.f32 %v323, %v438
  %440 = vmatmul.bf16.gmra.mxu0 %v302
  %v441 = vpop.f32.mrf.mxu0
  %v442 = vadd.f32 %v323, %v441
  %v443 = vpop.f32.mrf.mxu0
  %v444 = vadd.f32 %v323, %v443
  %445 = vmatmul.bf16.gmra.mxu0 %v303
  %v446 = vpop.f32.mrf.mxu0
  %v447 = vadd.f32 %v323, %v446
  %v448 = vpop.f32.mrf.mxu0
  %v449 = vadd.f32 %v323, %v448
  %450 = vmatmul.bf16.gmra.mxu0 %v304
  %v451 = vpop.f32.mrf.mxu0
  %v452 = vadd.f32 %v323, %v451
  %v453 = vpop.f32.mrf.mxu0
  %v454 = vadd.f32 %v323, %v453
  %455 = vdwg.mxu0
  %456 = vmatpush.bf16.msra.mxu0 %v390
  %457 = vmatpush.bf16.msra.mxu0 %v388
  %458 = vmatpush.bf16.msra.mxu0 %v386
  %459 = vmatpush.bf16.msra.mxu0 %v384
  %460 = vmatpush.bf16.msra.mxu0 %v382
  %461 = vmatpush.bf16.msra.mxu0 %v380
  %462 = vmatpush.bf16.msra.mxu0 %v378
  %463 = vmatpush.bf16.msra.mxu0 %v376
  %464 = vmatmul.bf16.gmra.mxu0 %v297
  %v465 = vpop.f32.mrf.mxu0
  %v466 = vadd.f32 %v324, %v465
  %v467 = vpop.f32.mrf.mxu0
  %v468 = vadd.f32 %v324, %v467
  %469 = vmatmul.bf16.gmra.mxu0 %v298
  %v470 = vpop.f32.mrf.mxu0
  %v471 = vadd.f32 %v324, %v470
  %v472 = vpop.f32.mrf.mxu0
  %v473 = vadd.f32 %v324, %v472
  %474 = vmatmul.bf16.gmra.mxu0 %v299
  %v475 = vpop.f32.mrf.mxu0
  %v476 = vadd.f32 %v324, %v475
  %v477 = vpop.f32.mrf.mxu0
  %v478 = vadd.f32 %v324, %v477
  %479 = vmatmul.bf16.gmra.mxu0 %v300
  %v480 = vpop.f32.mrf.mxu0
  %v481 = vadd.f32 %v324, %v480
  %v482 = vpop.f32.mrf.mxu0
  %v483 = vadd.f32 %v324, %v482
  %484 = vmatmul.bf16.gmra.mxu0 %v301
  %v485 = vpop.f32.mrf.mxu0
  %v486 = vadd.f32 %v324, %v485
  %v487 = vpop.f32.mrf.mxu0
  %v488 = vadd.f32 %v324, %v487
  %489 = vmatmul.bf16.gmra.mxu0 %v302
  %v490 = vpop.f32.mrf.mxu0
  %v491 = vadd.f32 %v324, %v490
  %v492 = vpop.f32.mrf.mxu0
  %v493 = vadd.f32 %v324, %v492
  %494 = vmatmul.bf16.gmra.mxu0 %v303
  %v495 = vpop.f32.mrf.mxu0
  %v496 = vadd.f32 %v324, %v495
  %v497 = vpop.f32.mrf.mxu0
  %v498 = vadd.f32 %v324, %v497
  %499 = vmatmul.bf16.gmra.mxu0 %v304
  %v500 = vpop.f32.mrf.mxu0
  %v501 = vadd.f32 %v324, %v500
  %v502 = vpop.f32.mrf.mxu0
  %v503 = vadd.f32 %v324, %v502
  %504 = vdwg.mxu0
  %v505 = vmax.f32 %v417, 0.0
  %v506 = vmax.f32 %v466, 0.0
  %v507 = vmax.f32 %v419, 0.0
  %v508 = vmax.f32 %v468, 0.0
  %v509 = vmax.f32 %v422, 0.0
  %v510 = vmax.f32 %v471, 0.0
  %v511 = vmax.f32 %v424, 0.0
  %v512 = vmax.f32 %v473, 0.0
  %v513 = vmax.f32 %v427, 0.0
  %v514 = vmax.f32 %v476, 0.0
  %v515 = vmax.f32 %v429, 0.0
  %v516 = vmax.f32 %v478, 0.0
  %v517 = vmax.f32 %v432, 0.0
  %v518 = vmax.f32 %v481, 0.0
  %v519 = vmax.f32 %v434, 0.0
  %v520 = vmax.f32 %v483, 0.0
  %v521 = vmax.f32 %v437, 0.0
  %v522 = vmax.f32 %v486, 0.0
  %v523 = vmax.f32 %v439, 0.0
  %v524 = vmax.f32 %v488, 0.0
  %v525 = vmax.f32 %v442, 0.0
  %v526 = vmax.f32 %v491, 0.0
  %v527 = vmax.f32 %v444, 0.0
  %v528 = vmax.f32 %v493, 0.0
  %v529 = vmax.f32 %v447, 0.0
  %v530 = vmax.f32 %v496, 0.0
  %v531 = vmax.f32 %v449, 0.0
  %v532 = vmax.f32 %v498, 0.0
  %v533 = vmax.f32 %v452, 0.0
  %v534 = vmax.f32 %v501, 0.0
  %v535 = vmax.f32 %v454, 0.0
  %v536 = vmax.f32 %v503, 0.0
  %v537 = vpack.c.bf16 %v507, %v505
  %v538 = vpack.c.bf16 %v508, %v506
  %v539 = vpack.c.bf16 %v511, %v509
  %v540 = vpack.c.bf16 %v512, %v510
  %v541 = vpack.c.bf16 %v515, %v513
  %v542 = vpack.c.bf16 %v516, %v514
  %v543 = vpack.c.bf16 %v519, %v517
  %v544 = vpack.c.bf16 %v520, %v518
  %v545 = vpack.c.bf16 %v523, %v521
  %v546 = vpack.c.bf16 %v524, %v522
  %v547 = vpack.c.bf16 %v527, %v525
  %v548 = vpack.c.bf16 %v528, %v526
  %v549 = vpack.c.bf16 %v531, %v529
  %v550 = vpack.c.bf16 %v532, %v530
  %v551 = vpack.c.bf16 %v535, %v533
  %v552 = vpack.c.bf16 %v536, %v534
  %v553 = vld [vmem:[%s5] sm:$0xff]
  %v554 = vld [vmem:[%s5 + $0x8] sm:$0xff]
  %v555 = vld [vmem:[%s5 + $0x10] sm:$0xff]
  %v556 = vld [vmem:[%s5 + $0x18] sm:$0xff]
  %v557 = vld [vmem:[%s5 + $0x20] sm:$0xff]
  %v558 = vld [vmem:[%s5 + $0x28] sm:$0xff]
  %v559 = vld [vmem:[%s5 + $0x30] sm:$0xff]
  %v560 = vld [vmem:[%s5 + $0x38] sm:$0xff]
  %v561 = vld [vmem:[%s5 + $0x40] sm:$0xff]
  %v562 = vld [vmem:[%s5 + $0x48] sm:$0xff]
  %v563 = vld [vmem:[%s5 + $0x50] sm:$0xff]
  %v564 = vld [vmem:[%s5 + $0x58] sm:$0xff]
  %v565 = vld [vmem:[%s5 + $0x60] sm:$0xff]
  %v566 = vld [vmem:[%s5 + $0x68] sm:$0xff]
  %v567 = vld [vmem:[%s5 + $0x70] sm:$0xff]
  %v568 = vld [vmem:[%s5 + $0x78] sm:$0xff]
  %v569 = vld [vmem:[%s5 + $0x80] sm:$0xff]
  %v570 = vld [vmem:[%s5 + $0x88] sm:$0xff]
  %v571 = vld [vmem:[%s5 + $0x90] sm:$0xff]
  %v572 = vld [vmem:[%s5 + $0x98] sm:$0xff]
  %v573 = vld [vmem:[%s5 + $0xa0] sm:$0xff]
  %v574 = vld [vmem:[%s5 + $0xa8] sm:$0xff]
  %v575 = vld [vmem:[%s5 + $0xb0] sm:$0xff]
  %v576 = vld [vmem:[%s5 + $0xb8] sm:$0xff]
  %v577 = vld [vmem:[%s5 + $0xc0] sm:$0xff]
  %v578 = vld [vmem:[%s5 + $0xc8] sm:$0xff]
  %v579 = vld [vmem:[%s5 + $0xd0] sm:$0xff]
  %v580 = vld [vmem:[%s5 + $0xd8] sm:$0xff]
  %v581 = vld [vmem:[%s5 + $0xe0] sm:$0xff]
  %v582 = vld [vmem:[%s5 + $0xe8] sm:$0xff]
  %v583 = vld [vmem:[%s5 + $0xf0] sm:$0xff]
  %v584 = vld [vmem:[%s5 + $0xf8] sm:$0xff]
  %v585 = vld [vmem:[%s6] sm:$0x3]
  %v587 = vperm.slane %v585, 0
  %v588 = vperm.slane %v585, 1
  %v623 = vunpack.c.l.b16 %v553
  %v624 = vunpack.c.h.b16 %v553
  %v625 = vunpack.c.l.b16 %v554
  %v626 = vunpack.c.h.b16 %v554
  %v627 = vunpack.c.l.b16 %v555
  %v628 = vunpack.c.h.b16 %v555
  %v629 = vunpack.c.l.b16 %v556
  %v630 = vunpack.c.h.b16 %v556
  %v631 = vunpack.c.l.b16 %v557
  %v632 = vunpack.c.h.b16 %v557
  %v633 = vunpack.c.l.b16 %v558
  %v634 = vunpack.c.h.b16 %v558
  %v635 = vunpack.c.l.b16 %v559
  %v636 = vunpack.c.h.b16 %v559
  %v637 = vunpack.c.l.b16 %v560
  %v638 = vunpack.c.h.b16 %v560
  %v639 = vunpack.c.l.b16 %v561
  %v640 = vunpack.c.h.b16 %v561
  %v641 = vunpack.c.l.b16 %v562
  %v642 = vunpack.c.h.b16 %v562
  %v643 = vunpack.c.l.b16 %v563
  %v644 = vunpack.c.h.b16 %v563
  %v645 = vunpack.c.l.b16 %v564
  %v646 = vunpack.c.h.b16 %v564
  %v647 = vunpack.c.l.b16 %v565
  %v648 = vunpack.c.h.b16 %v565
  %v649 = vunpack.c.l.b16 %v566
  %v650 = vunpack.c.h.b16 %v566
  %v651 = vunpack.c.l.b16 %v567
  %v652 = vunpack.c.h.b16 %v567
  %v653 = vunpack.c.l.b16 %v568
  %v654 = vunpack.c.h.b16 %v568
  %v655 = vunpack.c.l.b16 %v569
  %v656 = vunpack.c.h.b16 %v569
  %v657 = vunpack.c.l.b16 %v570
  %v658 = vunpack.c.h.b16 %v570
  %v659 = vunpack.c.l.b16 %v571
  %v660 = vunpack.c.h.b16 %v571
  %v661 = vunpack.c.l.b16 %v572
  %v662 = vunpack.c.h.b16 %v572
  %v663 = vunpack.c.l.b16 %v573
  %v664 = vunpack.c.h.b16 %v573
  %v665 = vunpack.c.l.b16 %v574
  %v666 = vunpack.c.h.b16 %v574
  %v667 = vunpack.c.l.b16 %v575
  %v668 = vunpack.c.h.b16 %v575
  %v669 = vunpack.c.l.b16 %v576
  %v670 = vunpack.c.h.b16 %v576
  %v671 = vunpack.c.l.b16 %v577
  %v672 = vunpack.c.h.b16 %v577
  %v673 = vunpack.c.l.b16 %v578
  %v674 = vunpack.c.h.b16 %v578
  %v675 = vunpack.c.l.b16 %v579
  %v676 = vunpack.c.h.b16 %v579
  %v677 = vunpack.c.l.b16 %v580
  %v678 = vunpack.c.h.b16 %v580
  %v679 = vunpack.c.l.b16 %v581
  %v680 = vunpack.c.h.b16 %v581
  %v681 = vunpack.c.l.b16 %v582
  %v682 = vunpack.c.h.b16 %v582
  %v683 = vunpack.c.l.b16 %v583
  %v684 = vunpack.c.h.b16 %v583
  %v685 = vunpack.c.l.b16 %v584
  %v686 = vunpack.c.h.b16 %v584
  %v687 = vpack.c.b16 %v625, %v623
  %v688 = vpack.c.b16 %v626, %v624
  %v689 = vpack.c.b16 %v629, %v627
  %v690 = vpack.c.b16 %v630, %v628
  %v691 = vpack.c.b16 %v633, %v631
  %v692 = vpack.c.b16 %v634, %v632
  %v693 = vpack.c.b16 %v637, %v635
  %v694 = vpack.c.b16 %v638, %v636
  %v695 = vpack.c.b16 %v641, %v639
  %v696 = vpack.c.b16 %v642, %v640
  %v697 = vpack.c.b16 %v645, %v643
  %v698 = vpack.c.b16 %v646, %v644
  %v699 = vpack.c.b16 %v649, %v647
  %v700 = vpack.c.b16 %v650, %v648
  %v701 = vpack.c.b16 %v653, %v651
  %v702 = vpack.c.b16 %v654, %v652
  %v703 = vpack.c.b16 %v657, %v655
  %v704 = vpack.c.b16 %v658, %v656
  %v705 = vpack.c.b16 %v661, %v659
  %v706 = vpack.c.b16 %v662, %v660
  %v707 = vpack.c.b16 %v665, %v663
  %v708 = vpack.c.b16 %v666, %v664
  %v709 = vpack.c.b16 %v669, %v667
  %v710 = vpack.c.b16 %v670, %v668
  %v711 = vpack.c.b16 %v673, %v671
  %v712 = vpack.c.b16 %v674, %v672
  %v713 = vpack.c.b16 %v677, %v675
  %v714 = vpack.c.b16 %v678, %v676
  %v715 = vpack.c.b16 %v681, %v679
  %v716 = vpack.c.b16 %v682, %v680
  %v717 = vpack.c.b16 %v685, %v683
  %v718 = vpack.c.b16 %v686, %v684
  %751 = vmatpush.bf16.msra.mxu0 %v701
  %752 = vmatpush.bf16.msra.mxu0 %v699
  %753 = vmatpush.bf16.msra.mxu0 %v697
  %754 = vmatpush.bf16.msra.mxu0 %v695
  %755 = vmatpush.bf16.msra.mxu0 %v693
  %756 = vmatpush.bf16.msra.mxu0 %v691
  %757 = vmatpush.bf16.msra.mxu0 %v689
  %758 = vmatpush.bf16.msra.mxu0 %v687
  %759 = vmatmul.bf16.gmra.mxu0 %v537
  %v760 = vpop.f32.mrf.mxu0
  %v761 = vadd.f32 %v587, %v760
  %v762 = vpop.f32.mrf.mxu0
  %v763 = vadd.f32 %v587, %v762
  %764 = vmatmul.bf16.gmra.mxu0 %v539
  %v765 = vpop.f32.mrf.mxu0
  %v766 = vadd.f32 %v587, %v765
  %v767 = vpop.f32.mrf.mxu0
  %v768 = vadd.f32 %v587, %v767
  %769 = vmatmul.bf16.gmra.mxu0 %v541
  %v770 = vpop.f32.mrf.mxu0
  %v771 = vadd.f32 %v587, %v770
  %v772 = vpop.f32.mrf.mxu0
  %v773 = vadd.f32 %v587, %v772
  %774 = vmatmul.bf16.gmra.mxu0 %v543
  %v775 = vpop.f32.mrf.mxu0
  %v776 = vadd.f32 %v587, %v775
  %v777 = vpop.f32.mrf.mxu0
  %v778 = vadd.f32 %v587, %v777
  %779 = vmatmul.bf16.gmra.mxu0 %v545
  %v780 = vpop.f32.mrf.mxu0
  %v781 = vadd.f32 %v587, %v780
  %v782 = vpop.f32.mrf.mxu0
  %v783 = vadd.f32 %v587, %v782
  %784 = vmatmul.bf16.gmra.mxu0 %v547
  %v785 = vpop.f32.mrf.mxu0
  %v786 = vadd.f32 %v587, %v785
  %v787 = vpop.f32.mrf.mxu0
  %v788 = vadd.f32 %v587, %v787
  %789 = vmatmul.bf16.gmra.mxu0 %v549
  %v790 = vpop.f32.mrf.mxu0
  %v791 = vadd.f32 %v587, %v790
  %v792 = vpop.f32.mrf.mxu0
  %v793 = vadd.f32 %v587, %v792
  %794 = vmatmul.bf16.gmra.mxu0 %v551
  %v795 = vpop.f32.mrf.mxu0
  %v796 = vadd.f32 %v587, %v795
  %v797 = vpop.f32.mrf.mxu0
  %v798 = vadd.f32 %v587, %v797
  %799 = vdwg.mxu0
  %800 = vmatpush.bf16.msra.mxu0 %v717
  %801 = vmatpush.bf16.msra.mxu0 %v715
  %802 = vmatpush.bf16.msra.mxu0 %v713
  %803 = vmatpush.bf16.msra.mxu0 %v711
  %804 = vmatpush.bf16.msra.mxu0 %v709
  %805 = vmatpush.bf16.msra.mxu0 %v707
  %806 = vmatpush.bf16.msra.mxu0 %v705
  %807 = vmatpush.bf16.msra.mxu0 %v703
  %808 = vmatmul.bf16.gmra.mxu0 %v538
  %v809 = vpop.f32.mrf.mxu0
  %v810 = vadd.f32 %v761, %v809
  %v811 = vpop.f32.mrf.mxu0
  %v812 = vadd.f32 %v763, %v811
  %813 = vmatmul.bf16.gmra.mxu0 %v540
  %v814 = vpop.f32.mrf.mxu0
  %v815 = vadd.f32 %v766, %v814
  %v816 = vpop.f32.mrf.mxu0
  %v817 = vadd.f32 %v768, %v816
  %818 = vmatmul.bf16.gmra.mxu0 %v542
  %v819 = vpop.f32.mrf.mxu0
  %v820 = vadd.f32 %v771, %v819
  %v821 = vpop.f32.mrf.mxu0
  %v822 = vadd.f32 %v773, %v821
  %823 = vmatmul.bf16.gmra.mxu0 %v544
  %v824 = vpop.f32.mrf.mxu0
  %v825 = vadd.f32 %v776, %v824
  %v826 = vpop.f32.mrf.mxu0
  %v827 = vadd.f32 %v778, %v826
  %828 = vmatmul.bf16.gmra.mxu0 %v546
  %v829 = vpop.f32.mrf.mxu0
  %v830 = vadd.f32 %v781, %v829
  %v831 = vpop.f32.mrf.mxu0
  %v832 = vadd.f32 %v783, %v831
  %833 = vmatmul.bf16.gmra.mxu0 %v548
  %v834 = vpop.f32.mrf.mxu0
  %v835 = vadd.f32 %v786, %v834
  %v836 = vpop.f32.mrf.mxu0
  %v837 = vadd.f32 %v788, %v836
  %838 = vmatmul.bf16.gmra.mxu0 %v550
  %v839 = vpop.f32.mrf.mxu0
  %v840 = vadd.f32 %v791, %v839
  %v841 = vpop.f32.mrf.mxu0
  %v842 = vadd.f32 %v793, %v841
  %843 = vmatmul.bf16.gmra.mxu0 %v552
  %v844 = vpop.f32.mrf.mxu0
  %v845 = vadd.f32 %v796, %v844
  %v846 = vpop.f32.mrf.mxu0
  %v847 = vadd.f32 %v798, %v846
  %848 = vdwg.mxu0
  %849 = vmatpush.bf16.msra.mxu0 %v702
  %850 = vmatpush.bf16.msra.mxu0 %v700
  %851 = vmatpush.bf16.msra.mxu0 %v698
  %852 = vmatpush.bf16.msra.mxu0 %v696
  %853 = vmatpush.bf16.msra.mxu0 %v694
  %854 = vmatpush.bf16.msra.mxu0 %v692
  %855 = vmatpush.bf16.msra.mxu0 %v690
  %856 = vmatpush.bf16.msra.mxu0 %v688
  %857 = vmatmul.bf16.gmra.mxu0 %v537
  %v858 = vpop.f32.mrf.mxu0
  %v859 = vadd.f32 %v588, %v858
  %v860 = vpop.f32.mrf.mxu0
  %v861 = vadd.f32 %v588, %v860
  %862 = vmatmul.bf16.gmra.mxu0 %v539
  %v863 = vpop.f32.mrf.mxu0
  %v864 = vadd.f32 %v588, %v863
  %v865 = vpop.f32.mrf.mxu0
  %v866 = vadd.f32 %v588, %v865
  %867 = vmatmul.bf16.gmra.mxu0 %v541
  %v868 = vpop.f32.mrf.mxu0
  %v869 = vadd.f32 %v588, %v868
  %v870 = vpop.f32.mrf.mxu0
  %v871 = vadd.f32 %v588, %v870
  %872 = vmatmul.bf16.gmra.mxu0 %v543
  %v873 = vpop.f32.mrf.mxu0
  %v874 = vadd.f32 %v588, %v873
  %v875 = vpop.f32.mrf.mxu0
  %v876 = vadd.f32 %v588, %v875
  %877 = vmatmul.bf16.gmra.mxu0 %v545
  %v878 = vpop.f32.mrf.mxu0
  %v879 = vadd.f32 %v588, %v878
  %v880 = vpop.f32.mrf.mxu0
  %v881 = vadd.f32 %v588, %v880
  %882 = vmatmul.bf16.gmra.mxu0 %v547
  %v883 = vpop.f32.mrf.mxu0
  %v884 = vadd.f32 %v588, %v883
  %v885 = vpop.f32.mrf.mxu0
  %v886 = vadd.f32 %v588, %v885
  %887 = vmatmul.bf16.gmra.mxu0 %v549
  %v888 = vpop.f32.mrf.mxu0
  %v889 = vadd.f32 %v588, %v888
  %v890 = vpop.f32.mrf.mxu0
  %v891 = vadd.f32 %v588, %v890
  %892 = vmatmul.bf16.gmra.mxu0 %v551
  %v893 = vpop.f32.mrf.mxu0
  %v894 = vadd.f32 %v588, %v893
  %v895 = vpop.f32.mrf.mxu0
  %v896 = vadd.f32 %v588, %v895
  %897 = vdwg.mxu0
  %898 = vmatpush.bf16.msra.mxu0 %v718
  %899 = vmatpush.bf16.msra.mxu0 %v716
  %900 = vmatpush.bf16.msra.mxu0 %v714
  %901 = vmatpush.bf16.msra.mxu0 %v712
  %902 = vmatpush.bf16.msra.mxu0 %v710
  %903 = vmatpush.bf16.msra.mxu0 %v708
  %904 = vmatpush.bf16.msra.mxu0 %v706
  %905 = vmatpush.bf16.msra.mxu0 %v704
  %906 = vmatmul.bf16.gmra.mxu0 %v538
  %v907 = vpop.f32.mrf.mxu0
  %v908 = vadd.f32 %v859, %v907
  %v909 = vpop.f32.mrf.mxu0
  %v910 = vadd.f32 %v861, %v909
  %911 = vmatmul.bf16.gmra.mxu0 %v540
  %v912 = vpop.f32.mrf.mxu0
  %v913 = vadd.f32 %v864, %v912
  %v914 = vpop.f32.mrf.mxu0
  %v915 = vadd.f32 %v866, %v914
  %916 = vmatmul.bf16.gmra.mxu0 %v542
  %v917 = vpop.f32.mrf.mxu0
  %v918 = vadd.f32 %v869, %v917
  %v919 = vpop.f32.mrf.mxu0
  %v920 = vadd.f32 %v871, %v919
  %921 = vmatmul.bf16.gmra.mxu0 %v544
  %v922 = vpop.f32.mrf.mxu0
  %v923 = vadd.f32 %v874, %v922
  %v924 = vpop.f32.mrf.mxu0
  %v925 = vadd.f32 %v876, %v924
  %926 = vmatmul.bf16.gmra.mxu0 %v546
  %v927 = vpop.f32.mrf.mxu0
  %v928 = vadd.f32 %v879, %v927
  %v929 = vpop.f32.mrf.mxu0
  %v930 = vadd.f32 %v881, %v929
  %931 = vmatmul.bf16.gmra.mxu0 %v548
  %v932 = vpop.f32.mrf.mxu0
  %v933 = vadd.f32 %v884, %v932
  %v934 = vpop.f32.mrf.mxu0
  %v935 = vadd.f32 %v886, %v934
  %936 = vmatmul.bf16.gmra.mxu0 %v550
  %v937 = vpop.f32.mrf.mxu0
  %v938 = vadd.f32 %v889, %v937
  %v939 = vpop.f32.mrf.mxu0
  %v940 = vadd.f32 %v891, %v939
  %941 = vmatmul.bf16.gmra.mxu0 %v552
  %v942 = vpop.f32.mrf.mxu0
  %v943 = vadd.f32 %v894, %v942
  %v944 = vpop.f32.mrf.mxu0
  %v945 = vadd.f32 %v896, %v944
  %946 = vdwg.mxu0
  %v947 = vmax.f32 %v810, 0.0
  %v948 = vmax.f32 %v908, 0.0
  %v949 = vmax.f32 %v812, 0.0
  %v950 = vmax.f32 %v910, 0.0
  %v951 = vmax.f32 %v815, 0.0
  %v952 = vmax.f32 %v913, 0.0
  %v953 = vmax.f32 %v817, 0.0
  %v954 = vmax.f32 %v915, 0.0
  %v955 = vmax.f32 %v820, 0.0
  %v956 = vmax.f32 %v918, 0.0
  %v957 = vmax.f32 %v822, 0.0
  %v958 = vmax.f32 %v920, 0.0
  %v959 = vmax.f32 %v825, 0.0
  %v960 = vmax.f32 %v923, 0.0
  %v961 = vmax.f32 %v827, 0.0
  %v962 = vmax.f32 %v925, 0.0
  %v963 = vmax.f32 %v830, 0.0
  %v964 = vmax.f32 %v928, 0.0
  %v965 = vmax.f32 %v832, 0.0
  %v966 = vmax.f32 %v930, 0.0
  %v967 = vmax.f32 %v835, 0.0
  %v968 = vmax.f32 %v933, 0.0
  %v969 = vmax.f32 %v837, 0.0
  %v970 = vmax.f32 %v935, 0.0
  %v971 = vmax.f32 %v840, 0.0
  %v972 = vmax.f32 %v938, 0.0
  %v973 = vmax.f32 %v842, 0.0
  %v974 = vmax.f32 %v940, 0.0
  %v975 = vmax.f32 %v845, 0.0
  %v976 = vmax.f32 %v943, 0.0
  %v977 = vmax.f32 %v847, 0.0
  %v978 = vmax.f32 %v945, 0.0
  %v979 = vld [vmem:[%s7] sm:$0x3]
  %v981 = vperm.slane %v979, 0
  %v982 = vperm.slane %v979, 1
  %v985 = vmul.f32 %v947, %v981
  %v986 = vmul.f32 %v948, %v982
  %v987 = vmul.f32 %v949, %v981
  %v988 = vmul.f32 %v950, %v982
  %v989 = vmul.f32 %v951, %v981
  %v990 = vmul.f32 %v952, %v982
  %v991 = vmul.f32 %v953, %v981
  %v992 = vmul.f32 %v954, %v982
  %v993 = vmul.f32 %v955, %v981
  %v994 = vmul.f32 %v956, %v982
  %v995 = vmul.f32 %v957, %v981
  %v996 = vmul.f32 %v958, %v982
  %v997 = vmul.f32 %v959, %v981
  %v998 = vmul.f32 %v960, %v982
  %v999 = vmul.f32 %v961, %v981
  %v1000 = vmul.f32 %v962, %v982
  %v1001 = vmul.f32 %v963, %v981
  %v1002 = vmul.f32 %v964, %v982
  %v1003 = vmul.f32 %v965, %v981
  %v1004 = vmul.f32 %v966, %v982
  %v1005 = vmul.f32 %v967, %v981
  %v1006 = vmul.f32 %v968, %v982
  %v1007 = vmul.f32 %v969, %v981
  %v1008 = vmul.f32 %v970, %v982
  %v1009 = vmul.f32 %v971, %v981
  %v1010 = vmul.f32 %v972, %v982
  %v1011 = vmul.f32 %v973, %v981
  %v1012 = vmul.f32 %v974, %v982
  %v1013 = vmul.f32 %v975, %v981
  %v1014 = vmul.f32 %v976, %v982
  %v1015 = vmul.f32 %v977, %v981
  %v1016 = vmul.f32 %v978, %v982
  %v1017 = vld [vmem:[%s8] sm:$0x3]
  %v1019 = vperm.slane %v1017, 0
  %v1020 = vperm.slane %v1017, 1
  %v1023 = vadd.f32 %v985, %v1019
  %v1024 = vadd.f32 %v986, %v1020
  %v1025 = vadd.f32 %v987, %v1019
  %v1026 = vadd.f32 %v988, %v1020
  %v1027 = vadd.f32 %v989, %v1019
  %v1028 = vadd.f32 %v990, %v1020
  %v1029 = vadd.f32 %v991, %v1019
  %v1030 = vadd.f32 %v992, %v1020
  %v1031 = vadd.f32 %v993, %v1019
  %v1032 = vadd.f32 %v994, %v1020
  %v1033 = vadd.f32 %v995, %v1019
  %v1034 = vadd.f32 %v996, %v1020
  %v1035 = vadd.f32 %v997, %v1019
  %v1036 = vadd.f32 %v998, %v1020
  %v1037 = vadd.f32 %v999, %v1019
  %v1038 = vadd.f32 %v1000, %v1020
  %v1039 = vadd.f32 %v1001, %v1019
  %v1040 = vadd.f32 %v1002, %v1020
  %v1041 = vadd.f32 %v1003, %v1019
  %v1042 = vadd.f32 %v1004, %v1020
  %v1043 = vadd.f32 %v1005, %v1019
  %v1044 = vadd.f32 %v1006, %v1020
  %v1045 = vadd.f32 %v1007, %v1019
  %v1046 = vadd.f32 %v1008, %v1020
  %v1047 = vadd.f32 %v1009, %v1019
  %v1048 = vadd.f32 %v1010, %v1020
  %v1049 = vadd.f32 %v1011, %v1019
  %v1050 = vadd.f32 %v1012, %v1020
  %v1051 = vadd.f32 %v1013, %v1019
  %v1052 = vadd.f32 %v1014, %v1020
  %v1053 = vadd.f32 %v1015, %v1019
  %v1054 = vadd.f32 %v1016, %v1020
  %v1055 = vpack.c.bf16 %v1024, %v1023
  %v1056 = vpack.c.bf16 %v1026, %v1025
  %v1057 = vpack.c.bf16 %v1028, %v1027
  %v1058 = vpack.c.bf16 %v1030, %v1029
  %v1059 = vpack.c.bf16 %v1032, %v1031
  %v1060 = vpack.c.bf16 %v1034, %v1033
  %v1061 = vpack.c.bf16 %v1036, %v1035
  %v1062 = vpack.c.bf16 %v1038, %v1037
  %v1063 = vpack.c.bf16 %v1040, %v1039
  %v1064 = vpack.c.bf16 %v1042, %v1041
  %v1065 = vpack.c.bf16 %v1044, %v1043
  %v1066 = vpack.c.bf16 %v1046, %v1045
  %v1067 = vpack.c.bf16 %v1048, %v1047
  %v1068 = vpack.c.bf16 %v1050, %v1049
  %v1069 = vpack.c.bf16 %v1052, %v1051
  %v1070 = vpack.c.bf16 %v1054, %v1053
  %s1071 = smul.u32 0, 2
  %s1072 = smul.addr %s1071, 4
  %s1073 = scalar_lea.vmem [#allocation2], %s1072
  %1074 = vst [vmem:[%s1073] sm:$0xff] %v1055
  %1075 = vst [vmem:[%s1073 + $0x8] sm:$0xff] %v1056
  %1076 = vst [vmem:[%s1073 + $0x10] sm:$0xff] %v1057
  %1077 = vst [vmem:[%s1073 + $0x18] sm:$0xff] %v1058
  %1078 = vst [vmem:[%s1073 + $0x20] sm:$0xff] %v1059
  %1079 = vst [vmem:[%s1073 + $0x28] sm:$0xff] %v1060
  %1080 = vst [vmem:[%s1073 + $0x30] sm:$0xff] %v1061
  %1081 = vst [vmem:[%s1073 + $0x38] sm:$0xff] %v1062
  %1082 = vst [vmem:[%s1073 + $0x40] sm:$0xff] %v1063
  %1083 = vst [vmem:[%s1073 + $0x48] sm:$0xff] %v1064
  %1084 = vst [vmem:[%s1073 + $0x50] sm:$0xff] %v1065
  %1085 = vst [vmem:[%s1073 + $0x58] sm:$0xff] %v1066
  %1086 = vst [vmem:[%s1073 + $0x60] sm:$0xff] %v1067
  %1087 = vst [vmem:[%s1073 + $0x68] sm:$0xff] %v1068
  %1088 = vst [vmem:[%s1073 + $0x70] sm:$0xff] %v1069
  %1089 = vst [vmem:[%s1073 + $0x78] sm:$0xff] %v1070
  // Predicated region
  $region125: #{ginconvnet_forward.1} parent=0 // pred_check
    _
  $region126: #{ginconvnet_forward.1} parent=0 // pred_check_branch
    %1091 = sbr.rel (0) target = $region128
  $region127: #{ginconvnet_forward.1} parent=0 // pred_region
    loop: start=0, step=1, limit=1
    $region129: #{ginconvnet_forward.1} parent=127 // loop_pre_header
      _
    $region130: #{ginconvnet_forward.1} parent=127 // loop_header
      %s1093 = sphi 0, %s1097
      %p1094 = scmp.ge.s32.totalorder %s1093, 1
      %s1098 = sphi %s0, %s0
      %s1099 = sphi [#allocation5], [#allocation5]
    $region131: #{ginconvnet_forward.1} parent=127 // loop_header_branch
      %1096 = sbr.rel (%p1094) target = $region135
    $region132: #{ginconvnet_forward.1} parent=127 // loop_body
      %v1100 = vld [vmem:[%s1098] sm:$0xff]
      %1101 = vst [vmem:[%s1099] sm:$0xff] %v1100
      %v1102 = vld [vmem:[%s1098 + $0x8] sm:$0xff]
      %1103 = vst [vmem:[%s1099 + $0x8] sm:$0xff] %v1102
      %v1104 = vld [vmem:[%s1098 + $0x10] sm:$0xff]
      %1105 = vst [vmem:[%s1099 + $0x10] sm:$0xff] %v1104
      %v1106 = vld [vmem:[%s1098 + $0x18] sm:$0xff]
      %1107 = vst [vmem:[%s1099 + $0x18] sm:$0xff] %v1106
      %v1108 = vld [vmem:[%s1098 + $0x20] sm:$0xff]
      %1109 = vst [vmem:[%s1099 + $0x20] sm:$0xff] %v1108
      %v1110 = vld [vmem:[%s1098 + $0x28] sm:$0xff]
      %1111 = vst [vmem:[%s1099 + $0x28] sm:$0xff] %v1110
      %v1112 = vld [vmem:[%s1098 + $0x30] sm:$0xff]
      %1113 = vst [vmem:[%s1099 + $0x30] sm:$0xff] %v1112
      %v1114 = vld [vmem:[%s1098 + $0x38] sm:$0xff]
      %1115 = vst [vmem:[%s1099 + $0x38] sm:$0xff] %v1114
    $region133: #{ginconvnet_forward.1} parent=127 // loop_footer
      %s1097 = sadd.s32 1, %s1093
    $region134: #{ginconvnet_forward.1} parent=127 // loop_footer_branch
      %1092 = sbr.rel target = $region130
    $region135: #{ginconvnet_forward.1} parent=127 // loop_exit
      _
  $region128: #{ginconvnet_forward.1} parent=0 // pred_fallthru
    _
  // Predicated region
  $region136: #{ginconvnet_forward.1} parent=0 // pred_check
    _
  $region137: #{ginconvnet_forward.1} parent=0 // pred_check_branch
    %1117 = sbr.rel target = $region139
  $region138: #{ginconvnet_forward.1} parent=0 // pred_region
    _
  $region139: #{ginconvnet_forward.1} parent=0 // pred_fallthru
    _
  // Predicated region
  $region140: #{ginconvnet_forward.1} parent=0 // pred_check
    _
  $region141: #{ginconvnet_forward.1} parent=0 // pred_check_branch
    %1120 = sbr.rel (0) target = $region143
  $region142: #{ginconvnet_forward.1} parent=0 // pred_region
    %1121 = vsyncadd [#allocation6], 1024
  $region143: #{ginconvnet_forward.1} parent=0 // pred_fallthru
    _
  %s1122 = sshll.u32 %s117, 4
  %1123 = dma.done [#allocation6], %s1122
  %v1124 = vld [vmem:[#allocation5] sm:$0xf]
  %v1125 = vld [vmem:[#allocation5 + $0x4] sm:$0xf]
  %v1126 = vld [vmem:[#allocation5 + $0x8] sm:$0xf]
  %v1127 = vld [vmem:[#allocation5 + $0xc] sm:$0xf]
  %v1128 = vld [vmem:[#allocation5 + $0x10] sm:$0xf]
  %v1129 = vld [vmem:[#allocation5 + $0x14] sm:$0xf]
  %v1130 = vld [vmem:[#allocation5 + $0x18] sm:$0xf]
  %v1131 = vld [vmem:[#allocation5 + $0x1c] sm:$0xf]
  %v1132 = vld [vmem:[#allocation5 + $0x20] sm:$0xf]
  %v1133 = vld [vmem:[#allocation5 + $0x24] sm:$0xf]
  %v1134 = vld [vmem:[#allocation5 + $0x28] sm:$0xf]
  %v1135 = vld [vmem:[#allocation5 + $0x2c] sm:$0xf]
  %v1136 = vld [vmem:[#allocation5 + $0x30] sm:$0xf]
  %v1137 = vld [vmem:[#allocation5 + $0x34] sm:$0xf]
  %v1138 = vld [vmem:[#allocation5 + $0x38] sm:$0xf]
  %v1139 = vld [vmem:[#allocation5 + $0x3c] sm:$0xf]
  %v1140 = vld [vmem:[#allocation2] sm:$0xff]
  %v1141 = vld [vmem:[#allocation2 + $0x8] sm:$0xff]
  %v1142 = vld [vmem:[#allocation2 + $0x10] sm:$0xff]
  %v1143 = vld [vmem:[#allocation2 + $0x18] sm:$0xff]
  %v1144 = vld [vmem:[#allocation2 + $0x20] sm:$0xff]
  %v1145 = vld [vmem:[#allocation2 + $0x28] sm:$0xff]
  %v1146 = vld [vmem:[#allocation2 + $0x30] sm:$0xff]
  %v1147 = vld [vmem:[#allocation2 + $0x38] sm:$0xff]
  %v1148 = vld [vmem:[#allocation2 + $0x40] sm:$0xff]
  %v1149 = vld [vmem:[#allocation2 + $0x48] sm:$0xff]
  %v1150 = vld [vmem:[#allocation2 + $0x50] sm:$0xff]
  %v1151 = vld [vmem:[#allocation2 + $0x58] sm:$0xff]
  %v1152 = vld [vmem:[#allocation2 + $0x60] sm:$0xff]
  %v1153 = vld [vmem:[#allocation2 + $0x68] sm:$0xff]
  %v1154 = vld [vmem:[#allocation2 + $0x70] sm:$0xff]
  %v1155 = vld [vmem:[#allocation2 + $0x78] sm:$0xff]
  %v1172 = vunpack.c.l.b16 %v1124
  %v1173 = vunpack.c.l.b16 %v1125
  %v1174 = vunpack.c.l.b16 %v1126
  %v1175 = vunpack.c.l.b16 %v1127
  %v1176 = vunpack.c.l.b16 %v1128
  %v1177 = vunpack.c.l.b16 %v1129
  %v1178 = vunpack.c.l.b16 %v1130
  %v1179 = vunpack.c.l.b16 %v1131
  %v1180 = vunpack.c.l.b16 %v1132
  %v1181 = vunpack.c.l.b16 %v1133
  %v1182 = vunpack.c.l.b16 %v1134
  %v1183 = vunpack.c.l.b16 %v1135
  %v1184 = vunpack.c.l.b16 %v1136
  %v1185 = vunpack.c.l.b16 %v1137
  %v1186 = vunpack.c.l.b16 %v1138
  %v1187 = vunpack.c.l.b16 %v1139
  %v1188 = vpack.c.b16 %v1173, %v1172
  %v1189 = vpack.c.b16 %v1175, %v1174
  %v1190 = vpack.c.b16 %v1177, %v1176
  %v1191 = vpack.c.b16 %v1179, %v1178
  %v1192 = vpack.c.b16 %v1181, %v1180
  %v1193 = vpack.c.b16 %v1183, %v1182
  %v1194 = vpack.c.b16 %v1185, %v1184
  %v1195 = vpack.c.b16 %v1187, %v1186
  %v1220 = vunpack.c.l.b16 %v1140
  %v1221 = vunpack.c.h.b16 %v1140
  %v1222 = vunpack.c.l.b16 %v1141
  %v1223 = vunpack.c.h.b16 %v1141
  %v1224 = vunpack.c.l.b16 %v1142
  %v1225 = vunpack.c.h.b16 %v1142
  %v1226 = vunpack.c.l.b16 %v1143
  %v1227 = vunpack.c.h.b16 %v1143
  %v1228 = vunpack.c.l.b16 %v1144
  %v1229 = vunpack.c.h.b16 %v1144
  %v1230 = vunpack.c.l.b16 %v1145
  %v1231 = vunpack.c.h.b16 %v1145
  %v1232 = vunpack.c.l.b16 %v1146
  %v1233 = vunpack.c.h.b16 %v1146
  %v1234 = vunpack.c.l.b16 %v1147
  %v1235 = vunpack.c.h.b16 %v1147
  %v1236 = vunpack.c.l.b16 %v1148
  %v1237 = vunpack.c.h.b16 %v1148
  %v1238 = vunpack.c.l.b16 %v1149
  %v1239 = vunpack.c.h.b16 %v1149
  %v1240 = vunpack.c.l.b16 %v1150
  %v1241 = vunpack.c.h.b16 %v1150
  %v1242 = vunpack.c.l.b16 %v1151
  %v1243 = vunpack.c.h.b16 %v1151
  %v1244 = vunpack.c.l.b16 %v1152
  %v1245 = vunpack.c.h.b16 %v1152
  %v1246 = vunpack.c.l.b16 %v1153
  %v1247 = vunpack.c.h.b16 %v1153
  %v1248 = vunpack.c.l.b16 %v1154
  %v1249 = vunpack.c.h.b16 %v1154
  %v1250 = vunpack.c.l.b16 %v1155
  %v1251 = vunpack.c.h.b16 %v1155
  %v1252 = vpack.c.b16 %v1222, %v1220
  %v1253 = vpack.c.b16 %v1223, %v1221
  %v1254 = vpack.c.b16 %v1226, %v1224
  %v1255 = vpack.c.b16 %v1227, %v1225
  %v1256 = vpack.c.b16 %v1230, %v1228
  %v1257 = vpack.c.b16 %v1231, %v1229
  %v1258 = vpack.c.b16 %v1234, %v1232
  %v1259 = vpack.c.b16 %v1235, %v1233
  %v1260 = vpack.c.b16 %v1238, %v1236
  %v1261 = vpack.c.b16 %v1239, %v1237
  %v1262 = vpack.c.b16 %v1242, %v1240
  %v1263 = vpack.c.b16 %v1243, %v1241
  %v1264 = vpack.c.b16 %v1246, %v1244
  %v1265 = vpack.c.b16 %v1247, %v1245
  %v1266 = vpack.c.b16 %v1250, %v1248
  %v1267 = vpack.c.b16 %v1251, %v1249
  %1284 = vmatpush.bf16.msra.mxu0 %v1266
  %1285 = vmatpush.bf16.msra.mxu0 %v1264
  %1286 = vmatpush.bf16.msra.mxu0 %v1262
  %1287 = vmatpush.bf16.msra.mxu0 %v1260
  %1288 = vmatpush.bf16.msra.mxu0 %v1258
  %1289 = vmatpush.bf16.msra.mxu0 %v1256
  %1290 = vmatpush.bf16.msra.mxu0 %v1254
  %1291 = vmatpush.bf16.msra.mxu0 %v1252
  %1292 = vmatmul.bf16.gmra.mxu0 %v1188
  %v1293 = vpop.f32.mrf.mxu0
  %v1294 = vadd.f32 0.0, %v1293
  %v1295 = vpop.f32.mrf.mxu0
  %v1296 = vadd.f32 0.0, %v1295
  %1297 = vmatmul.bf16.gmra.mxu0 %v1189
  %v1298 = vpop.f32.mrf.mxu0
  %v1299 = vadd.f32 0.0, %v1298
  %v1300 = vpop.f32.mrf.mxu0
  %v1301 = vadd.f32 0.0, %v1300
  %1302 = vmatmul.bf16.gmra.mxu0 %v1190
  %v1303 = vpop.f32.mrf.mxu0
  %v1304 = vadd.f32 0.0, %v1303
  %v1305 = vpop.f32.mrf.mxu0
  %v1306 = vadd.f32 0.0, %v1305
  %1307 = vmatmul.bf16.gmra.mxu0 %v1191
  %v1308 = vpop.f32.mrf.mxu0
  %v1309 = vadd.f32 0.0, %v1308
  %v1310 = vpop.f32.mrf.mxu0
  %v1311 = vadd.f32 0.0, %v1310
  %1312 = vmatmul.bf16.gmra.mxu0 %v1192
  %v1313 = vpop.f32.mrf.mxu0
  %v1314 = vadd.f32 0.0, %v1313
  %v1315 = vpop.f32.mrf.mxu0
  %v1316 = vadd.f32 0.0, %v1315
  %1317 = vmatmul.bf16.gmra.mxu0 %v1193
  %v1318 = vpop.f32.mrf.mxu0
  %v1319 = vadd.f32 0.0, %v1318
  %v1320 = vpop.f32.mrf.mxu0
  %v1321 = vadd.f32 0.0, %v1320
  %1322 = vmatmul.bf16.gmra.mxu0 %v1194
  %v1323 = vpop.f32.mrf.mxu0
  %v1324 = vadd.f32 0.0, %v1323
  %v1325 = vpop.f32.mrf.mxu0
  %v1326 = vadd.f32 0.0, %v1325
  %1327 = vmatmul.bf16.gmra.mxu0 %v1195
  %v1328 = vpop.f32.mrf.mxu0
  %v1329 = vadd.f32 0.0, %v1328
  %v1330 = vpop.f32.mrf.mxu0
  %v1331 = vadd.f32 0.0, %v1330
  %1332 = vdwg.mxu0
  %1333 = vmatpush.bf16.msra.mxu0 %v1267
  %1334 = vmatpush.bf16.msra.mxu0 %v1265
  %1335 = vmatpush.bf16.msra.mxu0 %v1263
  %1336 = vmatpush.bf16.msra.mxu0 %v1261
  %1337 = vmatpush.bf16.msra.mxu0 %v1259
  %1338 = vmatpush.bf16.msra.mxu0 %v1257
  %1339 = vmatpush.bf16.msra.mxu0 %v1255
  %1340 = vmatpush.bf16.msra.mxu0 %v1253
  %1341 = vmatmul.bf16.gmra.mxu0 %v1188
  %v1342 = vpop.f32.mrf.mxu0
  %v1343 = vadd.f32 0.0, %v1342
  %v1344 = vpop.f32.mrf.mxu0
  %v1345 = vadd.f32 0.0, %v1344
  %1346 = vmatmul.bf16.gmra.mxu0 %v1189
  %v1347 = vpop.f32.mrf.mxu0
  %v1348 = vadd.f32 0.0, %v1347
  %v1349 = vpop.f32.mrf.mxu0
  %v1350 = vadd.f32 0.0, %v1349
  %1351 = vmatmul.bf16.gmra.mxu0 %v1190
  %v1352 = vpop.f32.mrf.mxu0
  %v1353 = vadd.f32 0.0, %v1352
  %v1354 = vpop.f32.mrf.mxu0
  %v1355 = vadd.f32 0.0, %v1354
  %1356 = vmatmul.bf16.gmra.mxu0 %v1191
  %v1357 = vpop.f32.mrf.mxu0
  %v1358 = vadd.f32 0.0, %v1357
  %v1359 = vpop.f32.mrf.mxu0
  %v1360 = vadd.f32 0.0, %v1359
  %1361 = vmatmul.bf16.gmra.mxu0 %v1192
  %v1362 = vpop.f32.mrf.mxu0
  %v1363 = vadd.f32 0.0, %v1362
  %v1364 = vpop.f32.mrf.mxu0
  %v1365 = vadd.f32 0.0, %v1364
  %1366 = vmatmul.bf16.gmra.mxu0 %v1193
  %v1367 = vpop.f32.mrf.mxu0
  %v1368 = vadd.f32 0.0, %v1367
  %v1369 = vpop.f32.mrf.mxu0
  %v1370 = vadd.f32 0.0, %v1369
  %1371 = vmatmul.bf16.gmra.mxu0 %v1194
  %v1372 = vpop.f32.mrf.mxu0
  %v1373 = vadd.f32 0.0, %v1372
  %v1374 = vpop.f32.mrf.mxu0
  %v1375 = vadd.f32 0.0, %v1374
  %1376 = vmatmul.bf16.gmra.mxu0 %v1195
  %v1377 = vpop.f32.mrf.mxu0
  %v1378 = vadd.f32 0.0, %v1377
  %v1379 = vpop.f32.mrf.mxu0
  %v1380 = vadd.f32 0.0, %v1379
  %1381 = vdwg.mxu0
  %v1382 = vpack.c.bf16 %v1296, %v1294
  %v1383 = vpack.c.bf16 %v1345, %v1343
  %v1384 = vpack.c.bf16 %v1301, %v1299
  %v1385 = vpack.c.bf16 %v1350, %v1348
  %v1386 = vpack.c.bf16 %v1306, %v1304
  %v1387 = vpack.c.bf16 %v1355, %v1353
  %v1388 = vpack.c.bf16 %v1311, %v1309
  %v1389 = vpack.c.bf16 %v1360, %v1358
  %v1390 = vpack.c.bf16 %v1316, %v1314
  %v1391 = vpack.c.bf16 %v1365, %v1363
  %v1392 = vpack.c.bf16 %v1321, %v1319
  %v1393 = vpack.c.bf16 %v1370, %v1368
  %v1394 = vpack.c.bf16 %v1326, %v1324
  %v1395 = vpack.c.bf16 %v1375, %v1373
  %v1396 = vpack.c.bf16 %v1331, %v1329
  %v1397 = vpack.c.bf16 %v1380, %v1378
  %v1398 = vld [vmem:[%s9] sm:$0xf]
  %v1399 = vld [vmem:[%s9 + $0x4] sm:$0xf]
  %v1400 = vld [vmem:[%s9 + $0x8] sm:$0xf]
  %v1401 = vld [vmem:[%s9 + $0xc] sm:$0xf]
  %v1402 = vld [vmem:[%s9 + $0x10] sm:$0xf]
  %v1403 = vld [vmem:[%s9 + $0x14] sm:$0xf]
  %v1404 = vld [vmem:[%s9 + $0x18] sm:$0xf]
  %v1405 = vld [vmem:[%s9 + $0x1c] sm:$0xf]
  %v1406 = vld [vmem:[%s9 + $0x20] sm:$0xf]
  %v1407 = vld [vmem:[%s9 + $0x24] sm:$0xf]
  %v1408 = vld [vmem:[%s9 + $0x28] sm:$0xf]
  %v1409 = vld [vmem:[%s9 + $0x2c] sm:$0xf]
  %v1410 = vld [vmem:[%s9 + $0x30] sm:$0xf]
  %v1411 = vld [vmem:[%s9 + $0x34] sm:$0xf]
  %v1412 = vld [vmem:[%s9 + $0x38] sm:$0xf]
  %v1413 = vld [vmem:[%s9 + $0x3c] sm:$0xf]
  %v1414 = vld [vmem:[%s9 + $0x40] sm:$0xf]
  %v1415 = vld [vmem:[%s9 + $0x44] sm:$0xf]
  %v1416 = vld [vmem:[%s9 + $0x48] sm:$0xf]
  %v1417 = vld [vmem:[%s9 + $0x4c] sm:$0xf]
  %v1418 = vld [vmem:[%s9 + $0x50] sm:$0xf]
  %v1419 = vld [vmem:[%s9 + $0x54] sm:$0xf]
  %v1420 = vld [vmem:[%s9 + $0x58] sm:$0xf]
  %v1421 = vld [vmem:[%s9 + $0x5c] sm:$0xf]
  %v1422 = vld [vmem:[%s9 + $0x60] sm:$0xf]
  %v1423 = vld [vmem:[%s9 + $0x64] sm:$0xf]
  %v1424 = vld [vmem:[%s9 + $0x68] sm:$0xf]
  %v1425 = vld [vmem:[%s9 + $0x6c] sm:$0xf]
  %v1426 = vld [vmem:[%s9 + $0x70] sm:$0xf]
  %v1427 = vld [vmem:[%s9 + $0x74] sm:$0xf]
  %v1428 = vld [vmem:[%s9 + $0x78] sm:$0xf]
  %v1429 = vld [vmem:[%s9 + $0x7c] sm:$0xf]
  %v1430 = vld [vmem:[%s10] sm:$0x1]
  %v1432 = vperm.slane %v1430, 0
  %v1466 = vunpack.c.l.b16 %v1398
  %v1467 = vunpack.c.l.b16 %v1399
  %v1468 = vunpack.c.l.b16 %v1400
  %v1469 = vunpack.c.l.b16 %v1401
  %v1470 = vunpack.c.l.b16 %v1402
  %v1471 = vunpack.c.l.b16 %v1403
  %v1472 = vunpack.c.l.b16 %v1404
  %v1473 = vunpack.c.l.b16 %v1405
  %v1474 = vunpack.c.l.b16 %v1406
  %v1475 = vunpack.c.l.b16 %v1407
  %v1476 = vunpack.c.l.b16 %v1408
  %v1477 = vunpack.c.l.b16 %v1409
  %v1478 = vunpack.c.l.b16 %v1410
  %v1479 = vunpack.c.l.b16 %v1411
  %v1480 = vunpack.c.l.b16 %v1412
  %v1481 = vunpack.c.l.b16 %v1413
  %v1482 = vunpack.c.l.b16 %v1414
  %v1483 = vunpack.c.l.b16 %v1415
  %v1484 = vunpack.c.l.b16 %v1416
  %v1485 = vunpack.c.l.b16 %v1417
  %v1486 = vunpack.c.l.b16 %v1418
  %v1487 = vunpack.c.l.b16 %v1419
  %v1488 = vunpack.c.l.b16 %v1420
  %v1489 = vunpack.c.l.b16 %v1421
  %v1490 = vunpack.c.l.b16 %v1422
  %v1491 = vunpack.c.l.b16 %v1423
  %v1492 = vunpack.c.l.b16 %v1424
  %v1493 = vunpack.c.l.b16 %v1425
  %v1494 = vunpack.c.l.b16 %v1426
  %v1495 = vunpack.c.l.b16 %v1427
  %v1496 = vunpack.c.l.b16 %v1428
  %v1497 = vunpack.c.l.b16 %v1429
  %v1498 = vpack.c.b16 %v1467, %v1466
  %v1499 = vpack.c.b16 %v1469, %v1468
  %v1500 = vpack.c.b16 %v1471, %v1470
  %v1501 = vpack.c.b16 %v1473, %v1472
  %v1502 = vpack.c.b16 %v1475, %v1474
  %v1503 = vpack.c.b16 %v1477, %v1476
  %v1504 = vpack.c.b16 %v1479, %v1478
  %v1505 = vpack.c.b16 %v1481, %v1480
  %v1506 = vpack.c.b16 %v1483, %v1482
  %v1507 = vpack.c.b16 %v1485, %v1484
  %v1508 = vpack.c.b16 %v1487, %v1486
  %v1509 = vpack.c.b16 %v1489, %v1488
  %v1510 = vpack.c.b16 %v1491, %v1490
  %v1511 = vpack.c.b16 %v1493, %v1492
  %v1512 = vpack.c.b16 %v1495, %v1494
  %v1513 = vpack.c.b16 %v1497, %v1496
  %1530 = vmatpush.bf16.msra.mxu0 %v1505
  %1531 = vmatpush.bf16.msra.mxu0 %v1504
  %1532 = vmatpush.bf16.msra.mxu0 %v1503
  %1533 = vmatpush.bf16.msra.mxu0 %v1502
  %1534 = vmatpush.bf16.msra.mxu0 %v1501
  %1535 = vmatpush.bf16.msra.mxu0 %v1500
  %1536 = vmatpush.bf16.msra.mxu0 %v1499
  %1537 = vmatpush.bf16.msra.mxu0 %v1498
  %1538 = vmatmul.bf16.gmra.mxu0 %v1382
  %v1539 = vpop.f32.mrf.mxu0
  %v1540 = vadd.f32 %v1432, %v1539
  %v1541 = vpop.f32.mrf.mxu0
  %v1542 = vadd.f32 %v1432, %v1541
  %1543 = vmatmul.bf16.gmra.mxu0 %v1384
  %v1544 = vpop.f32.mrf.mxu0
  %v1545 = vadd.f32 %v1432, %v1544
  %v1546 = vpop.f32.mrf.mxu0
  %v1547 = vadd.f32 %v1432, %v1546
  %1548 = vmatmul.bf16.gmra.mxu0 %v1386
  %v1549 = vpop.f32.mrf.mxu0
  %v1550 = vadd.f32 %v1432, %v1549
  %v1551 = vpop.f32.mrf.mxu0
  %v1552 = vadd.f32 %v1432, %v1551
  %1553 = vmatmul.bf16.gmra.mxu0 %v1388
  %v1554 = vpop.f32.mrf.mxu0
  %v1555 = vadd.f32 %v1432, %v1554
  %v1556 = vpop.f32.mrf.mxu0
  %v1557 = vadd.f32 %v1432, %v1556
  %1558 = vmatmul.bf16.gmra.mxu0 %v1390
  %v1559 = vpop.f32.mrf.mxu0
  %v1560 = vadd.f32 %v1432, %v1559
  %v1561 = vpop.f32.mrf.mxu0
  %v1562 = vadd.f32 %v1432, %v1561
  %1563 = vmatmul.bf16.gmra.mxu0 %v1392
  %v1564 = vpop.f32.mrf.mxu0
  %v1565 = vadd.f32 %v1432, %v1564
  %v1566 = vpop.f32.mrf.mxu0
  %v1567 = vadd.f32 %v1432, %v1566
  %1568 = vmatmul.bf16.gmra.mxu0 %v1394
  %v1569 = vpop.f32.mrf.mxu0
  %v1570 = vadd.f32 %v1432, %v1569
  %v1571 = vpop.f32.mrf.mxu0
  %v1572 = vadd.f32 %v1432, %v1571
  %1573 = vmatmul.bf16.gmra.mxu0 %v1396
  %v1574 = vpop.f32.mrf.mxu0
  %v1575 = vadd.f32 %v1432, %v1574
  %v1576 = vpop.f32.mrf.mxu0
  %v1577 = vadd.f32 %v1432, %v1576
  %1578 = vdwg.mxu0
  %1579 = vmatpush.bf16.msra.mxu0 %v1513
  %1580 = vmatpush.bf16.msra.mxu0 %v1512
  %1581 = vmatpush.bf16.msra.mxu0 %v1511
  %1582 = vmatpush.bf16.msra.mxu0 %v1510
  %1583 = vmatpush.bf16.msra.mxu0 %v1509
  %1584 = vmatpush.bf16.msra.mxu0 %v1508
  %1585 = vmatpush.bf16.msra.mxu0 %v1507
  %1586 = vmatpush.bf16.msra.mxu0 %v1506
  %1587 = vmatmul.bf16.gmra.mxu0 %v1383
  %v1588 = vpop.f32.mrf.mxu0
  %v1589 = vadd.f32 %v1540, %v1588
  %v1590 = vpop.f32.mrf.mxu0
  %v1591 = vadd.f32 %v1542, %v1590
  %1592 = vmatmul.bf16.gmra.mxu0 %v1385
  %v1593 = vpop.f32.mrf.mxu0
  %v1594 = vadd.f32 %v1545, %v1593
  %v1595 = vpop.f32.mrf.mxu0
  %v1596 = vadd.f32 %v1547, %v1595
  %1597 = vmatmul.bf16.gmra.mxu0 %v1387
  %v1598 = vpop.f32.mrf.mxu0
  %v1599 = vadd.f32 %v1550, %v1598
  %v1600 = vpop.f32.mrf.mxu0
  %v1601 = vadd.f32 %v1552, %v1600
  %1602 = vmatmul.bf16.gmra.mxu0 %v1389
  %v1603 = vpop.f32.mrf.mxu0
  %v1604 = vadd.f32 %v1555, %v1603
  %v1605 = vpop.f32.mrf.mxu0
  %v1606 = vadd.f32 %v1557, %v1605
  %1607 = vmatmul.bf16.gmra.mxu0 %v1391
  %v1608 = vpop.f32.mrf.mxu0
  %v1609 = vadd.f32 %v1560, %v1608
  %v1610 = vpop.f32.mrf.mxu0
  %v1611 = vadd.f32 %v1562, %v1610
  %1612 = vmatmul.bf16.gmra.mxu0 %v1393
  %v1613 = vpop.f32.mrf.mxu0
  %v1614 = vadd.f32 %v1565, %v1613
  %v1615 = vpop.f32.mrf.mxu0
  %v1616 = vadd.f32 %v1567, %v1615
  %1617 = vmatmul.bf16.gmra.mxu0 %v1395
  %v1618 = vpop.f32.mrf.mxu0
  %v1619 = vadd.f32 %v1570, %v1618
  %v1620 = vpop.f32.mrf.mxu0
  %v1621 = vadd.f32 %v1572, %v1620
  %1622 = vmatmul.bf16.gmra.mxu0 %v1397
  %v1623 = vpop.f32.mrf.mxu0
  %v1624 = vadd.f32 %v1575, %v1623
  %v1625 = vpop.f32.mrf.mxu0
  %v1626 = vadd.f32 %v1577, %v1625
  %1627 = vdwg.mxu0
  %v1628 = vmax.f32 %v1589, 0.0
  %v1629 = vmax.f32 %v1591, 0.0
  %v1630 = vmax.f32 %v1594, 0.0
  %v1631 = vmax.f32 %v1596, 0.0
  %v1632 = vmax.f32 %v1599, 0.0
  %v1633 = vmax.f32 %v1601, 0.0
  %v1634 = vmax.f32 %v1604, 0.0
  %v1635 = vmax.f32 %v1606, 0.0
  %v1636 = vmax.f32 %v1609, 0.0
  %v1637 = vmax.f32 %v1611, 0.0
  %v1638 = vmax.f32 %v1614, 0.0
  %v1639 = vmax.f32 %v1616, 0.0
  %v1640 = vmax.f32 %v1619, 0.0
  %v1641 = vmax.f32 %v1621, 0.0
  %v1642 = vmax.f32 %v1624, 0.0
  %v1643 = vmax.f32 %v1626, 0.0
  %v1644 = vpack.c.bf16 %v1629, %v1628
  %v1645 = vpack.c.bf16 %v1631, %v1630
  %v1646 = vpack.c.bf16 %v1633, %v1632
  %v1647 = vpack.c.bf16 %v1635, %v1634
  %v1648 = vpack.c.bf16 %v1637, %v1636
  %v1649 = vpack.c.bf16 %v1639, %v1638
  %v1650 = vpack.c.bf16 %v1641, %v1640
  %v1651 = vpack.c.bf16 %v1643, %v1642
  %v1652 = vld [vmem:[%s11] sm:$0xf]
  %v1653 = vld [vmem:[%s11 + $0x4] sm:$0xf]
  %v1654 = vld [vmem:[%s11 + $0x8] sm:$0xf]
  %v1655 = vld [vmem:[%s11 + $0xc] sm:$0xf]
  %v1656 = vld [vmem:[%s11 + $0x10] sm:$0xf]
  %v1657 = vld [vmem:[%s11 + $0x14] sm:$0xf]
  %v1658 = vld [vmem:[%s11 + $0x18] sm:$0xf]
  %v1659 = vld [vmem:[%s11 + $0x1c] sm:$0xf]
  %v1660 = vld [vmem:[%s11 + $0x20] sm:$0xf]
  %v1661 = vld [vmem:[%s11 + $0x24] sm:$0xf]
  %v1662 = vld [vmem:[%s11 + $0x28] sm:$0xf]
  %v1663 = vld [vmem:[%s11 + $0x2c] sm:$0xf]
  %v1664 = vld [vmem:[%s11 + $0x30] sm:$0xf]
  %v1665 = vld [vmem:[%s11 + $0x34] sm:$0xf]
  %v1666 = vld [vmem:[%s11 + $0x38] sm:$0xf]
  %v1667 = vld [vmem:[%s11 + $0x3c] sm:$0xf]
  %v1668 = vld [vmem:[%s12] sm:$0x1]
  %v1670 = vperm.slane %v1668, 0
  %v1688 = vunpack.c.l.b16 %v1652
  %v1689 = vunpack.c.l.b16 %v1653
  %v1690 = vunpack.c.l.b16 %v1654
  %v1691 = vunpack.c.l.b16 %v1655
  %v1692 = vunpack.c.l.b16 %v1656
  %v1693 = vunpack.c.l.b16 %v1657
  %v1694 = vunpack.c.l.b16 %v1658
  %v1695 = vunpack.c.l.b16 %v1659
  %v1696 = vunpack.c.l.b16 %v1660
  %v1697 = vunpack.c.l.b16 %v1661
  %v1698 = vunpack.c.l.b16 %v1662
  %v1699 = vunpack.c.l.b16 %v1663
  %v1700 = vunpack.c.l.b16 %v1664
  %v1701 = vunpack.c.l.b16 %v1665
  %v1702 = vunpack.c.l.b16 %v1666
  %v1703 = vunpack.c.l.b16 %v1667
  %v1704 = vpack.c.b16 %v1689, %v1688
  %v1705 = vpack.c.b16 %v1691, %v1690
  %v1706 = vpack.c.b16 %v1693, %v1692
  %v1707 = vpack.c.b16 %v1695, %v1694
  %v1708 = vpack.c.b16 %v1697, %v1696
  %v1709 = vpack.c.b16 %v1699, %v1698
  %v1710 = vpack.c.b16 %v1701, %v1700
  %v1711 = vpack.c.b16 %v1703, %v1702
  %1720 = vmatpush.bf16.msra.mxu0 %v1711
  %1721 = vmatpush.bf16.msra.mxu0 %v1710
  %1722 = vmatpush.bf16.msra.mxu0 %v1709
  %1723 = vmatpush.bf16.msra.mxu0 %v1708
  %1724 = vmatpush.bf16.msra.mxu0 %v1707
  %1725 = vmatpush.bf16.msra.mxu0 %v1706
  %1726 = vmatpush.bf16.msra.mxu0 %v1705
  %1727 = vmatpush.bf16.msra.mxu0 %v1704
  %1728 = vmatmul.bf16.gmra.mxu0 %v1644
  %v1729 = vpop.f32.mrf.mxu0
  %v1730 = vadd.f32 %v1670, %v1729
  %v1731 = vpop.f32.mrf.mxu0
  %v1732 = vadd.f32 %v1670, %v1731
  %1733 = vmatmul.bf16.gmra.mxu0 %v1645
  %v1734 = vpop.f32.mrf.mxu0
  %v1735 = vadd.f32 %v1670, %v1734
  %v1736 = vpop.f32.mrf.mxu0
  %v1737 = vadd.f32 %v1670, %v1736
  %1738 = vmatmul.bf16.gmra.mxu0 %v1646
  %v1739 = vpop.f32.mrf.mxu0
  %v1740 = vadd.f32 %v1670, %v1739
  %v1741 = vpop.f32.mrf.mxu0
  %v1742 = vadd.f32 %v1670, %v1741
  %1743 = vmatmul.bf16.gmra.mxu0 %v1647
  %v1744 = vpop.f32.mrf.mxu0
  %v1745 = vadd.f32 %v1670, %v1744
  %v1746 = vpop.f32.mrf.mxu0
  %v1747 = vadd.f32 %v1670, %v1746
  %1748 = vmatmul.bf16.gmra.mxu0 %v1648
  %v1749 = vpop.f32.mrf.mxu0
  %v1750 = vadd.f32 %v1670, %v1749
  %v1751 = vpop.f32.mrf.mxu0
  %v1752 = vadd.f32 %v1670, %v1751
  %1753 = vmatmul.bf16.gmra.mxu0 %v1649
  %v1754 = vpop.f32.mrf.mxu0
  %v1755 = vadd.f32 %v1670, %v1754
  %v1756 = vpop.f32.mrf.mxu0
  %v1757 = vadd.f32 %v1670, %v1756
  %1758 = vmatmul.bf16.gmra.mxu0 %v1650
  %v1759 = vpop.f32.mrf.mxu0
  %v1760 = vadd.f32 %v1670, %v1759
  %v1761 = vpop.f32.mrf.mxu0
  %v1762 = vadd.f32 %v1670, %v1761
  %1763 = vmatmul.bf16.gmra.mxu0 %v1651
  %v1764 = vpop.f32.mrf.mxu0
  %v1765 = vadd.f32 %v1670, %v1764
  %v1766 = vpop.f32.mrf.mxu0
  %v1767 = vadd.f32 %v1670, %v1766
  %1768 = vdwg.mxu0
  %v1769 = vmax.f32 %v1730, 0.0
  %v1770 = vmax.f32 %v1732, 0.0
  %v1771 = vmax.f32 %v1735, 0.0
  %v1772 = vmax.f32 %v1737, 0.0
  %v1773 = vmax.f32 %v1740, 0.0
  %v1774 = vmax.f32 %v1742, 0.0
  %v1775 = vmax.f32 %v1745, 0.0
  %v1776 = vmax.f32 %v1747, 0.0
  %v1777 = vmax.f32 %v1750, 0.0
  %v1778 = vmax.f32 %v1752, 0.0
  %v1779 = vmax.f32 %v1755, 0.0
  %v1780 = vmax.f32 %v1757, 0.0
  %v1781 = vmax.f32 %v1760, 0.0
  %v1782 = vmax.f32 %v1762, 0.0
  %v1783 = vmax.f32 %v1765, 0.0
  %v1784 = vmax.f32 %v1767, 0.0
  %v1785 = vld [vmem:[%s13] sm:$0x1]
  %v1787 = vperm.slane %v1785, 0
  %v1789 = vmul.f32 %v1769, %v1787
  %v1790 = vmul.f32 %v1770, %v1787
  %v1791 = vmul.f32 %v1771, %v1787
  %v1792 = vmul.f32 %v1772, %v1787
  %v1793 = vmul.f32 %v1773, %v1787
  %v1794 = vmul.f32 %v1774, %v1787
  %v1795 = vmul.f32 %v1775, %v1787
  %v1796 = vmul.f32 %v1776, %v1787
  %v1797 = vmul.f32 %v1777, %v1787
  %v1798 = vmul.f32 %v1778, %v1787
  %v1799 = vmul.f32 %v1779, %v1787
  %v1800 = vmul.f32 %v1780, %v1787
  %v1801 = vmul.f32 %v1781, %v1787
  %v1802 = vmul.f32 %v1782, %v1787
  %v1803 = vmul.f32 %v1783, %v1787
  %v1804 = vmul.f32 %v1784, %v1787
  %v1805 = vld [vmem:[%s14] sm:$0x1]
  %v1807 = vperm.slane %v1805, 0
  %v1809 = vadd.f32 %v1789, %v1807
  %v1810 = vadd.f32 %v1790, %v1807
  %v1811 = vadd.f32 %v1791, %v1807
  %v1812 = vadd.f32 %v1792, %v1807
  %v1813 = vadd.f32 %v1793, %v1807
  %v1814 = vadd.f32 %v1794, %v1807
  %v1815 = vadd.f32 %v1795, %v1807
  %v1816 = vadd.f32 %v1796, %v1807
  %v1817 = vadd.f32 %v1797, %v1807
  %v1818 = vadd.f32 %v1798, %v1807
  %v1819 = vadd.f32 %v1799, %v1807
  %v1820 = vadd.f32 %v1800, %v1807
  %v1821 = vadd.f32 %v1801, %v1807
  %v1822 = vadd.f32 %v1802, %v1807
  %v1823 = vadd.f32 %v1803, %v1807
  %v1824 = vadd.f32 %v1804, %v1807
  %v1825 = vpack.c.bf16 %v1809, %v1809
  %v1826 = vpack.c.bf16 %v1810, %v1810
  %v1827 = vpack.c.bf16 %v1811, %v1811
  %v1828 = vpack.c.bf16 %v1812, %v1812
  %v1829 = vpack.c.bf16 %v1813, %v1813
  %v1830 = vpack.c.bf16 %v1814, %v1814
  %v1831 = vpack.c.bf16 %v1815, %v1815
  %v1832 = vpack.c.bf16 %v1816, %v1816
  %v1833 = vpack.c.bf16 %v1817, %v1817
  %v1834 = vpack.c.bf16 %v1818, %v1818
  %v1835 = vpack.c.bf16 %v1819, %v1819
  %v1836 = vpack.c.bf16 %v1820, %v1820
  %v1837 = vpack.c.bf16 %v1821, %v1821
  %v1838 = vpack.c.bf16 %v1822, %v1822
  %v1839 = vpack.c.bf16 %v1823, %v1823
  %v1840 = vpack.c.bf16 %v1824, %v1824
  %1841 = vst [vmem:[#allocation3] sm:$0xf] %v1825
  %1842 = vst [vmem:[#allocation3 + $0x4] sm:$0xf] %v1826
  %1843 = vst [vmem:[#allocation3 + $0x8] sm:$0xf] %v1827
  %1844 = vst [vmem:[#allocation3 + $0xc] sm:$0xf] %v1828
  %1845 = vst [vmem:[#allocation3 + $0x10] sm:$0xf] %v1829
  %1846 = vst [vmem:[#allocation3 + $0x14] sm:$0xf] %v1830
  %1847 = vst [vmem:[#allocation3 + $0x18] sm:$0xf] %v1831
  %1848 = vst [vmem:[#allocation3 + $0x1c] sm:$0xf] %v1832
  %1849 = vst [vmem:[#allocation3 + $0x20] sm:$0xf] %v1833
  %1850 = vst [vmem:[#allocation3 + $0x24] sm:$0xf] %v1834
  %1851 = vst [vmem:[#allocation3 + $0x28] sm:$0xf] %v1835
  %1852 = vst [vmem:[#allocation3 + $0x2c] sm:$0xf] %v1836
  %1853 = vst [vmem:[#allocation3 + $0x30] sm:$0xf] %v1837
  %1854 = vst [vmem:[#allocation3 + $0x34] sm:$0xf] %v1838
  %1855 = vst [vmem:[#allocation3 + $0x38] sm:$0xf] %v1839
  %1856 = vst [vmem:[#allocation3 + $0x3c] sm:$0xf] %v1840
  // Predicated region
  $region144: #{ginconvnet_forward.1} parent=0 // pred_check
    _
  $region145: #{ginconvnet_forward.1} parent=0 // pred_check_branch
    %1858 = sbr.rel (0) target = $region147
  $region146: #{ginconvnet_forward.1} parent=0 // pred_region
    loop: start=0, step=1, limit=1
    $region148: #{ginconvnet_forward.1} parent=146 // loop_pre_header
      _
    $region149: #{ginconvnet_forward.1} parent=146 // loop_header
      %s1860 = sphi 0, %s1864
      %p1861 = scmp.ge.s32.totalorder %s1860, 1
      %s1865 = sphi %s0, %s0
      %s1866 = sphi [#allocation5], [#allocation5]
    $region150: #{ginconvnet_forward.1} parent=146 // loop_header_branch
      %1863 = sbr.rel (%p1861) target = $region154
    $region151: #{ginconvnet_forward.1} parent=146 // loop_body
      %v1867 = vld [vmem:[%s1865] sm:$0xff]
      %1868 = vst [vmem:[%s1866] sm:$0xff] %v1867
      %v1869 = vld [vmem:[%s1865 + $0x8] sm:$0xff]
      %1870 = vst [vmem:[%s1866 + $0x8] sm:$0xff] %v1869
      %v1871 = vld [vmem:[%s1865 + $0x10] sm:$0xff]
      %1872 = vst [vmem:[%s1866 + $0x10] sm:$0xff] %v1871
      %v1873 = vld [vmem:[%s1865 + $0x18] sm:$0xff]
      %1874 = vst [vmem:[%s1866 + $0x18] sm:$0xff] %v1873
      %v1875 = vld [vmem:[%s1865 + $0x20] sm:$0xff]
      %1876 = vst [vmem:[%s1866 + $0x20] sm:$0xff] %v1875
      %v1877 = vld [vmem:[%s1865 + $0x28] sm:$0xff]
      %1878 = vst [vmem:[%s1866 + $0x28] sm:$0xff] %v1877
      %v1879 = vld [vmem:[%s1865 + $0x30] sm:$0xff]
      %1880 = vst [vmem:[%s1866 + $0x30] sm:$0xff] %v1879
      %v1881 = vld [vmem:[%s1865 + $0x38] sm:$0xff]
      %1882 = vst [vmem:[%s1866 + $0x38] sm:$0xff] %v1881
    $region152: #{ginconvnet_forward.1} parent=146 // loop_footer
      %s1864 = sadd.s32 1, %s1860
    $region153: #{ginconvnet_forward.1} parent=146 // loop_footer_branch
      %1859 = sbr.rel target = $region149
    $region154: #{ginconvnet_forward.1} parent=146 // loop_exit
      _
  $region147: #{ginconvnet_forward.1} parent=0 // pred_fallthru
    _
  // Predicated region
  $region155: #{ginconvnet_forward.1} parent=0 // pred_check
    _
  $region156: #{ginconvnet_forward.1} parent=0 // pred_check_branch
    %1884 = sbr.rel target = $region158
  $region157: #{ginconvnet_forward.1} parent=0 // pred_region
    _
  $region158: #{ginconvnet_forward.1} parent=0 // pred_fallthru
    _
  // Predicated region
  $region159: #{ginconvnet_forward.1} parent=0 // pred_check
    _
  $region160: #{ginconvnet_forward.1} parent=0 // pred_check_branch
    %1887 = sbr.rel (0) target = $region162
  $region161: #{ginconvnet_forward.1} parent=0 // pred_region
    %1888 = vsyncadd [#allocation6], 1024
  $region162: #{ginconvnet_forward.1} parent=0 // pred_fallthru
    _
  %s1889 = sshll.u32 %s117, 4
  %1890 = dma.done [#allocation6], %s1889
  %v1891 = vld [vmem:[#allocation5] sm:$0xf]
  %v1892 = vld [vmem:[#allocation5 + $0x4] sm:$0xf]
  %v1893 = vld [vmem:[#allocation5 + $0x8] sm:$0xf]
  %v1894 = vld [vmem:[#allocation5 + $0xc] sm:$0xf]
  %v1895 = vld [vmem:[#allocation5 + $0x10] sm:$0xf]
  %v1896 = vld [vmem:[#allocation5 + $0x14] sm:$0xf]
  %v1897 = vld [vmem:[#allocation5 + $0x18] sm:$0xf]
  %v1898 = vld [vmem:[#allocation5 + $0x1c] sm:$0xf]
  %v1899 = vld [vmem:[#allocation5 + $0x20] sm:$0xf]
  %v1900 = vld [vmem:[#allocation5 + $0x24] sm:$0xf]
  %v1901 = vld [vmem:[#allocation5 + $0x28] sm:$0xf]
  %v1902 = vld [vmem:[#allocation5 + $0x2c] sm:$0xf]
  %v1903 = vld [vmem:[#allocation5 + $0x30] sm:$0xf]
  %v1904 = vld [vmem:[#allocation5 + $0x34] sm:$0xf]
  %v1905 = vld [vmem:[#allocation5 + $0x38] sm:$0xf]
  %v1906 = vld [vmem:[#allocation5 + $0x3c] sm:$0xf]
  %v1907 = vld [vmem:[#allocation3] sm:$0xf]
  %v1908 = vld [vmem:[#allocation3 + $0x4] sm:$0xf]
  %v1909 = vld [vmem:[#allocation3 + $0x8] sm:$0xf]
  %v1910 = vld [vmem:[#allocation3 + $0xc] sm:$0xf]
  %v1911 = vld [vmem:[#allocation3 + $0x10] sm:$0xf]
  %v1912 = vld [vmem:[#allocation3 + $0x14] sm:$0xf]
  %v1913 = vld [vmem:[#allocation3 + $0x18] sm:$0xf]
  %v1914 = vld [vmem:[#allocation3 + $0x1c] sm:$0xf]
  %v1915 = vld [vmem:[#allocation3 + $0x20] sm:$0xf]
  %v1916 = vld [vmem:[#allocation3 + $0x24] sm:$0xf]
  %v1917 = vld [vmem:[#allocation3 + $0x28] sm:$0xf]
  %v1918 = vld [vmem:[#allocation3 + $0x2c] sm:$0xf]
  %v1919 = vld [vmem:[#allocation3 + $0x30] sm:$0xf]
  %v1920 = vld [vmem:[#allocation3 + $0x34] sm:$0xf]
  %v1921 = vld [vmem:[#allocation3 + $0x38] sm:$0xf]
  %v1922 = vld [vmem:[#allocation3 + $0x3c] sm:$0xf]
  %v1939 = vunpack.c.l.b16 %v1891
  %v1940 = vunpack.c.l.b16 %v1892
  %v1941 = vunpack.c.l.b16 %v1893
  %v1942 = vunpack.c.l.b16 %v1894
  %v1943 = vunpack.c.l.b16 %v1895
  %v1944 = vunpack.c.l.b16 %v1896
  %v1945 = vunpack.c.l.b16 %v1897
  %v1946 = vunpack.c.l.b16 %v1898
  %v1947 = vunpack.c.l.b16 %v1899
  %v1948 = vunpack.c.l.b16 %v1900
  %v1949 = vunpack.c.l.b16 %v1901
  %v1950 = vunpack.c.l.b16 %v1902
  %v1951 = vunpack.c.l.b16 %v1903
  %v1952 = vunpack.c.l.b16 %v1904
  %v1953 = vunpack.c.l.b16 %v1905
  %v1954 = vunpack.c.l.b16 %v1906
  %v1955 = vpack.c.b16 %v1940, %v1939
  %v1956 = vpack.c.b16 %v1942, %v1941
  %v1957 = vpack.c.b16 %v1944, %v1943
  %v1958 = vpack.c.b16 %v1946, %v1945
  %v1959 = vpack.c.b16 %v1948, %v1947
  %v1960 = vpack.c.b16 %v1950, %v1949
  %v1961 = vpack.c.b16 %v1952, %v1951
  %v1962 = vpack.c.b16 %v1954, %v1953
  %v1987 = vunpack.c.l.b16 %v1907
  %v1988 = vunpack.c.l.b16 %v1908
  %v1989 = vunpack.c.l.b16 %v1909
  %v1990 = vunpack.c.l.b16 %v1910
  %v1991 = vunpack.c.l.b16 %v1911
  %v1992 = vunpack.c.l.b16 %v1912
  %v1993 = vunpack.c.l.b16 %v1913
  %v1994 = vunpack.c.l.b16 %v1914
  %v1995 = vunpack.c.l.b16 %v1915
  %v1996 = vunpack.c.l.b16 %v1916
  %v1997 = vunpack.c.l.b16 %v1917
  %v1998 = vunpack.c.l.b16 %v1918
  %v1999 = vunpack.c.l.b16 %v1919
  %v2000 = vunpack.c.l.b16 %v1920
  %v2001 = vunpack.c.l.b16 %v1921
  %v2002 = vunpack.c.l.b16 %v1922
  %v2003 = vpack.c.b16 %v1988, %v1987
  %v2004 = vpack.c.b16 %v1990, %v1989
  %v2005 = vpack.c.b16 %v1992, %v1991
  %v2006 = vpack.c.b16 %v1994, %v1993
  %v2007 = vpack.c.b16 %v1996, %v1995
  %v2008 = vpack.c.b16 %v1998, %v1997
  %v2009 = vpack.c.b16 %v2000, %v1999
  %v2010 = vpack.c.b16 %v2002, %v2001
  %2019 = vmatpush.bf16.msra.mxu0 %v2010
  %2020 = vmatpush.bf16.msra.mxu0 %v2009
  %2021 = vmatpush.bf16.msra.mxu0 %v2008
  %2022 = vmatpush.bf16.msra.mxu0 %v2007
  %2023 = vmatpush.bf16.msra.mxu0 %v2006
  %2024 = vmatpush.bf16.msra.mxu0 %v2005
  %2025 = vmatpush.bf16.msra.mxu0 %v2004
  %2026 = vmatpush.bf16.msra.mxu0 %v2003
  %2027 = vmatmul.bf16.gmra.mxu0 %v1955
  %v2028 = vpop.f32.mrf.mxu0
  %v2029 = vadd.f32 0.0, %v2028
  %v2030 = vpop.f32.mrf.mxu0
  %v2031 = vadd.f32 0.0, %v2030
  %2032 = vmatmul.bf16.gmra.mxu0 %v1956
  %v2033 = vpop.f32.mrf.mxu0
  %v2034 = vadd.f32 0.0, %v2033
  %v2035 = vpop.f32.mrf.mxu0
  %v2036 = vadd.f32 0.0, %v2035
  %2037 = vmatmul.bf16.gmra.mxu0 %v1957
  %v2038 = vpop.f32.mrf.mxu0
  %v2039 = vadd.f32 0.0, %v2038
  %v2040 = vpop.f32.mrf.mxu0
  %v2041 = vadd.f32 0.0, %v2040
  %2042 = vmatmul.bf16.gmra.mxu0 %v1958
  %v2043 = vpop.f32.mrf.mxu0
  %v2044 = vadd.f32 0.0, %v2043
  %v2045 = vpop.f32.mrf.mxu0
  %v2046 = vadd.f32 0.0, %v2045
  %2047 = vmatmul.bf16.gmra.mxu0 %v1959
  %v2048 = vpop.f32.mrf.mxu0
  %v2049 = vadd.f32 0.0, %v2048
  %v2050 = vpop.f32.mrf.mxu0
  %v2051 = vadd.f32 0.0, %v2050
  %2052 = vmatmul.bf16.gmra.mxu0 %v1960
  %v2053 = vpop.f32.mrf.mxu0
  %v2054 = vadd.f32 0.0, %v2053
  %v2055 = vpop.f32.mrf.mxu0
  %v2056 = vadd.f32 0.0, %v2055
  %2057 = vmatmul.bf16.gmra.mxu0 %v1961
  %v2058 = vpop.f32.mrf.mxu0
  %v2059 = vadd.f32 0.0, %v2058
  %v2060 = vpop.f32.mrf.mxu0
  %v2061 = vadd.f32 0.0, %v2060
  %2062 = vmatmul.bf16.gmra.mxu0 %v1962
  %v2063 = vpop.f32.mrf.mxu0
  %v2064 = vadd.f32 0.0, %v2063
  %v2065 = vpop.f32.mrf.mxu0
  %v2066 = vadd.f32 0.0, %v2065
  %2067 = vdwg.mxu0
  %v2068 = vpack.c.bf16 %v2031, %v2029
  %v2069 = vpack.c.bf16 %v2036, %v2034
  %v2070 = vpack.c.bf16 %v2041, %v2039
  %v2071 = vpack.c.bf16 %v2046, %v2044
  %v2072 = vpack.c.bf16 %v2051, %v2049
  %v2073 = vpack.c.bf16 %v2056, %v2054
  %v2074 = vpack.c.bf16 %v2061, %v2059
  %v2075 = vpack.c.bf16 %v2066, %v2064
  %v2076 = vld [vmem:[%s15] sm:$0xf]
  %v2077 = vld [vmem:[%s15 + $0x4] sm:$0xf]
  %v2078 = vld [vmem:[%s15 + $0x8] sm:$0xf]
  %v2079 = vld [vmem:[%s15 + $0xc] sm:$0xf]
  %v2080 = vld [vmem:[%s15 + $0x10] sm:$0xf]
  %v2081 = vld [vmem:[%s15 + $0x14] sm:$0xf]
  %v2082 = vld [vmem:[%s15 + $0x18] sm:$0xf]
  %v2083 = vld [vmem:[%s15 + $0x1c] sm:$0xf]
  %v2084 = vld [vmem:[%s15 + $0x20] sm:$0xf]
  %v2085 = vld [vmem:[%s15 + $0x24] sm:$0xf]
  %v2086 = vld [vmem:[%s15 + $0x28] sm:$0xf]
  %v2087 = vld [vmem:[%s15 + $0x2c] sm:$0xf]
  %v2088 = vld [vmem:[%s15 + $0x30] sm:$0xf]
  %v2089 = vld [vmem:[%s15 + $0x34] sm:$0xf]
  %v2090 = vld [vmem:[%s15 + $0x38] sm:$0xf]
  %v2091 = vld [vmem:[%s15 + $0x3c] sm:$0xf]
  %v2092 = vld [vmem:[%s16] sm:$0x1]
  %v2094 = vperm.slane %v2092, 0
  %v2112 = vunpack.c.l.b16 %v2076
  %v2113 = vunpack.c.l.b16 %v2077
  %v2114 = vunpack.c.l.b16 %v2078
  %v2115 = vunpack.c.l.b16 %v2079
  %v2116 = vunpack.c.l.b16 %v2080
  %v2117 = vunpack.c.l.b16 %v2081
  %v2118 = vunpack.c.l.b16 %v2082
  %v2119 = vunpack.c.l.b16 %v2083
  %v2120 = vunpack.c.l.b16 %v2084
  %v2121 = vunpack.c.l.b16 %v2085
  %v2122 = vunpack.c.l.b16 %v2086
  %v2123 = vunpack.c.l.b16 %v2087
  %v2124 = vunpack.c.l.b16 %v2088
  %v2125 = vunpack.c.l.b16 %v2089
  %v2126 = vunpack.c.l.b16 %v2090
  %v2127 = vunpack.c.l.b16 %v2091
  %v2128 = vpack.c.b16 %v2113, %v2112
  %v2129 = vpack.c.b16 %v2115, %v2114
  %v2130 = vpack.c.b16 %v2117, %v2116
  %v2131 = vpack.c.b16 %v2119, %v2118
  %v2132 = vpack.c.b16 %v2121, %v2120
  %v2133 = vpack.c.b16 %v2123, %v2122
  %v2134 = vpack.c.b16 %v2125, %v2124
  %v2135 = vpack.c.b16 %v2127, %v2126
  %2144 = vmatpush.bf16.msra.mxu0 %v2135
  %2145 = vmatpush.bf16.msra.mxu0 %v2134
  %2146 = vmatpush.bf16.msra.mxu0 %v2133
  %2147 = vmatpush.bf16.msra.mxu0 %v2132
  %2148 = vmatpush.bf16.msra.mxu0 %v2131
  %2149 = vmatpush.bf16.msra.mxu0 %v2130
  %2150 = vmatpush.bf16.msra.mxu0 %v2129
  %2151 = vmatpush.bf16.msra.mxu0 %v2128
  %2152 = vmatmul.bf16.gmra.mxu0 %v2068
  %v2153 = vpop.f32.mrf.mxu0
  %v2154 = vadd.f32 %v2094, %v2153
  %v2155 = vpop.f32.mrf.mxu0
  %v2156 = vadd.f32 %v2094, %v2155
  %2157 = vmatmul.bf16.gmra.mxu0 %v2069
  %v2158 = vpop.f32.mrf.mxu0
  %v2159 = vadd.f32 %v2094, %v2158
  %v2160 = vpop.f32.mrf.mxu0
  %v2161 = vadd.f32 %v2094, %v2160
  %2162 = vmatmul.bf16.gmra.mxu0 %v2070
  %v2163 = vpop.f32.mrf.mxu0
  %v2164 = vadd.f32 %v2094, %v2163
  %v2165 = vpop.f32.mrf.mxu0
  %v2166 = vadd.f32 %v2094, %v2165
  %2167 = vmatmul.bf16.gmra.mxu0 %v2071
  %v2168 = vpop.f32.mrf.mxu0
  %v2169 = vadd.f32 %v2094, %v2168
  %v2170 = vpop.f32.mrf.mxu0
  %v2171 = vadd.f32 %v2094, %v2170
  %2172 = vmatmul.bf16.gmra.mxu0 %v2072
  %v2173 = vpop.f32.mrf.mxu0
  %v2174 = vadd.f32 %v2094, %v2173
  %v2175 = vpop.f32.mrf.mxu0
  %v2176 = vadd.f32 %v2094, %v2175
  %2177 = vmatmul.bf16.gmra.mxu0 %v2073
  %v2178 = vpop.f32.mrf.mxu0
  %v2179 = vadd.f32 %v2094, %v2178
  %v2180 = vpop.f32.mrf.mxu0
  %v2181 = vadd.f32 %v2094, %v2180
  %2182 = vmatmul.bf16.gmra.mxu0 %v2074
  %v2183 = vpop.f32.mrf.mxu0
  %v2184 = vadd.f32 %v2094, %v2183
  %v2185 = vpop.f32.mrf.mxu0
  %v2186 = vadd.f32 %v2094, %v2185
  %2187 = vmatmul.bf16.gmra.mxu0 %v2075
  %v2188 = vpop.f32.mrf.mxu0
  %v2189 = vadd.f32 %v2094, %v2188
  %v2190 = vpop.f32.mrf.mxu0
  %v2191 = vadd.f32 %v2094, %v2190
  %2192 = vdwg.mxu0
  %v2193 = vmax.f32 %v2154, 0.0
  %v2194 = vmax.f32 %v2156, 0.0
  %v2195 = vmax.f32 %v2159, 0.0
  %v2196 = vmax.f32 %v2161, 0.0
  %v2197 = vmax.f32 %v2164, 0.0
  %v2198 = vmax.f32 %v2166, 0.0
  %v2199 = vmax.f32 %v2169, 0.0
  %v2200 = vmax.f32 %v2171, 0.0
  %v2201 = vmax.f32 %v2174, 0.0
  %v2202 = vmax.f32 %v2176, 0.0
  %v2203 = vmax.f32 %v2179, 0.0
  %v2204 = vmax.f32 %v2181, 0.0
  %v2205 = vmax.f32 %v2184, 0.0
  %v2206 = vmax.f32 %v2186, 0.0
  %v2207 = vmax.f32 %v2189, 0.0
  %v2208 = vmax.f32 %v2191, 0.0
  %v2209 = vpack.c.bf16 %v2194, %v2193
  %v2210 = vpack.c.bf16 %v2196, %v2195
  %v2211 = vpack.c.bf16 %v2198, %v2197
  %v2212 = vpack.c.bf16 %v2200, %v2199
  %v2213 = vpack.c.bf16 %v2202, %v2201
  %v2214 = vpack.c.bf16 %v2204, %v2203
  %v2215 = vpack.c.bf16 %v2206, %v2205
  %v2216 = vpack.c.bf16 %v2208, %v2207
  %v2217 = vld [vmem:[%s17] sm:$0xf]
  %v2218 = vld [vmem:[%s17 + $0x4] sm:$0xf]
  %v2219 = vld [vmem:[%s17 + $0x8] sm:$0xf]
  %v2220 = vld [vmem:[%s17 + $0xc] sm:$0xf]
  %v2221 = vld [vmem:[%s17 + $0x10] sm:$0xf]
  %v2222 = vld [vmem:[%s17 + $0x14] sm:$0xf]
  %v2223 = vld [vmem:[%s17 + $0x18] sm:$0xf]
  %v2224 = vld [vmem:[%s17 + $0x1c] sm:$0xf]
  %v2225 = vld [vmem:[%s17 + $0x20] sm:$0xf]
  %v2226 = vld [vmem:[%s17 + $0x24] sm:$0xf]
  %v2227 = vld [vmem:[%s17 + $0x28] sm:$0xf]
  %v2228 = vld [vmem:[%s17 + $0x2c] sm:$0xf]
  %v2229 = vld [vmem:[%s17 + $0x30] sm:$0xf]
  %v2230 = vld [vmem:[%s17 + $0x34] sm:$0xf]
  %v2231 = vld [vmem:[%s17 + $0x38] sm:$0xf]
  %v2232 = vld [vmem:[%s17 + $0x3c] sm:$0xf]
  %v2233 = vld [vmem:[%s18] sm:$0x1]
  %v2235 = vperm.slane %v2233, 0
  %v2253 = vunpack.c.l.b16 %v2217
  %v2254 = vunpack.c.l.b16 %v2218
  %v2255 = vunpack.c.l.b16 %v2219
  %v2256 = vunpack.c.l.b16 %v2220
  %v2257 = vunpack.c.l.b16 %v2221
  %v2258 = vunpack.c.l.b16 %v2222
  %v2259 = vunpack.c.l.b16 %v2223
  %v2260 = vunpack.c.l.b16 %v2224
  %v2261 = vunpack.c.l.b16 %v2225
  %v2262 = vunpack.c.l.b16 %v2226
  %v2263 = vunpack.c.l.b16 %v2227
  %v2264 = vunpack.c.l.b16 %v2228
  %v2265 = vunpack.c.l.b16 %v2229
  %v2266 = vunpack.c.l.b16 %v2230
  %v2267 = vunpack.c.l.b16 %v2231
  %v2268 = vunpack.c.l.b16 %v2232
  %v2269 = vpack.c.b16 %v2254, %v2253
  %v2270 = vpack.c.b16 %v2256, %v2255
  %v2271 = vpack.c.b16 %v2258, %v2257
  %v2272 = vpack.c.b16 %v2260, %v2259
  %v2273 = vpack.c.b16 %v2262, %v2261
  %v2274 = vpack.c.b16 %v2264, %v2263
  %v2275 = vpack.c.b16 %v2266, %v2265
  %v2276 = vpack.c.b16 %v2268, %v2267
  %2285 = vmatpush.bf16.msra.mxu0 %v2276
  %2286 = vmatpush.bf16.msra.mxu0 %v2275
  %2287 = vmatpush.bf16.msra.mxu0 %v2274
  %2288 = vmatpush.bf16.msra.mxu0 %v2273
  %2289 = vmatpush.bf16.msra.mxu0 %v2272
  %2290 = vmatpush.bf16.msra.mxu0 %v2271
  %2291 = vmatpush.bf16.msra.mxu0 %v2270
  %2292 = vmatpush.bf16.msra.mxu0 %v2269
  %2293 = vmatmul.bf16.gmra.mxu0 %v2209
  %v2294 = vpop.f32.mrf.mxu0
  %v2295 = vadd.f32 %v2235, %v2294
  %v2296 = vpop.f32.mrf.mxu0
  %v2297 = vadd.f32 %v2235, %v2296
  %2298 = vmatmul.bf16.gmra.mxu0 %v2210
  %v2299 = vpop.f32.mrf.mxu0
  %v2300 = vadd.f32 %v2235, %v2299
  %v2301 = vpop.f32.mrf.mxu0
  %v2302 = vadd.f32 %v2235, %v2301
  %2303 = vmatmul.bf16.gmra.mxu0 %v2211
  %v2304 = vpop.f32.mrf.mxu0
  %v2305 = vadd.f32 %v2235, %v2304
  %v2306 = vpop.f32.mrf.mxu0
  %v2307 = vadd.f32 %v2235, %v2306
  %2308 = vmatmul.bf16.gmra.mxu0 %v2212
  %v2309 = vpop.f32.mrf.mxu0
  %v2310 = vadd.f32 %v2235, %v2309
  %v2311 = vpop.f32.mrf.mxu0
  %v2312 = vadd.f32 %v2235, %v2311
  %2313 = vmatmul.bf16.gmra.mxu0 %v2213
  %v2314 = vpop.f32.mrf.mxu0
  %v2315 = vadd.f32 %v2235, %v2314
  %v2316 = vpop.f32.mrf.mxu0
  %v2317 = vadd.f32 %v2235, %v2316
  %2318 = vmatmul.bf16.gmra.mxu0 %v2214
  %v2319 = vpop.f32.mrf.mxu0
  %v2320 = vadd.f32 %v2235, %v2319
  %v2321 = vpop.f32.mrf.mxu0
  %v2322 = vadd.f32 %v2235, %v2321
  %2323 = vmatmul.bf16.gmra.mxu0 %v2215
  %v2324 = vpop.f32.mrf.mxu0
  %v2325 = vadd.f32 %v2235, %v2324
  %v2326 = vpop.f32.mrf.mxu0
  %v2327 = vadd.f32 %v2235, %v2326
  %2328 = vmatmul.bf16.gmra.mxu0 %v2216
  %v2329 = vpop.f32.mrf.mxu0
  %v2330 = vadd.f32 %v2235, %v2329
  %v2331 = vpop.f32.mrf.mxu0
  %v2332 = vadd.f32 %v2235, %v2331
  %2333 = vdwg.mxu0
  %v2334 = vmax.f32 %v2295, 0.0
  %v2335 = vmax.f32 %v2297, 0.0
  %v2336 = vmax.f32 %v2300, 0.0
  %v2337 = vmax.f32 %v2302, 0.0
  %v2338 = vmax.f32 %v2305, 0.0
  %v2339 = vmax.f32 %v2307, 0.0
  %v2340 = vmax.f32 %v2310, 0.0
  %v2341 = vmax.f32 %v2312, 0.0
  %v2342 = vmax.f32 %v2315, 0.0
  %v2343 = vmax.f32 %v2317, 0.0
  %v2344 = vmax.f32 %v2320, 0.0
  %v2345 = vmax.f32 %v2322, 0.0
  %v2346 = vmax.f32 %v2325, 0.0
  %v2347 = vmax.f32 %v2327, 0.0
  %v2348 = vmax.f32 %v2330, 0.0
  %v2349 = vmax.f32 %v2332, 0.0
  %v2350 = vld [vmem:[%s19] sm:$0x1]
  %v2352 = vperm.slane %v2350, 0
  %v2354 = vmul.f32 %v2334, %v2352
  %v2355 = vmul.f32 %v2335, %v2352
  %v2356 = vmul.f32 %v2336, %v2352
  %v2357 = vmul.f32 %v2337, %v2352
  %v2358 = vmul.f32 %v2338, %v2352
  %v2359 = vmul.f32 %v2339, %v2352
  %v2360 = vmul.f32 %v2340, %v2352
  %v2361 = vmul.f32 %v2341, %v2352
  %v2362 = vmul.f32 %v2342, %v2352
  %v2363 = vmul.f32 %v2343, %v2352
  %v2364 = vmul.f32 %v2344, %v2352
  %v2365 = vmul.f32 %v2345, %v2352
  %v2366 = vmul.f32 %v2346, %v2352
  %v2367 = vmul.f32 %v2347, %v2352
  %v2368 = vmul.f32 %v2348, %v2352
  %v2369 = vmul.f32 %v2349, %v2352
  %v2370 = vld [vmem:[%s20] sm:$0x1]
  %v2372 = vperm.slane %v2370, 0
  %v2374 = vadd.f32 %v2354, %v2372
  %v2375 = vadd.f32 %v2355, %v2372
  %v2376 = vadd.f32 %v2356, %v2372
  %v2377 = vadd.f32 %v2357, %v2372
  %v2378 = vadd.f32 %v2358, %v2372
  %v2379 = vadd.f32 %v2359, %v2372
  %v2380 = vadd.f32 %v2360, %v2372
  %v2381 = vadd.f32 %v2361, %v2372
  %v2382 = vadd.f32 %v2362, %v2372
  %v2383 = vadd.f32 %v2363, %v2372
  %v2384 = vadd.f32 %v2364, %v2372
  %v2385 = vadd.f32 %v2365, %v2372
  %v2386 = vadd.f32 %v2366, %v2372
  %v2387 = vadd.f32 %v2367, %v2372
  %v2388 = vadd.f32 %v2368, %v2372
  %v2389 = vadd.f32 %v2369, %v2372
  %v2390 = vpack.c.bf16 %v2374, %v2374
  %v2391 = vpack.c.bf16 %v2375, %v2375
  %v2392 = vpack.c.bf16 %v2376, %v2376
  %v2393 = vpack.c.bf16 %v2377, %v2377
  %v2394 = vpack.c.bf16 %v2378, %v2378
  %v2395 = vpack.c.bf16 %v2379, %v2379
  %v2396 = vpack.c.bf16 %v2380, %v2380
  %v2397 = vpack.c.bf16 %v2381, %v2381
  %v2398 = vpack.c.bf16 %v2382, %v2382
  %v2399 = vpack.c.bf16 %v2383, %v2383
  %v2400 = vpack.c.bf16 %v2384, %v2384
  %v2401 = vpack.c.bf16 %v2385, %v2385
  %v2402 = vpack.c.bf16 %v2386, %v2386
  %v2403 = vpack.c.bf16 %v2387, %v2387
  %v2404 = vpack.c.bf16 %v2388, %v2388
  %v2405 = vpack.c.bf16 %v2389, %v2389
  %2406 = vst [vmem:[#allocation4] sm:$0xf] %v2390
  %2407 = vst [vmem:[#allocation4 + $0x4] sm:$0xf] %v2391
  %2408 = vst [vmem:[#allocation4 + $0x8] sm:$0xf] %v2392
  %2409 = vst [vmem:[#allocation4 + $0xc] sm:$0xf] %v2393
  %2410 = vst [vmem:[#allocation4 + $0x10] sm:$0xf] %v2394
  %2411 = vst [vmem:[#allocation4 + $0x14] sm:$0xf] %v2395
  %2412 = vst [vmem:[#allocation4 + $0x18] sm:$0xf] %v2396
  %2413 = vst [vmem:[#allocation4 + $0x1c] sm:$0xf] %v2397
  %2414 = vst [vmem:[#allocation4 + $0x20] sm:$0xf] %v2398
  %2415 = vst [vmem:[#allocation4 + $0x24] sm:$0xf] %v2399
  %2416 = vst [vmem:[#allocation4 + $0x28] sm:$0xf] %v2400
  %2417 = vst [vmem:[#allocation4 + $0x2c] sm:$0xf] %v2401
  %2418 = vst [vmem:[#allocation4 + $0x30] sm:$0xf] %v2402
  %2419 = vst [vmem:[#allocation4 + $0x34] sm:$0xf] %v2403
  %2420 = vst [vmem:[#allocation4 + $0x38] sm:$0xf] %v2404
  %2421 = vst [vmem:[#allocation4 + $0x3c] sm:$0xf] %v2405
  %v2422 = vld [vmem:[%s2] sm:$0xf]
  %v2423 = vld [vmem:[#allocation4] sm:$0xf]
  %v2424 = vld [vmem:[#allocation4 + $0x4] sm:$0xf]
  %v2425 = vld [vmem:[#allocation4 + $0x8] sm:$0xf]
  %v2426 = vld [vmem:[#allocation4 + $0xc] sm:$0xf]
  %v2427 = vld [vmem:[#allocation4 + $0x10] sm:$0xf]
  %v2428 = vld [vmem:[#allocation4 + $0x14] sm:$0xf]
  %v2429 = vld [vmem:[#allocation4 + $0x18] sm:$0xf]
  %v2430 = vld [vmem:[#allocation4 + $0x1c] sm:$0xf]
  %v2431 = vld [vmem:[#allocation4 + $0x20] sm:$0xf]
  %v2432 = vld [vmem:[#allocation4 + $0x24] sm:$0xf]
  %v2433 = vld [vmem:[#allocation4 + $0x28] sm:$0xf]
  %v2434 = vld [vmem:[#allocation4 + $0x2c] sm:$0xf]
  %v2435 = vld [vmem:[#allocation4 + $0x30] sm:$0xf]
  %v2436 = vld [vmem:[#allocation4 + $0x34] sm:$0xf]
  %v2437 = vld [vmem:[#allocation4 + $0x38] sm:$0xf]
  %v2438 = vld [vmem:[#allocation4 + $0x3c] sm:$0xf]
  %v2455 = vunpack.c.l.b16 %v2423
  %v2456 = vunpack.c.l.b16 %v2424
  %v2457 = vunpack.c.l.b16 %v2425
  %v2458 = vunpack.c.l.b16 %v2426
  %v2459 = vunpack.c.l.b16 %v2427
  %v2460 = vunpack.c.l.b16 %v2428
  %v2461 = vunpack.c.l.b16 %v2429
  %v2462 = vunpack.c.l.b16 %v2430
  %v2463 = vunpack.c.l.b16 %v2431
  %v2464 = vunpack.c.l.b16 %v2432
  %v2465 = vunpack.c.l.b16 %v2433
  %v2466 = vunpack.c.l.b16 %v2434
  %v2467 = vunpack.c.l.b16 %v2435
  %v2468 = vunpack.c.l.b16 %v2436
  %v2469 = vunpack.c.l.b16 %v2437
  %v2470 = vunpack.c.l.b16 %v2438
  %v2471 = vpack.c.b16 %v2456, %v2455
  %v2472 = vpack.c.b16 %v2458, %v2457
  %v2473 = vpack.c.b16 %v2460, %v2459
  %v2474 = vpack.c.b16 %v2462, %v2461
  %v2475 = vpack.c.b16 %v2464, %v2463
  %v2476 = vpack.c.b16 %v2466, %v2465
  %v2477 = vpack.c.b16 %v2468, %v2467
  %v2478 = vpack.c.b16 %v2470, %v2469
  %2487 = vmatpush.bf16.msra.mxu0 %v2478
  %2488 = vmatpush.bf16.msra.mxu0 %v2477
  %2489 = vmatpush.bf16.msra.mxu0 %v2476
  %2490 = vmatpush.bf16.msra.mxu0 %v2475
  %2491 = vmatpush.bf16.msra.mxu0 %v2474
  %2492 = vmatpush.bf16.msra.mxu0 %v2473
  %2493 = vmatpush.bf16.msra.mxu0 %v2472
  %2494 = vmatpush.bf16.msra.mxu0 %v2471
  %2495 = vmatmul.bf16.gmra.mxu0 %v2422
  %v2496 = vpop.f32.mrf.mxu0
  %v2497 = vadd.f32 0.0, %v2496
  %v2498 = vpop.f32.mrf.mxu0
  %2499 = vdwg.mxu0
  %v2500 = vpack.c.bf16 %v2497, %v2497
  %v2501 = vld [vmem:[%s21] sm:$0xf]
  %v2502 = vld [vmem:[%s21 + $0x4] sm:$0xf]
  %v2503 = vld [vmem:[%s21 + $0x8] sm:$0xf]
  %v2504 = vld [vmem:[%s21 + $0xc] sm:$0xf]
  %v2505 = vld [vmem:[%s21 + $0x10] sm:$0xf]
  %v2506 = vld [vmem:[%s21 + $0x14] sm:$0xf]
  %v2507 = vld [vmem:[%s21 + $0x18] sm:$0xf]
  %v2508 = vld [vmem:[%s21 + $0x1c] sm:$0xf]
  %v2509 = vld [vmem:[%s21 + $0x20] sm:$0xf]
  %v2510 = vld [vmem:[%s21 + $0x24] sm:$0xf]
  %v2511 = vld [vmem:[%s21 + $0x28] sm:$0xf]
  %v2512 = vld [vmem:[%s21 + $0x2c] sm:$0xf]
  %v2513 = vld [vmem:[%s21 + $0x30] sm:$0xf]
  %v2514 = vld [vmem:[%s21 + $0x34] sm:$0xf]
  %v2515 = vld [vmem:[%s21 + $0x38] sm:$0xf]
  %v2516 = vld [vmem:[%s21 + $0x3c] sm:$0xf]
  %v2517 = vld [vmem:[%s22] sm:$0x1]
  %v2519 = vperm.slane %v2517, 0
  %v2537 = vunpack.c.l.b16 %v2501
  %v2538 = vunpack.c.l.b16 %v2502
  %v2539 = vunpack.c.l.b16 %v2503
  %v2540 = vunpack.c.l.b16 %v2504
  %v2541 = vunpack.c.l.b16 %v2505
  %v2542 = vunpack.c.l.b16 %v2506
  %v2543 = vunpack.c.l.b16 %v2507
  %v2544 = vunpack.c.l.b16 %v2508
  %v2545 = vunpack.c.l.b16 %v2509
  %v2546 = vunpack.c.l.b16 %v2510
  %v2547 = vunpack.c.l.b16 %v2511
  %v2548 = vunpack.c.l.b16 %v2512
  %v2549 = vunpack.c.l.b16 %v2513
  %v2550 = vunpack.c.l.b16 %v2514
  %v2551 = vunpack.c.l.b16 %v2515
  %v2552 = vunpack.c.l.b16 %v2516
  %v2553 = vpack.c.b16 %v2538, %v2537
  %v2554 = vpack.c.b16 %v2540, %v2539
  %v2555 = vpack.c.b16 %v2542, %v2541
  %v2556 = vpack.c.b16 %v2544, %v2543
  %v2557 = vpack.c.b16 %v2546, %v2545
  %v2558 = vpack.c.b16 %v2548, %v2547
  %v2559 = vpack.c.b16 %v2550, %v2549
  %v2560 = vpack.c.b16 %v2552, %v2551
  %2569 = vmatpush.bf16.msra.mxu0 %v2560
  %2570 = vmatpush.bf16.msra.mxu0 %v2559
  %2571 = vmatpush.bf16.msra.mxu0 %v2558
  %2572 = vmatpush.bf16.msra.mxu0 %v2557
  %2573 = vmatpush.bf16.msra.mxu0 %v2556
  %2574 = vmatpush.bf16.msra.mxu0 %v2555
  %2575 = vmatpush.bf16.msra.mxu0 %v2554
  %2576 = vmatpush.bf16.msra.mxu0 %v2553
  %2577 = vmatmul.bf16.gmra.mxu0 %v2500
  %v2578 = vpop.f32.mrf.mxu0
  %v2579 = vadd.f32 %v2519, %v2578
  %v2580 = vpop.f32.mrf.mxu0
  %2581 = vdwg.mxu0
  %v2582 = vmax.f32 %v2579, 0.0
  %v2583 = vpack.c.bf16 %v2582, %v2582
  %v2584 = vld [vmem:[%s23] sm:$0xf]
  %v2585 = vld [vmem:[%s23 + $0x4] sm:$0xf]
  %v2586 = vld [vmem:[%s23 + $0x8] sm:$0xf]
  %v2587 = vld [vmem:[%s23 + $0xc] sm:$0xf]
  %v2588 = vld [vmem:[%s23 + $0x10] sm:$0xf]
  %v2589 = vld [vmem:[%s23 + $0x14] sm:$0xf]
  %v2590 = vld [vmem:[%s23 + $0x18] sm:$0xf]
  %v2591 = vld [vmem:[%s23 + $0x1c] sm:$0xf]
  %v2592 = vld [vmem:[%s23 + $0x20] sm:$0xf]
  %v2593 = vld [vmem:[%s23 + $0x24] sm:$0xf]
  %v2594 = vld [vmem:[%s23 + $0x28] sm:$0xf]
  %v2595 = vld [vmem:[%s23 + $0x2c] sm:$0xf]
  %v2596 = vld [vmem:[%s23 + $0x30] sm:$0xf]
  %v2597 = vld [vmem:[%s23 + $0x34] sm:$0xf]
  %v2598 = vld [vmem:[%s23 + $0x38] sm:$0xf]
  %v2599 = vld [vmem:[%s23 + $0x3c] sm:$0xf]
  %v2600 = vld [vmem:[%s24] sm:$0x1]
  %v2602 = vperm.slane %v2600, 0
  %v2620 = vunpack.c.l.b16 %v2584
  %v2621 = vunpack.c.l.b16 %v2585
  %v2622 = vunpack.c.l.b16 %v2586
  %v2623 = vunpack.c.l.b16 %v2587
  %v2624 = vunpack.c.l.b16 %v2588
  %v2625 = vunpack.c.l.b16 %v2589
  %v2626 = vunpack.c.l.b16 %v2590
  %v2627 = vunpack.c.l.b16 %v2591
  %v2628 = vunpack.c.l.b16 %v2592
  %v2629 = vunpack.c.l.b16 %v2593
  %v2630 = vunpack.c.l.b16 %v2594
  %v2631 = vunpack.c.l.b16 %v2595
  %v2632 = vunpack.c.l.b16 %v2596
  %v2633 = vunpack.c.l.b16 %v2597
  %v2634 = vunpack.c.l.b16 %v2598
  %v2635 = vunpack.c.l.b16 %v2599
  %v2636 = vpack.c.b16 %v2621, %v2620
  %v2637 = vpack.c.b16 %v2623, %v2622
  %v2638 = vpack.c.b16 %v2625, %v2624
  %v2639 = vpack.c.b16 %v2627, %v2626
  %v2640 = vpack.c.b16 %v2629, %v2628
  %v2641 = vpack.c.b16 %v2631, %v2630
  %v2642 = vpack.c.b16 %v2633, %v2632
  %v2643 = vpack.c.b16 %v2635, %v2634
  %2652 = vmatpush.bf16.msra.mxu0 %v2643
  %2653 = vmatpush.bf16.msra.mxu0 %v2642
  %2654 = vmatpush.bf16.msra.mxu0 %v2641
  %2655 = vmatpush.bf16.msra.mxu0 %v2640
  %2656 = vmatpush.bf16.msra.mxu0 %v2639
  %2657 = vmatpush.bf16.msra.mxu0 %v2638
  %2658 = vmatpush.bf16.msra.mxu0 %v2637
  %2659 = vmatpush.bf16.msra.mxu0 %v2636
  %2660 = vmatmul.bf16.gmra.mxu0 %v2583
  %v2661 = vpop.f32.mrf.mxu0
  %v2662 = vadd.f32 %v2602, %v2661
  %v2663 = vpop.f32.mrf.mxu0
  %2664 = vdwg.mxu0
  %v2665 = vmax.f32 %v2662, 0.0
  %v2666 = vpack.c.bf16 %v2665, %v2665
  %v2667 = vld [vmem:[%s25] sm:$0xf]
  %v2668 = vld [vmem:[%s25 + $0x4] sm:$0xf]
  %v2669 = vld [vmem:[%s25 + $0x8] sm:$0xf]
  %v2670 = vld [vmem:[%s25 + $0xc] sm:$0xf]
  %v2671 = vld [vmem:[%s25 + $0x10] sm:$0xf]
  %v2672 = vld [vmem:[%s25 + $0x14] sm:$0xf]
  %v2673 = vld [vmem:[%s25 + $0x18] sm:$0xf]
  %v2674 = vld [vmem:[%s25 + $0x1c] sm:$0xf]
  %v2675 = vld [vmem:[%s25 + $0x20] sm:$0xf]
  %v2676 = vld [vmem:[%s25 + $0x24] sm:$0xf]
  %v2677 = vld [vmem:[%s25 + $0x28] sm:$0xf]
  %v2678 = vld [vmem:[%s25 + $0x2c] sm:$0xf]
  %v2679 = vld [vmem:[%s25 + $0x30] sm:$0xf]
  %v2680 = vld [vmem:[%s25 + $0x34] sm:$0xf]
  %v2681 = vld [vmem:[%s25 + $0x38] sm:$0xf]
  %v2682 = vld [vmem:[%s25 + $0x3c] sm:$0xf]
  %v2683 = vld [vmem:[%s26] sm:$0x1]
  %v2685 = vperm.slane %v2683, 0
  %v2703 = vunpack.c.l.b16 %v2667
  %v2704 = vunpack.c.l.b16 %v2668
  %v2705 = vunpack.c.l.b16 %v2669
  %v2706 = vunpack.c.l.b16 %v2670
  %v2707 = vunpack.c.l.b16 %v2671
  %v2708 = vunpack.c.l.b16 %v2672
  %v2709 = vunpack.c.l.b16 %v2673
  %v2710 = vunpack.c.l.b16 %v2674
  %v2711 = vunpack.c.l.b16 %v2675
  %v2712 = vunpack.c.l.b16 %v2676
  %v2713 = vunpack.c.l.b16 %v2677
  %v2714 = vunpack.c.l.b16 %v2678
  %v2715 = vunpack.c.l.b16 %v2679
  %v2716 = vunpack.c.l.b16 %v2680
  %v2717 = vunpack.c.l.b16 %v2681
  %v2718 = vunpack.c.l.b16 %v2682
  %v2719 = vpack.c.b16 %v2704, %v2703
  %v2720 = vpack.c.b16 %v2706, %v2705
  %v2721 = vpack.c.b16 %v2708, %v2707
  %v2722 = vpack.c.b16 %v2710, %v2709
  %v2723 = vpack.c.b16 %v2712, %v2711
  %v2724 = vpack.c.b16 %v2714, %v2713
  %v2725 = vpack.c.b16 %v2716, %v2715
  %v2726 = vpack.c.b16 %v2718, %v2717
  %2735 = vmatpush.bf16.msra.mxu0 %v2726
  %2736 = vmatpush.bf16.msra.mxu0 %v2725
  %2737 = vmatpush.bf16.msra.mxu0 %v2724
  %2738 = vmatpush.bf16.msra.mxu0 %v2723
  %2739 = vmatpush.bf16.msra.mxu0 %v2722
  %2740 = vmatpush.bf16.msra.mxu0 %v2721
  %2741 = vmatpush.bf16.msra.mxu0 %v2720
  %2742 = vmatpush.bf16.msra.mxu0 %v2719
  %2743 = vmatmul.bf16.gmra.mxu0 %v2666
  %v2744 = vpop.f32.mrf.mxu0
  %v2745 = vadd.f32 %v2685, %v2744
  %v2746 = vpop.f32.mrf.mxu0
  %2747 = vdwg.mxu0
  %2748 = vst [vmem:[%s27] sm:$0xff] %v2745
  // Predicated region
  $region163: #{ginconvnet_forward.1} parent=0 // pred_check
    _
  $region164: #{ginconvnet_forward.1} parent=0 // pred_check_branch
    %2750 = sbr.rel (0) target = $region166
  $region165: #{ginconvnet_forward.1} parent=0 // pred_region
    _
  $region166: #{ginconvnet_forward.1} parent=0 // pred_fallthru
    _
  // Predicated region
  $region167: #{ginconvnet_forward.1} parent=0 // pred_check
    _
  $region168: #{ginconvnet_forward.1} parent=0 // pred_check_branch
    %2752 = sbr.rel (0) target = $region170
  $region169: #{ginconvnet_forward.1} parent=0 // pred_region
    _
  $region170: #{ginconvnet_forward.1} parent=0 // pred_fallthru
    _
  %2753 = vsyncmov [#allocation6]
  %s2754 = vpop.sfrf %2753
  %p2755 = scmp.eq.s32.totalorder %s2754, 0
  %p2756 = pneg %p2755
  %2758 = shalt.err (%p2756)
  %s2759 = scalar_lea.sflag [#allocation6], 1
  %2760 = vsyncmov %s2759
  %s2761 = vpop.sfrf %2760
  %p2762 = scmp.eq.s32.totalorder %s2761, 0
  %p2763 = pneg %p2762
  %2765 = shalt.err (%p2763)

</llo_original>
